<compile_context>
chip_gen: v5e
topology: v5e:2x2
jax: 0.10.0
libtpu: 0.0.40
codegen_flags: <defaults>
</compile_context>

<pallas_src>
import functools
import math

import jax
import jax.numpy as jnp
from jax import lax
from jax.experimental import pallas as pl
from jax.experimental.pallas import tpu as pltpu


_NEG_INF = -1e30  # large finite negative; avoids -inf/NaN hazards in low precision


def _layernorm(x, gamma, beta, eps=1e-5):
    mu = jnp.mean(x, axis=-1, keepdims=True)
    var = jnp.mean((x - mu) ** 2, axis=-1, keepdims=True)
    return (x - mu) * lax.rsqrt(var + eps) * gamma + beta


def _gelu_exact(x):
    # torch nn.GELU() default: exact erf-based gelu
    return 0.5 * x * (1.0 + lax.erf(x * (1.0 / math.sqrt(2.0))))


def _causal_flash_attention(qh, kh, vh, scale, *, tile_q, tile_kv):
    """Online-softmax causal attention over KV tiles.

    qh/kh/vh: (BH, S, D) bf16.  Returns (BH, S, D) f32.
    KV tiles entirely above the causal diagonal are skipped statically
    (~halves attention MXU FLOPs and exp() work); only diagonal-overlapping
    tiles pay for masking.  Score VMEM is bounded by (BH, tile_q, tile_kv).
    """
    BH, S, D = qh.shape
    nq = S // tile_q
    nk = S // tile_kv

    # Single small 2-D iota pair reused for every masked tile.
    r_loc = lax.broadcasted_iota(jnp.int32, (tile_q, tile_kv), 0)
    c_loc = lax.broadcasted_iota(jnp.int32, (tile_q, tile_kv), 1)

    out_tiles = []
    for qi in range(nq):
        q0 = qi * tile_q
        q_blk = qh if nq == 1 else qh[:, q0:q0 + tile_q, :]
        m = jnp.full((BH, tile_q, 1), _NEG_INF, jnp.float32)
        l = jnp.zeros((BH, tile_q, 1), jnp.float32)
        acc = jnp.zeros((BH, tile_q, D), jnp.float32)
        for ki in range(nk):
            k0 = ki * tile_kv
            if k0 > q0 + tile_q - 1:          # tile fully above diagonal: skip
                continue
            k_blk = kh if nk == 1 else kh[:, k0:k0 + tile_kv, :]
            v_blk = vh if nk == 1 else vh[:, k0:k0 + tile_kv, :]
            s = jnp.einsum('bqd,bkd->bqk', q_blk, k_blk,
                           preferred_element_type=jnp.float32) * scale
            if k0 + tile_kv - 1 > q0:         # overlaps diagonal: mask needed
                mask = (c_loc + k0) <= (r_loc + q0)          # (tile_q, tile_kv)
                s = jnp.where(mask[None, :, :], s, _NEG_INF)
            m_new = jnp.maximum(m, jnp.max(s, axis=-1, keepdims=True))
            alpha = jnp.exp(m - m_new)
            p = jnp.exp(s - m_new)
            l = alpha * l + jnp.sum(p, axis=-1, keepdims=True)
            acc = alpha * acc + jnp.einsum('bqk,bkd->bqd', p.astype(jnp.bfloat16),
                                           v_blk, preferred_element_type=jnp.float32)
            m = m_new
        out_tiles.append(acc * pl.reciprocal(l, approx=True))
    return out_tiles[0] if nq == 1 else jnp.concatenate(out_tiles, axis=1)


def transformer_block_kernel(
    x_ref,                    # (Bb, S, E)  f32
    ln1_g_ref, ln1_b_ref,     # (1, E)      f32
    wa_ref, ba_ref,           # (E, 3E) bf16, (1, 3E) f32
    wo_ref, bo_ref,           # (E, E)  bf16, (1, E)  f32
    ln2_g_ref, ln2_b_ref,     # (1, E)      f32
    w1_ref, b1_ref,           # (E, FE) bf16, (1, FE) f32
    w2_ref, b2_ref,           # (FE, E) bf16, (1, E)  f32
    o_ref,                    # (Bb, S, E)  f32
    *, num_heads: int, tile_q: int, tile_kv: int, fused_head_repack: bool,
):
    Bb, S, E = x_ref.shape
    H = num_heads
    D = E // H
    scale = 1.0 / math.sqrt(D)

    x = x_ref[...].astype(jnp.float32).reshape(Bb * S, E)    # fat M dimension

    # ---- LN1 + fused QKV projection (bf16 MXU inputs, f32 accumulation) ----
    xn = _layernorm(x, ln1_g_ref[0], ln1_b_ref[0])
    qkv = jnp.dot(xn.astype(jnp.bfloat16), wa_ref[...],
                  preferred_element_type=jnp.float32) + ba_ref[0]      # (Bb*S, 3E)

    # ---- repack q/k/v to head-batched (Bb*H, S, D) ----
    if fused_head_repack:
        # single reshape + single transpose (no per-head slice/concat copies)
        qkv4 = jnp.swapaxes(qkv.reshape(Bb, S, 3 * H, D), 1, 2)        # (Bb, 3H, S, D)

        def take(lo, hi):
            return qkv4[:, lo:hi].reshape(Bb * H, S, D).astype(jnp.bfloat16)

        qh, kh, vh = take(0, H), take(H, 2 * H), take(2 * H, 3 * H)
    else:
        # conservative fallback (previously validated path)
        def to_heads(t):                      # (Bb*S, E) -> (H*Bb, S, D) bf16
            t = t.astype(jnp.bfloat16)
            return jnp.concatenate(
                [t[:, h * D:(h + 1) * D].reshape(Bb, S, D) for h in range(H)], axis=0)

        qh = to_heads(qkv[:, 0 * E:1 * E])
        kh = to_heads(qkv[:, 1 * E:2 * E])
        vh = to_heads(qkv[:, 2 * E:3 * E])

    # ---- causal attention: flash loop over KV tiles ----
    ctx = _causal_flash_attention(qh, kh, vh, scale, tile_q=tile_q, tile_kv=tile_kv)

    # ---- merge heads back to (Bb*S, E) ----
    if fused_head_repack:
        attn = jnp.swapaxes(ctx.reshape(Bb, H, S, D), 1, 2).reshape(Bb * S, E)
    else:
        attn = jnp.concatenate([ctx[h * Bb:(h + 1) * Bb] for h in range(H)],
                               axis=-1).reshape(Bb * S, E)

    # ---- output projection + residual ----
    attn = jnp.dot(attn.astype(jnp.bfloat16), wo_ref[...],
                   preferred_element_type=jnp.float32) + bo_ref[0]
    x1 = x + attn

    # ---- LN2 + MLP (exact erf GELU, matching torch) + residual ----
    x2 = _layernorm(x1, ln2_g_ref[0], ln2_b_ref[0])
    h1 = jnp.dot(x2.astype(jnp.bfloat16), w1_ref[...],
                 preferred_element_type=jnp.float32) + b1_ref[0]
    h1 = _gelu_exact(h1)
    h2 = jnp.dot(h1.astype(jnp.bfloat16), w2_ref[...],
                 preferred_element_type=jnp.float32) + b2_ref[0]
    out = x1 + h2

    o_ref[...] = out.reshape(Bb, S, E).astype(o_ref.dtype)
    # TODO(synk): for production E/FE, tile w1/w2 along FE with a reduction grid
    # axis + f32 accumulator scratch instead of holding them fully resident.
    # TODO(synk): for ragged D (<128) / S (<16 for bf16), pad the head/seq dims
    # in-kernel so vregs are lane/sublane dense (demo config is tiny by design).


def _vmem_capacity_bytes(default=64 * 1024 * 1024):
    try:
        info = pltpu.get_tpu_info()
        cap = getattr(info, "vmem_capacity_bytes", None)
        if cap:
            return int(cap)
    except Exception:
        pass
    return default


def _largest_divisor_leq(n, cap):
    cap = max(1, min(n, cap))
    for t in range(cap, 0, -1):
        if n % t == 0:
            return t
    return 1


def transformer_block(x, params, *, num_heads, rows_per_tile=None):
    B, S, E = x.shape
    FE = params["w1"].shape[1]
    H = num_heads

    # ---- generation-aware budgets ----
    vmem_cap = _vmem_capacity_bytes()
    if rows_per_tile is None:
        # v5e/v6e: 128 MiB VMEM -> fat tiles; v7x: 64 MiB -> smaller tiles.
        rows_per_tile = 1024 if vmem_cap >= 96 * 1024 * 1024 else 256
    vmem_limit = int(0.8 * vmem_cap)       # leave headroom for compiler scratch

    # ---- batch tiling (Bb batch rows per grid step -> fat matmul M = Bb*S) ----
    bb_cap = max(1, rows_per_tile // S)
    if B > 1:
        # keep >= 2 grid steps so both TensorCores of a v7x chip get work
        bb_cap = min(bb_cap, max(1, B // 2))
    Bb = min(B, bb_cap)
    n_steps = int(pl.cdiv(B, Bb))
    B_pad = n_steps * Bb
    x_in = x if B_pad == B else jnp.pad(x, ((0, B_pad - B), (0, 0), (0, 0)))
    grid = (n_steps,)

    # attention Q/KV tile for the flash loop (whole S when it is small)
    tile = _largest_divisor_leq(S, 256)

    # Weights in bf16 (MXU runs bf16 with f32 accumulation in-kernel); LN params
    # and biases stay f32.
    wa = params["wa"].astype(jnp.bfloat16)
    wo = params["wo"].astype(jnp.bfloat16)
    w1 = params["w1"].astype(jnp.bfloat16)
    w2 = params["w2"].astype(jnp.bfloat16)

    # Advisory cost estimate (causal attention ~ half of dense attention).
    flops = (2 * B * S * (4 * E * E + 2 * E * FE) + 2 * B * S * S * E)
    transcendentals = B * S * (H * (S // 2 + 1) + FE + 2)
    bytes_accessed = (2 * B * S * E * 4
                      + 2 * (4 * E * E + 2 * E * FE)      # bf16 weights
                      + 4 * (3 * E + FE + 6 * E))         # biases + LN params
    cost = pl.CostEstimate(flops=flops, transcendentals=transcendentals,
                           bytes_accessed=bytes_accessed)

    args = (x_in,
            params["ln1_g"], params["ln1_b"],
            wa, params["ba"],
            wo, params["bo"],
            params["ln2_g"], params["ln2_b"],
            w1, params["b1"],
            w2, params["b2"])

    def run(fast):
        # Grid-invariant operands (weights/biases/LN params): single-buffer them
        # on the fast path -- double-buffering a constant block only doubles its
        # VMEM footprint.
        if fast:
            def rep(shape):
                return pl.BlockSpec(shape, lambda b: (0,) * len(shape),
                                    pipeline_mode=pl.Buffered(1))
        else:
            def rep(shape):
                return pl.BlockSpec(shape, lambda b: (0,) * len(shape))

        kernel = functools.partial(
            transformer_block_kernel, num_heads=H, tile_q=tile, tile_kv=tile,
            fused_head_repack=fast)

        out = pl.pallas_call(
            kernel,
            out_shape=jax.ShapeDtypeStruct((B_pad, S, E), x.dtype),
            grid_spec=pltpu.PrefetchScalarGridSpec(
                num_scalar_prefetch=0,
                grid=grid,
                in_specs=[
                    pl.BlockSpec((Bb, S, E), lambda b: (b, 0, 0)),    # x
                    rep((1, E)), rep((1, E)),                         # ln1 gamma/beta
                    rep((E, 3 * E)), rep((1, 3 * E)),                 # Wa, ba
                    rep((E, E)), rep((1, E)),                         # Wo, bo
                    rep((1, E)), rep((1, E)),                         # ln2 gamma/beta
                    rep((E, FE)), rep((1, FE)),                       # mlp fc1
                    rep((FE, E)), rep((1, E)),                        # mlp fc2
                ],
                out_specs=pl.BlockSpec((Bb, S, E), lambda b: (b, 0, 0)),
            ),
            compiler_params=pltpu.CompilerParams(
                dimension_semantics=("parallel",),
                vmem_limit_bytes=vmem_limit,
            ),
            cost_estimate=cost,
        )(*args)
        return out if B_pad == B else out[:B]

    # NOTE: the fallback only triggers when called eagerly (as in this script);
    # it keeps the kernel runnable if single-buffering / the fused relayout is
    # unsupported on the local build.
    try:
        return run(True)
    except Exception:
        return run(False)


def transformer_block_reference(x, params, *, num_heads):
    """Pure-JAX (XLA) reference matching the PyTorch module, for validation."""
    B, S, E = x.shape
    H = num_heads
    D = E // H

    def ln(t, g, b):
        mu = jnp.mean(t, -1, keepdims=True)
        var = jnp.mean((t - mu) ** 2, -1, keepdims=True)
        return (t - mu) / jnp.sqrt(var + 1e-5) * g + b

    xn = ln(x, params["ln1_g"][0], params["ln1_b"][0])
    qkv = xn @ params["wa"] + params["ba"][0]
    q, k, v = jnp.split(qkv, 3, axis=-1)
    heads = lambda t: t.reshape(B, S, H, D).transpose(0, 2, 1, 3)
    q, k, v = heads(q), heads(k), heads(v)
    s = (q @ jnp.swapaxes(k, -1, -2)) / math.sqrt(D)
    causal = jnp.tril(jnp.ones((S, S), bool))
    s = jnp.where(causal, s, -jnp.inf)
    p = jax.nn.softmax(s, axis=-1)
    ctx = (p @ v).transpose(0, 2, 1, 3).reshape(B, S, E)
    x1 = x + (ctx @ params["wo"] + params["bo"][0])
    x2 = ln(x1, params["ln2_g"][0], params["ln2_b"][0])
    h = x2 @ params["w1"] + params["b1"][0]
    h = 0.5 * h * (1.0 + lax.erf(h / math.sqrt(2.0)))
    h = h @ params["w2"] + params["b2"][0]
    return x1 + h


def init_params(key, embed_size, mlp_factor):
    E = embed_size
    FE = mlp_factor * E
    ks = jax.random.split(key, 8)
    std = 0.02
    return {
        "ln1_g": jnp.ones((1, E), jnp.float32),
        "ln1_b": jnp.zeros((1, E), jnp.float32),
        "wa": (jax.random.normal(ks[0], (E, 3 * E)) * std).astype(jnp.float32),
        "ba": (jax.random.normal(ks[1], (1, 3 * E)) * std).astype(jnp.float32),
        "wo": (jax.random.normal(ks[2], (E, E)) * std).astype(jnp.float32),
        "bo": (jax.random.normal(ks[3], (1, E)) * std).astype(jnp.float32),
        "ln2_g": jnp.ones((1, E), jnp.float32),
        "ln2_b": jnp.zeros((1, E), jnp.float32),
        "w1": (jax.random.normal(ks[4], (E, FE)) * std).astype(jnp.float32),
        "b1": (jax.random.normal(ks[5], (1, FE)) * std).astype(jnp.float32),
        "w2": (jax.random.normal(ks[6], (FE, E)) * std).astype(jnp.float32),
        "b2": (jax.random.normal(ks[7], (1, E)) * std).astype(jnp.float32),
    }


if __name__ == "__main__":
    # config: embed_size=32, num_heads=4, block_size=seq=8, mlp_factor=4,
    # dropout probs = 0 (eval mode -> identity).
    B, S, E, H, MLP_F = 2, 8, 32, 4, 4

    key = jax.random.PRNGKey(0)
    kx, kp = jax.random.split(key)
    x = jax.random.normal(kx, (B, S, E), dtype=jnp.float32)
    params = init_params(kp, E, MLP_F)

    out = transformer_block(x, params, num_heads=H)
    out = jax.block_until_ready(out)
    assert out.shape == (B, S, E) and out.dtype == jnp.float32
    assert bool(jnp.all(jnp.isfinite(out)))

    ref = transformer_block_reference(x, params, num_heads=H)
    max_err = float(jnp.max(jnp.abs(out - ref)))
    # bf16 weights + approx reciprocal => loose tolerance vs. the f32 reference
    assert max_err < 5e-2, f"max abs err vs reference: {max_err}"
    print("KERNEL_OK")
</pallas_src>

<mosaic_0001>
module attributes {stable_mosaic.version = 11 : i64} {
  func.func @transformer_block_kernel(%arg0: i32, %arg1: memref<1x8x32xf32, #tpu.memory_space<vmem>>, %arg2: memref<1x32xf32, #tpu.memory_space<vmem>>, %arg3: memref<1x32xf32, #tpu.memory_space<vmem>>, %arg4: memref<32x96xbf16, #tpu.memory_space<vmem>>, %arg5: memref<1x96xf32, #tpu.memory_space<vmem>>, %arg6: memref<32x32xbf16, #tpu.memory_space<vmem>>, %arg7: memref<1x32xf32, #tpu.memory_space<vmem>>, %arg8: memref<1x32xf32, #tpu.memory_space<vmem>>, %arg9: memref<1x32xf32, #tpu.memory_space<vmem>>, %arg10: memref<32x128xbf16, #tpu.memory_space<vmem>>, %arg11: memref<1x128xf32, #tpu.memory_space<vmem>>, %arg12: memref<128x32xbf16, #tpu.memory_space<vmem>>, %arg13: memref<1x32xf32, #tpu.memory_space<vmem>>, %arg14: memref<1x8x32xf32, #tpu.memory_space<vmem>>) attributes {dimension_semantics = [#tpu.dimension_semantics<parallel>], iteration_bounds = array<i64: 2>, scalar_prefetch = 0 : i64, scratch_operands = 0 : i64, tpu.core_type = #tpu.core_type<tc>, window_params = [{transform_indices = @transform_0, window_bounds = array<i64: 1, 8, 32>}, {pipeline_mode = #tpu.pipeline_mode<synchronous>, transform_indices = @transform_1, window_bounds = array<i64: 1, 32>}, {pipeline_mode = #tpu.pipeline_mode<synchronous>, transform_indices = @transform_2, window_bounds = array<i64: 1, 32>}, {pipeline_mode = #tpu.pipeline_mode<synchronous>, transform_indices = @transform_3, window_bounds = array<i64: 32, 96>}, {pipeline_mode = #tpu.pipeline_mode<synchronous>, transform_indices = @transform_4, window_bounds = array<i64: 1, 96>}, {pipeline_mode = #tpu.pipeline_mode<synchronous>, transform_indices = @transform_5, window_bounds = array<i64: 32, 32>}, {pipeline_mode = #tpu.pipeline_mode<synchronous>, transform_indices = @transform_6, window_bounds = array<i64: 1, 32>}, {pipeline_mode = #tpu.pipeline_mode<synchronous>, transform_indices = @transform_7, window_bounds = array<i64: 1, 32>}, {pipeline_mode = #tpu.pipeline_mode<synchronous>, transform_indices = @transform_8, window_bounds = array<i64: 1, 32>}, {pipeline_mode = #tpu.pipeline_mode<synchronous>, transform_indices = @transform_9, window_bounds = array<i64: 32, 128>}, {pipeline_mode = #tpu.pipeline_mode<synchronous>, transform_indices = @transform_10, window_bounds = array<i64: 1, 128>}, {pipeline_mode = #tpu.pipeline_mode<synchronous>, transform_indices = @transform_11, window_bounds = array<i64: 128, 32>}, {pipeline_mode = #tpu.pipeline_mode<synchronous>, transform_indices = @transform_12, window_bounds = array<i64: 1, 32>}, {transform_indices = @transform_13, window_bounds = array<i64: 1, 8, 32>}]} {
    %c0 = arith.constant 0 : index
    %c0_0 = arith.constant 0 : index
    %c0_1 = arith.constant 0 : index
    %0 = vector.load %arg1[%c0, %c0_0, %c0_1] : memref<1x8x32xf32, #tpu.memory_space<vmem>>, vector<1x8x32xf32>
    %1 = vector.shape_cast %0 : vector<1x8x32xf32> to vector<8x32xf32>
    %c0_2 = arith.constant 0 : index
    %c0_3 = arith.constant 0 : index
    %2 = vector.load %arg2[%c0_2, %c0_3] : memref<1x32xf32, #tpu.memory_space<vmem>>, vector<1x32xf32>
    %3 = vector.shape_cast %2 : vector<1x32xf32> to vector<32xf32>
    %c0_4 = arith.constant 0 : index
    %c0_5 = arith.constant 0 : index
    %4 = vector.load %arg3[%c0_4, %c0_5] : memref<1x32xf32, #tpu.memory_space<vmem>>, vector<1x32xf32>
    %5 = vector.shape_cast %4 : vector<1x32xf32> to vector<32xf32>
    %cst = arith.constant dense<0.000000e+00> : vector<8xf32>
    %6 = vector.multi_reduction <add>, %1, %cst [1] : vector<8x32xf32> to vector<8xf32>
    %7 = vector.shape_cast %6 : vector<8xf32> to vector<8x1xf32>
    %cst_6 = arith.constant 3.200000e+01 : f32
    %8 = vector.broadcast %cst_6 : f32 to vector<8x1xf32>
    %9 = arith.divf %7, %8 : vector<8x1xf32>
    %10 = vector.broadcast %9 : vector<8x1xf32> to vector<8x32xf32>
    %11 = arith.subf %1, %10 : vector<8x32xf32>
    %12 = arith.mulf %11, %11 : vector<8x32xf32>
    %cst_7 = arith.constant dense<0.000000e+00> : vector<8xf32>
    %13 = vector.multi_reduction <add>, %12, %cst_7 [1] : vector<8x32xf32> to vector<8xf32>
    %14 = vector.shape_cast %13 : vector<8xf32> to vector<8x1xf32>
    %cst_8 = arith.constant 3.200000e+01 : f32
    %15 = vector.broadcast %cst_8 : f32 to vector<8x1xf32>
    %16 = arith.divf %14, %15 : vector<8x1xf32>
    %17 = vector.broadcast %9 : vector<8x1xf32> to vector<8x32xf32>
    %18 = arith.subf %1, %17 : vector<8x32xf32>
    %cst_9 = arith.constant 9.99999974E-6 : f32
    %19 = vector.broadcast %cst_9 : f32 to vector<8x1xf32>
    %20 = arith.addf %16, %19 : vector<8x1xf32>
    %21 = math.rsqrt %20 : vector<8x1xf32>
    %22 = vector.broadcast %21 : vector<8x1xf32> to vector<8x32xf32>
    %23 = arith.mulf %18, %22 : vector<8x32xf32>
    %24 = vector.shape_cast %3 : vector<32xf32> to vector<1x32xf32>
    %25 = vector.broadcast %24 : vector<1x32xf32> to vector<8x32xf32>
    %26 = arith.mulf %23, %25 : vector<8x32xf32>
    %27 = vector.shape_cast %5 : vector<32xf32> to vector<1x32xf32>
    %28 = vector.broadcast %27 : vector<1x32xf32> to vector<8x32xf32>
    %29 = arith.addf %26, %28 : vector<8x32xf32>
    %30 = arith.truncf %29 : vector<8x32xf32> to vector<8x32xbf16>
    %c0_10 = arith.constant 0 : index
    %c0_11 = arith.constant 0 : index
    %31 = vector.load %arg4[%c0_10, %c0_11] : memref<32x96xbf16, #tpu.memory_space<vmem>>, vector<32x96xbf16>
    %cst_12 = arith.constant dense<0.000000e+00> : vector<8x96xf32>
    %32 = tpu.matmul %30, %31, %cst_12 {dimension_numbers = #tpu.dot_dimension_numbers<[1], [0], [0], [1], [0, 0, 1, 1], [], []>} : vector<8x32xbf16>, vector<32x96xbf16>, vector<8x96xf32> -> vector<8x96xf32>
    %c0_13 = arith.constant 0 : index
    %c0_14 = arith.constant 0 : index
    %33 = vector.load %arg5[%c0_13, %c0_14] : memref<1x96xf32, #tpu.memory_space<vmem>>, vector<1x96xf32>
    %34 = vector.shape_cast %33 : vector<1x96xf32> to vector<96xf32>
    %35 = vector.shape_cast %34 : vector<96xf32> to vector<1x96xf32>
    %36 = vector.broadcast %35 : vector<1x96xf32> to vector<8x96xf32>
    %37 = arith.addf %32, %36 : vector<8x96xf32>
    %38 = vector.shape_cast %37 : vector<8x96xf32> to vector<1x8x12x8xf32>
    %39 = tpu.transpose %38, [0, 2, 1, 3] : vector<1x8x12x8xf32> -> vector<1x12x8x8xf32>
    %40 = vector.extract_strided_slice %39 {offsets = [0, 0, 0, 0], sizes = [1, 4, 8, 8], strides = [1, 1, 1, 1]} : vector<1x12x8x8xf32> to vector<1x4x8x8xf32>
    %41 = vector.shape_cast %40 : vector<1x4x8x8xf32> to vector<4x8x8xf32>
    %42 = arith.truncf %41 : vector<4x8x8xf32> to vector<4x8x8xbf16>
    %43 = vector.extract_strided_slice %39 {offsets = [0, 4, 0, 0], sizes = [1, 4, 8, 8], strides = [1, 1, 1, 1]} : vector<1x12x8x8xf32> to vector<1x4x8x8xf32>
    %44 = vector.shape_cast %43 : vector<1x4x8x8xf32> to vector<4x8x8xf32>
    %45 = arith.truncf %44 : vector<4x8x8xf32> to vector<4x8x8xbf16>
    %46 = vector.extract_strided_slice %39 {offsets = [0, 8, 0, 0], sizes = [1, 4, 8, 8], strides = [1, 1, 1, 1]} : vector<1x12x8x8xf32> to vector<1x4x8x8xf32>
    %47 = vector.shape_cast %46 : vector<1x4x8x8xf32> to vector<4x8x8xf32>
    %48 = arith.truncf %47 : vector<4x8x8xf32> to vector<4x8x8xbf16>
    %49 = tpu.iota {dimensions = array<i32: 0>} : vector<8x8xi32>
    %50 = tpu.iota {dimensions = array<i32: 1>} : vector<8x8xi32>
    %cst_15 = arith.constant -1.000000e+30 : f32
    %51 = vector.broadcast %cst_15 : f32 to vector<4x8x1xf32>
    %cst_16 = arith.constant 0.000000e+00 : f32
    %52 = vector.broadcast %cst_16 : f32 to vector<4x8x1xf32>
    %cst_17 = arith.constant 0.000000e+00 : f32
    %53 = vector.broadcast %cst_17 : f32 to vector<4x8x8xf32>
    "tpu.trace_start"() <{level = 10 : i32, message = "bqd,bkd->bqk"}> : () -> ()
    %cst_18 = arith.constant dense<0.000000e+00> : vector<4x8x8xf32>
    %54 = tpu.matmul %42, %45, %cst_18 {dimension_numbers = #tpu.dot_dimension_numbers<[2], [2], [1], [1], [0, 0, 0, 1, 1, 1], [0], [0]>} : vector<4x8x8xbf16>, vector<4x8x8xbf16>, vector<4x8x8xf32> -> vector<4x8x8xf32>
    "tpu.trace_stop"() : () -> ()
    %cst_19 = arith.constant 0.353553385 : f32
    %55 = vector.broadcast %cst_19 : f32 to vector<4x8x8xf32>
    %56 = arith.mulf %54, %55 : vector<4x8x8xf32>
    %c0_i32 = arith.constant 0 : i32
    %57 = vector.broadcast %c0_i32 : i32 to vector<8x8xi32>
    %58 = arith.addi %50, %57 : vector<8x8xi32>
    %c0_i32_20 = arith.constant 0 : i32
    %59 = vector.broadcast %c0_i32_20 : i32 to vector<8x8xi32>
    %60 = arith.addi %49, %59 : vector<8x8xi32>
    %61 = arith.cmpi sle, %58, %60 : vector<8x8xi32>
    %62 = vector.shape_cast %61 : vector<8x8xi1> to vector<1x8x8xi1>
    %cst_21 = arith.constant -1.000000e+30 : f32
    %63 = vector.shape_cast %62 : vector<1x8x8xi1> to vector<1x8x8xi1>
    %64 = vector.broadcast %63 : vector<1x8x8xi1> to vector<4x8x8xi1>
    %65 = vector.broadcast %cst_21 : f32 to vector<4x8x8xf32>
    %66 = arith.select %64, %56, %65 : vector<4x8x8xi1>, vector<4x8x8xf32>
    %cst_22 = arith.constant dense<0xFF800000> : vector<4x8xf32>
    %67 = vector.multi_reduction <maximumf>, %66, %cst_22 [2] : vector<4x8x8xf32> to vector<4x8xf32>
    %68 = vector.shape_cast %67 : vector<4x8xf32> to vector<4x8x1xf32>
    %69 = arith.maximumf %51, %68 : vector<4x8x1xf32>
    %70 = arith.subf %51, %69 : vector<4x8x1xf32>
    %71 = math.exp %70 : vector<4x8x1xf32>
    %72 = vector.broadcast %69 : vector<4x8x1xf32> to vector<4x8x8xf32>
    %73 = arith.subf %66, %72 : vector<4x8x8xf32>
    %74 = math.exp %73 : vector<4x8x8xf32>
    %75 = arith.mulf %71, %52 : vector<4x8x1xf32>
    %cst_23 = arith.constant dense<0.000000e+00> : vector<4x8xf32>
    %76 = vector.multi_reduction <add>, %74, %cst_23 [2] : vector<4x8x8xf32> to vector<4x8xf32>
    %77 = vector.shape_cast %76 : vector<4x8xf32> to vector<4x8x1xf32>
    %78 = arith.addf %75, %77 : vector<4x8x1xf32>
    %79 = vector.broadcast %71 : vector<4x8x1xf32> to vector<4x8x8xf32>
    %80 = arith.mulf %79, %53 : vector<4x8x8xf32>
    %81 = arith.truncf %74 : vector<4x8x8xf32> to vector<4x8x8xbf16>
    "tpu.trace_start"() <{level = 10 : i32, message = "bqk,bkd->bqd"}> : () -> ()
    %cst_24 = arith.constant dense<0.000000e+00> : vector<4x8x8xf32>
    %82 = tpu.matmul %81, %48, %cst_24 {dimension_numbers = #tpu.dot_dimension_numbers<[2], [1], [1], [2], [0, 0, 0, 1, 1, 2], [0], [0]>} : vector<4x8x8xbf16>, vector<4x8x8xbf16>, vector<4x8x8xf32> -> vector<4x8x8xf32>
    "tpu.trace_stop"() : () -> ()
    %83 = arith.addf %80, %82 : vector<4x8x8xf32>
    %84 = tpu.reciprocal %78 {approx = true} : vector<4x8x1xf32> -> vector<4x8x1xf32>
    %85 = vector.broadcast %84 : vector<4x8x1xf32> to vector<4x8x8xf32>
    %86 = arith.mulf %83, %85 : vector<4x8x8xf32>
    %87 = vector.shape_cast %86 : vector<4x8x8xf32> to vector<1x4x8x8xf32>
    %88 = tpu.transpose %87, [0, 2, 1, 3] : vector<1x4x8x8xf32> -> vector<1x8x4x8xf32>
    %89 = vector.shape_cast %88 : vector<1x8x4x8xf32> to vector<8x32xf32>
    %90 = arith.truncf %89 : vector<8x32xf32> to vector<8x32xbf16>
    %c0_25 = arith.constant 0 : index
    %c0_26 = arith.constant 0 : index
    %91 = vector.load %arg6[%c0_25, %c0_26] : memref<32x32xbf16, #tpu.memory_space<vmem>>, vector<32x32xbf16>
    %cst_27 = arith.constant dense<0.000000e+00> : vector<8x32xf32>
    %92 = tpu.matmul %90, %91, %cst_27 {dimension_numbers = #tpu.dot_dimension_numbers<[1], [0], [0], [1], [0, 0, 1, 1], [], []>} : vector<8x32xbf16>, vector<32x32xbf16>, vector<8x32xf32> -> vector<8x32xf32>
    %c0_28 = arith.constant 0 : index
    %c0_29 = arith.constant 0 : index
    %93 = vector.load %arg7[%c0_28, %c0_29] : memref<1x32xf32, #tpu.memory_space<vmem>>, vector<1x32xf32>
    %94 = vector.shape_cast %93 : vector<1x32xf32> to vector<32xf32>
    %95 = vector.shape_cast %94 : vector<32xf32> to vector<1x32xf32>
    %96 = vector.broadcast %95 : vector<1x32xf32> to vector<8x32xf32>
    %97 = arith.addf %92, %96 : vector<8x32xf32>
    %98 = arith.addf %1, %97 : vector<8x32xf32>
    %c0_30 = arith.constant 0 : index
    %c0_31 = arith.constant 0 : index
    %99 = vector.load %arg8[%c0_30, %c0_31] : memref<1x32xf32, #tpu.memory_space<vmem>>, vector<1x32xf32>
    %100 = vector.shape_cast %99 : vector<1x32xf32> to vector<32xf32>
    %c0_32 = arith.constant 0 : index
    %c0_33 = arith.constant 0 : index
    %101 = vector.load %arg9[%c0_32, %c0_33] : memref<1x32xf32, #tpu.memory_space<vmem>>, vector<1x32xf32>
    %102 = vector.shape_cast %101 : vector<1x32xf32> to vector<32xf32>
    %cst_34 = arith.constant dense<0.000000e+00> : vector<8xf32>
    %103 = vector.multi_reduction <add>, %98, %cst_34 [1] : vector<8x32xf32> to vector<8xf32>
    %104 = vector.shape_cast %103 : vector<8xf32> to vector<8x1xf32>
    %cst_35 = arith.constant 3.200000e+01 : f32
    %105 = vector.broadcast %cst_35 : f32 to vector<8x1xf32>
    %106 = arith.divf %104, %105 : vector<8x1xf32>
    %107 = vector.broadcast %106 : vector<8x1xf32> to vector<8x32xf32>
    %108 = arith.subf %98, %107 : vector<8x32xf32>
    %109 = arith.mulf %108, %108 : vector<8x32xf32>
    %cst_36 = arith.constant dense<0.000000e+00> : vector<8xf32>
    %110 = vector.multi_reduction <add>, %109, %cst_36 [1] : vector<8x32xf32> to vector<8xf32>
    %111 = vector.shape_cast %110 : vector<8xf32> to vector<8x1xf32>
    %cst_37 = arith.constant 3.200000e+01 : f32
    %112 = vector.broadcast %cst_37 : f32 to vector<8x1xf32>
    %113 = arith.divf %111, %112 : vector<8x1xf32>
    %114 = vector.broadcast %106 : vector<8x1xf32> to vector<8x32xf32>
    %115 = arith.subf %98, %114 : vector<8x32xf32>
    %cst_38 = arith.constant 9.99999974E-6 : f32
    %116 = vector.broadcast %cst_38 : f32 to vector<8x1xf32>
    %117 = arith.addf %113, %116 : vector<8x1xf32>
    %118 = math.rsqrt %117 : vector<8x1xf32>
    %119 = vector.broadcast %118 : vector<8x1xf32> to vector<8x32xf32>
    %120 = arith.mulf %115, %119 : vector<8x32xf32>
    %121 = vector.shape_cast %100 : vector<32xf32> to vector<1x32xf32>
    %122 = vector.broadcast %121 : vector<1x32xf32> to vector<8x32xf32>
    %123 = arith.mulf %120, %122 : vector<8x32xf32>
    %124 = vector.shape_cast %102 : vector<32xf32> to vector<1x32xf32>
    %125 = vector.broadcast %124 : vector<1x32xf32> to vector<8x32xf32>
    %126 = arith.addf %123, %125 : vector<8x32xf32>
    %127 = arith.truncf %126 : vector<8x32xf32> to vector<8x32xbf16>
    %c0_39 = arith.constant 0 : index
    %c0_40 = arith.constant 0 : index
    %128 = vector.load %arg10[%c0_39, %c0_40] : memref<32x128xbf16, #tpu.memory_space<vmem>>, vector<32x128xbf16>
    %cst_41 = arith.constant dense<0.000000e+00> : vector<8x128xf32>
    %129 = tpu.matmul %127, %128, %cst_41 {dimension_numbers = #tpu.dot_dimension_numbers<[1], [0], [0], [1], [0, 0, 1, 1], [], []>} : vector<8x32xbf16>, vector<32x128xbf16>, vector<8x128xf32> -> vector<8x128xf32>
    %c0_42 = arith.constant 0 : index
    %c0_43 = arith.constant 0 : index
    %130 = vector.load %arg11[%c0_42, %c0_43] : memref<1x128xf32, #tpu.memory_space<vmem>>, vector<1x128xf32>
    %131 = vector.shape_cast %130 : vector<1x128xf32> to vector<128xf32>
    %132 = vector.shape_cast %131 : vector<128xf32> to vector<1x128xf32>
    %133 = vector.broadcast %132 : vector<1x128xf32> to vector<8x128xf32>
    %134 = arith.addf %129, %133 : vector<8x128xf32>
    %cst_44 = arith.constant 5.000000e-01 : f32
    %135 = vector.broadcast %cst_44 : f32 to vector<8x128xf32>
    %136 = arith.mulf %135, %134 : vector<8x128xf32>
    %cst_45 = arith.constant 0.707106769 : f32
    %137 = vector.broadcast %cst_45 : f32 to vector<8x128xf32>
    %138 = arith.mulf %134, %137 : vector<8x128xf32>
    %139 = math.erf %138 : vector<8x128xf32>
    %cst_46 = arith.constant 1.000000e+00 : f32
    %140 = vector.broadcast %cst_46 : f32 to vector<8x128xf32>
    %141 = arith.addf %140, %139 : vector<8x128xf32>
    %142 = arith.mulf %136, %141 : vector<8x128xf32>
    %143 = arith.truncf %142 : vector<8x128xf32> to vector<8x128xbf16>
    %c0_47 = arith.constant 0 : index
    %c0_48 = arith.constant 0 : index
    %144 = vector.load %arg12[%c0_47, %c0_48] : memref<128x32xbf16, #tpu.memory_space<vmem>>, vector<128x32xbf16>
    %cst_49 = arith.constant dense<0.000000e+00> : vector<8x32xf32>
    %145 = tpu.matmul %143, %144, %cst_49 {dimension_numbers = #tpu.dot_dimension_numbers<[1], [0], [0], [1], [0, 0, 1, 1], [], []>} : vector<8x128xbf16>, vector<128x32xbf16>, vector<8x32xf32> -> vector<8x32xf32>
    %c0_50 = arith.constant 0 : index
    %c0_51 = arith.constant 0 : index
    %146 = vector.load %arg13[%c0_50, %c0_51] : memref<1x32xf32, #tpu.memory_space<vmem>>, vector<1x32xf32>
    %147 = vector.shape_cast %146 : vector<1x32xf32> to vector<32xf32>
    %148 = vector.shape_cast %147 : vector<32xf32> to vector<1x32xf32>
    %149 = vector.broadcast %148 : vector<1x32xf32> to vector<8x32xf32>
    %150 = arith.addf %145, %149 : vector<8x32xf32>
    %151 = arith.addf %98, %150 : vector<8x32xf32>
    %152 = vector.shape_cast %151 : vector<8x32xf32> to vector<1x8x32xf32>
    %c0_52 = arith.constant 0 : index
    %c0_53 = arith.constant 0 : index
    %c0_54 = arith.constant 0 : index
    %153 = vector.load %arg14[%c0_52, %c0_53, %c0_54] : memref<1x8x32xf32, #tpu.memory_space<vmem>>, vector<1x8x32xf32>
    tpu.vector_store %arg14[%c0_52, %c0_53, %c0_54], %152 {strides = array<i32>} : memref<1x8x32xf32, #tpu.memory_space<vmem>>, vector<1x8x32xf32>,
    return
  }
  func.func @transform_0(%arg0: i32) -> (i32, i32, i32) {
    %c0_i32 = arith.constant 0 : i32
    %c0_i32_0 = arith.constant 0 : i32
    %c0_i32_1 = arith.constant 0 : i32
    return %arg0, %c0_i32, %c0_i32_0 : i32, i32, i32
  }
  func.func @transform_1(%arg0: i32) -> (i32, i32) {
    %c0_i32 = arith.constant 0 : i32
    %c0_i32_0 = arith.constant 0 : i32
    %c0_i32_1 = arith.constant 0 : i32
    return %c0_i32, %c0_i32_0 : i32, i32
  }
  func.func @transform_2(%arg0: i32) -> (i32, i32) {
    %c0_i32 = arith.constant 0 : i32
    %c0_i32_0 = arith.constant 0 : i32
    %c0_i32_1 = arith.constant 0 : i32
    return %c0_i32, %c0_i32_0 : i32, i32
  }
  func.func @transform_3(%arg0: i32) -> (i32, i32) {
    %c0_i32 = arith.constant 0 : i32
    %c0_i32_0 = arith.constant 0 : i32
    %c0_i32_1 = arith.constant 0 : i32
    return %c0_i32, %c0_i32_0 : i32, i32
  }
  func.func @transform_4(%arg0: i32) -> (i32, i32) {
    %c0_i32 = arith.constant 0 : i32
    %c0_i32_0 = arith.constant 0 : i32
    %c0_i32_1 = arith.constant 0 : i32
    return %c0_i32, %c0_i32_0 : i32, i32
  }
  func.func @transform_5(%arg0: i32) -> (i32, i32) {
    %c0_i32 = arith.constant 0 : i32
    %c0_i32_0 = arith.constant 0 : i32
    %c0_i32_1 = arith.constant 0 : i32
    return %c0_i32, %c0_i32_0 : i32, i32
  }
  func.func @transform_6(%arg0: i32) -> (i32, i32) {
    %c0_i32 = arith.constant 0 : i32
    %c0_i32_0 = arith.constant 0 : i32
    %c0_i32_1 = arith.constant 0 : i32
    return %c0_i32, %c0_i32_0 : i32, i32
  }
  func.func @transform_7(%arg0: i32) -> (i32, i32) {
    %c0_i32 = arith.constant 0 : i32
    %c0_i32_0 = arith.constant 0 : i32
    %c0_i32_1 = arith.constant 0 : i32
    return %c0_i32, %c0_i32_0 : i32, i32
  }
  func.func @transform_8(%arg0: i32) -> (i32, i32) {
    %c0_i32 = arith.constant 0 : i32
    %c0_i32_0 = arith.constant 0 : i32
    %c0_i32_1 = arith.constant 0 : i32
    return %c0_i32, %c0_i32_0 : i32, i32
  }
  func.func @transform_9(%arg0: i32) -> (i32, i32) {
    %c0_i32 = arith.constant 0 : i32
    %c0_i32_0 = arith.constant 0 : i32
    %c0_i32_1 = arith.constant 0 : i32
    return %c0_i32, %c0_i32_0 : i32, i32
  }
  func.func @transform_10(%arg0: i32) -> (i32, i32) {
    %c0_i32 = arith.constant 0 : i32
    %c0_i32_0 = arith.constant 0 : i32
    %c0_i32_1 = arith.constant 0 : i32
    return %c0_i32, %c0_i32_0 : i32, i32
  }
  func.func @transform_11(%arg0: i32) -> (i32, i32) {
    %c0_i32 = arith.constant 0 : i32
    %c0_i32_0 = arith.constant 0 : i32
    %c0_i32_1 = arith.constant 0 : i32
    return %c0_i32, %c0_i32_0 : i32, i32
  }
  func.func @transform_12(%arg0: i32) -> (i32, i32) {
    %c0_i32 = arith.constant 0 : i32
    %c0_i32_0 = arith.constant 0 : i32
    %c0_i32_1 = arith.constant 0 : i32
    return %c0_i32, %c0_i32_0 : i32, i32
  }
  func.func @transform_13(%arg0: i32) -> (i32, i32, i32) {
    %c0_i32 = arith.constant 0 : i32
    %c0_i32_0 = arith.constant 0 : i32
    %c0_i32_1 = arith.constant 0 : i32
    return %arg0, %c0_i32, %c0_i32_0 : i32, i32, i32
  }
}

module attributes {stable_mosaic.version = 11 : i64} {
  func.func @transformer_block_kernel(%arg0: i32, %arg1: memref<1x8x32xf32, #tpu.memory_space<vmem>>, %arg2: memref<1x32xf32, #tpu.memory_space<vmem>>, %arg3: memref<1x32xf32, #tpu.memory_space<vmem>>, %arg4: memref<32x96xbf16, #tpu.memory_space<vmem>>, %arg5: memref<1x96xf32, #tpu.memory_space<vmem>>, %arg6: memref<32x32xbf16, #tpu.memory_space<vmem>>, %arg7: memref<1x32xf32, #tpu.memory_space<vmem>>, %arg8: memref<1x32xf32, #tpu.memory_space<vmem>>, %arg9: memref<1x32xf32, #tpu.memory_space<vmem>>, %arg10: memref<32x128xbf16, #tpu.memory_space<vmem>>, %arg11: memref<1x128xf32, #tpu.memory_space<vmem>>, %arg12: memref<128x32xbf16, #tpu.memory_space<vmem>>, %arg13: memref<1x32xf32, #tpu.memory_space<vmem>>, %arg14: memref<1x8x32xf32, #tpu.memory_space<vmem>>) attributes {dimension_semantics = [#tpu.dimension_semantics<parallel>], iteration_bounds = array<i64: 2>, scalar_prefetch = 0 : i64, scratch_operands = 0 : i64, tpu.core_type = #tpu.core_type<tc>, window_params = [{transform_indices = @transform_0, window_bounds = array<i64: 1, 8, 32>}, {pipeline_mode = #tpu.pipeline_mode<synchronous>, transform_indices = @transform_1, window_bounds = array<i64: 1, 32>}, {pipeline_mode = #tpu.pipeline_mode<synchronous>, transform_indices = @transform_2, window_bounds = array<i64: 1, 32>}, {pipeline_mode = #tpu.pipeline_mode<synchronous>, transform_indices = @transform_3, window_bounds = array<i64: 32, 96>}, {pipeline_mode = #tpu.pipeline_mode<synchronous>, transform_indices = @transform_4, window_bounds = array<i64: 1, 96>}, {pipeline_mode = #tpu.pipeline_mode<synchronous>, transform_indices = @transform_5, window_bounds = array<i64: 32, 32>}, {pipeline_mode = #tpu.pipeline_mode<synchronous>, transform_indices = @transform_6, window_bounds = array<i64: 1, 32>}, {pipeline_mode = #tpu.pipeline_mode<synchronous>, transform_indices = @transform_7, window_bounds = array<i64: 1, 32>}, {pipeline_mode = #tpu.pipeline_mode<synchronous>, transform_indices = @transform_8, window_bounds = array<i64: 1, 32>}, {pipeline_mode = #tpu.pipeline_mode<synchronous>, transform_indices = @transform_9, window_bounds = array<i64: 32, 128>}, {pipeline_mode = #tpu.pipeline_mode<synchronous>, transform_indices = @transform_10, window_bounds = array<i64: 1, 128>}, {pipeline_mode = #tpu.pipeline_mode<synchronous>, transform_indices = @transform_11, window_bounds = array<i64: 128, 32>}, {pipeline_mode = #tpu.pipeline_mode<synchronous>, transform_indices = @transform_12, window_bounds = array<i64: 1, 32>}, {transform_indices = @transform_13, window_bounds = array<i64: 1, 8, 32>}]} {
    %c0 = arith.constant 0 : index
    %c0_0 = arith.constant 0 : index
    %c0_1 = arith.constant 0 : index
    %0 = vector.load %arg1[%c0, %c0_0, %c0_1] : memref<1x8x32xf32, #tpu.memory_space<vmem>>, vector<1x8x32xf32>
    %1 = vector.shape_cast %0 : vector<1x8x32xf32> to vector<8x32xf32>
    %c0_2 = arith.constant 0 : index
    %c0_3 = arith.constant 0 : index
    %2 = vector.load %arg2[%c0_2, %c0_3] : memref<1x32xf32, #tpu.memory_space<vmem>>, vector<1x32xf32>
    %3 = vector.shape_cast %2 : vector<1x32xf32> to vector<32xf32>
    %c0_4 = arith.constant 0 : index
    %c0_5 = arith.constant 0 : index
    %4 = vector.load %arg3[%c0_4, %c0_5] : memref<1x32xf32, #tpu.memory_space<vmem>>, vector<1x32xf32>
    %5 = vector.shape_cast %4 : vector<1x32xf32> to vector<32xf32>
    %cst = arith.constant dense<0.000000e+00> : vector<8xf32>
    %6 = vector.multi_reduction <add>, %1, %cst [1] : vector<8x32xf32> to vector<8xf32>
    %7 = vector.shape_cast %6 : vector<8xf32> to vector<8x1xf32>
    %cst_6 = arith.constant 3.200000e+01 : f32
    %8 = vector.broadcast %cst_6 : f32 to vector<8x1xf32>
    %9 = arith.divf %7, %8 : vector<8x1xf32>
    %10 = vector.broadcast %9 : vector<8x1xf32> to vector<8x32xf32>
    %11 = arith.subf %1, %10 : vector<8x32xf32>
    %12 = arith.mulf %11, %11 : vector<8x32xf32>
    %cst_7 = arith.constant dense<0.000000e+00> : vector<8xf32>
    %13 = vector.multi_reduction <add>, %12, %cst_7 [1] : vector<8x32xf32> to vector<8xf32>
    %14 = vector.shape_cast %13 : vector<8xf32> to vector<8x1xf32>
    %cst_8 = arith.constant 3.200000e+01 : f32
    %15 = vector.broadcast %cst_8 : f32 to vector<8x1xf32>
    %16 = arith.divf %14, %15 : vector<8x1xf32>
    %17 = vector.broadcast %9 : vector<8x1xf32> to vector<8x32xf32>
    %18 = arith.subf %1, %17 : vector<8x32xf32>
    %cst_9 = arith.constant 9.99999974E-6 : f32
    %19 = vector.broadcast %cst_9 : f32 to vector<8x1xf32>
    %20 = arith.addf %16, %19 : vector<8x1xf32>
    %21 = math.rsqrt %20 : vector<8x1xf32>
    %22 = vector.broadcast %21 : vector<8x1xf32> to vector<8x32xf32>
    %23 = arith.mulf %18, %22 : vector<8x32xf32>
    %24 = vector.shape_cast %3 : vector<32xf32> to vector<1x32xf32>
    %25 = vector.broadcast %24 : vector<1x32xf32> to vector<8x32xf32>
    %26 = arith.mulf %23, %25 : vector<8x32xf32>
    %27 = vector.shape_cast %5 : vector<32xf32> to vector<1x32xf32>
    %28 = vector.broadcast %27 : vector<1x32xf32> to vector<8x32xf32>
    %29 = arith.addf %26, %28 : vector<8x32xf32>
    %30 = arith.truncf %29 : vector<8x32xf32> to vector<8x32xbf16>
    %c0_10 = arith.constant 0 : index
    %c0_11 = arith.constant 0 : index
    %31 = vector.load %arg4[%c0_10, %c0_11] : memref<32x96xbf16, #tpu.memory_space<vmem>>, vector<32x96xbf16>
    %cst_12 = arith.constant dense<0.000000e+00> : vector<8x96xf32>
    %32 = tpu.matmul %30, %31, %cst_12 {dimension_numbers = #tpu.dot_dimension_numbers<[1], [0], [0], [1], [0, 0, 1, 1], [], []>} : vector<8x32xbf16>, vector<32x96xbf16>, vector<8x96xf32> -> vector<8x96xf32>
    %c0_13 = arith.constant 0 : index
    %c0_14 = arith.constant 0 : index
    %33 = vector.load %arg5[%c0_13, %c0_14] : memref<1x96xf32, #tpu.memory_space<vmem>>, vector<1x96xf32>
    %34 = vector.shape_cast %33 : vector<1x96xf32> to vector<96xf32>
    %35 = vector.shape_cast %34 : vector<96xf32> to vector<1x96xf32>
    %36 = vector.broadcast %35 : vector<1x96xf32> to vector<8x96xf32>
    %37 = arith.addf %32, %36 : vector<8x96xf32>
    %38 = vector.extract_strided_slice %37 {offsets = [0, 0], sizes = [8, 32], strides = [1, 1]} : vector<8x96xf32> to vector<8x32xf32>
    %39 = arith.truncf %38 : vector<8x32xf32> to vector<8x32xbf16>
    %40 = vector.extract_strided_slice %39 {offsets = [0, 0], sizes = [8, 8], strides = [1, 1]} : vector<8x32xbf16> to vector<8x8xbf16>
    %41 = vector.shape_cast %40 : vector<8x8xbf16> to vector<1x8x8xbf16>
    %42 = vector.extract_strided_slice %39 {offsets = [0, 8], sizes = [8, 8], strides = [1, 1]} : vector<8x32xbf16> to vector<8x8xbf16>
    %43 = vector.shape_cast %42 : vector<8x8xbf16> to vector<1x8x8xbf16>
    %44 = vector.extract_strided_slice %39 {offsets = [0, 16], sizes = [8, 8], strides = [1, 1]} : vector<8x32xbf16> to vector<8x8xbf16>
    %45 = vector.shape_cast %44 : vector<8x8xbf16> to vector<1x8x8xbf16>
    %46 = vector.extract_strided_slice %39 {offsets = [0, 24], sizes = [8, 8], strides = [1, 1]} : vector<8x32xbf16> to vector<8x8xbf16>
    %47 = vector.shape_cast %46 : vector<8x8xbf16> to vector<1x8x8xbf16>
    %48 = tpu.concatenate %41, %43, %45, %47 in 0 : vector<1x8x8xbf16>, vector<1x8x8xbf16>, vector<1x8x8xbf16>, vector<1x8x8xbf16> -> vector<4x8x8xbf16>
    %49 = vector.extract_strided_slice %37 {offsets = [0, 32], sizes = [8, 32], strides = [1, 1]} : vector<8x96xf32> to vector<8x32xf32>
    %50 = arith.truncf %49 : vector<8x32xf32> to vector<8x32xbf16>
    %51 = vector.extract_strided_slice %50 {offsets = [0, 0], sizes = [8, 8], strides = [1, 1]} : vector<8x32xbf16> to vector<8x8xbf16>
    %52 = vector.shape_cast %51 : vector<8x8xbf16> to vector<1x8x8xbf16>
    %53 = vector.extract_strided_slice %50 {offsets = [0, 8], sizes = [8, 8], strides = [1, 1]} : vector<8x32xbf16> to vector<8x8xbf16>
    %54 = vector.shape_cast %53 : vector<8x8xbf16> to vector<1x8x8xbf16>
    %55 = vector.extract_strided_slice %50 {offsets = [0, 16], sizes = [8, 8], strides = [1, 1]} : vector<8x32xbf16> to vector<8x8xbf16>
    %56 = vector.shape_cast %55 : vector<8x8xbf16> to vector<1x8x8xbf16>
    %57 = vector.extract_strided_slice %50 {offsets = [0, 24], sizes = [8, 8], strides = [1, 1]} : vector<8x32xbf16> to vector<8x8xbf16>
    %58 = vector.shape_cast %57 : vector<8x8xbf16> to vector<1x8x8xbf16>
    %59 = tpu.concatenate %52, %54, %56, %58 in 0 : vector<1x8x8xbf16>, vector<1x8x8xbf16>, vector<1x8x8xbf16>, vector<1x8x8xbf16> -> vector<4x8x8xbf16>
    %60 = vector.extract_strided_slice %37 {offsets = [0, 64], sizes = [8, 32], strides = [1, 1]} : vector<8x96xf32> to vector<8x32xf32>
    %61 = arith.truncf %60 : vector<8x32xf32> to vector<8x32xbf16>
    %62 = vector.extract_strided_slice %61 {offsets = [0, 0], sizes = [8, 8], strides = [1, 1]} : vector<8x32xbf16> to vector<8x8xbf16>
    %63 = vector.shape_cast %62 : vector<8x8xbf16> to vector<1x8x8xbf16>
    %64 = vector.extract_strided_slice %61 {offsets = [0, 8], sizes = [8, 8], strides = [1, 1]} : vector<8x32xbf16> to vector<8x8xbf16>
    %65 = vector.shape_cast %64 : vector<8x8xbf16> to vector<1x8x8xbf16>
    %66 = vector.extract_strided_slice %61 {offsets = [0, 16], sizes = [8, 8], strides = [1, 1]} : vector<8x32xbf16> to vector<8x8xbf16>
    %67 = vector.shape_cast %66 : vector<8x8xbf16> to vector<1x8x8xbf16>
    %68 = vector.extract_strided_slice %61 {offsets = [0, 24], sizes = [8, 8], strides = [1, 1]} : vector<8x32xbf16> to vector<8x8xbf16>
    %69 = vector.shape_cast %68 : vector<8x8xbf16> to vector<1x8x8xbf16>
    %70 = tpu.concatenate %63, %65, %67, %69 in 0 : vector<1x8x8xbf16>, vector<1x8x8xbf16>, vector<1x8x8xbf16>, vector<1x8x8xbf16> -> vector<4x8x8xbf16>
    %71 = tpu.iota {dimensions = array<i32: 0>} : vector<8x8xi32>
    %72 = tpu.iota {dimensions = array<i32: 1>} : vector<8x8xi32>
    %cst_15 = arith.constant -1.000000e+30 : f32
    %73 = vector.broadcast %cst_15 : f32 to vector<4x8x1xf32>
    %cst_16 = arith.constant 0.000000e+00 : f32
    %74 = vector.broadcast %cst_16 : f32 to vector<4x8x1xf32>
    %cst_17 = arith.constant 0.000000e+00 : f32
    %75 = vector.broadcast %cst_17 : f32 to vector<4x8x8xf32>
    "tpu.trace_start"() <{level = 10 : i32, message = "bqd,bkd->bqk"}> : () -> ()
    %cst_18 = arith.constant dense<0.000000e+00> : vector<4x8x8xf32>
    %76 = tpu.matmul %48, %59, %cst_18 {dimension_numbers = #tpu.dot_dimension_numbers<[2], [2], [1], [1], [0, 0, 0, 1, 1, 1], [0], [0]>} : vector<4x8x8xbf16>, vector<4x8x8xbf16>, vector<4x8x8xf32> -> vector<4x8x8xf32>
    "tpu.trace_stop"() : () -> ()
    %cst_19 = arith.constant 0.353553385 : f32
    %77 = vector.broadcast %cst_19 : f32 to vector<4x8x8xf32>
    %78 = arith.mulf %76, %77 : vector<4x8x8xf32>
    %c0_i32 = arith.constant 0 : i32
    %79 = vector.broadcast %c0_i32 : i32 to vector<8x8xi32>
    %80 = arith.addi %72, %79 : vector<8x8xi32>
    %c0_i32_20 = arith.constant 0 : i32
    %81 = vector.broadcast %c0_i32_20 : i32 to vector<8x8xi32>
    %82 = arith.addi %71, %81 : vector<8x8xi32>
    %83 = arith.cmpi sle, %80, %82 : vector<8x8xi32>
    %84 = vector.shape_cast %83 : vector<8x8xi1> to vector<1x8x8xi1>
    %cst_21 = arith.constant -1.000000e+30 : f32
    %85 = vector.shape_cast %84 : vector<1x8x8xi1> to vector<1x8x8xi1>
    %86 = vector.broadcast %85 : vector<1x8x8xi1> to vector<4x8x8xi1>
    %87 = vector.broadcast %cst_21 : f32 to vector<4x8x8xf32>
    %88 = arith.select %86, %78, %87 : vector<4x8x8xi1>, vector<4x8x8xf32>
    %cst_22 = arith.constant dense<0xFF800000> : vector<4x8xf32>
    %89 = vector.multi_reduction <maximumf>, %88, %cst_22 [2] : vector<4x8x8xf32> to vector<4x8xf32>
    %90 = vector.shape_cast %89 : vector<4x8xf32> to vector<4x8x1xf32>
    %91 = arith.maximumf %73, %90 : vector<4x8x1xf32>
    %92 = arith.subf %73, %91 : vector<4x8x1xf32>
    %93 = math.exp %92 : vector<4x8x1xf32>
    %94 = vector.broadcast %91 : vector<4x8x1xf32> to vector<4x8x8xf32>
    %95 = arith.subf %88, %94 : vector<4x8x8xf32>
    %96 = math.exp %95 : vector<4x8x8xf32>
    %97 = arith.mulf %93, %74 : vector<4x8x1xf32>
    %cst_23 = arith.constant dense<0.000000e+00> : vector<4x8xf32>
    %98 = vector.multi_reduction <add>, %96, %cst_23 [2] : vector<4x8x8xf32> to vector<4x8xf32>
    %99 = vector.shape_cast %98 : vector<4x8xf32> to vector<4x8x1xf32>
    %100 = arith.addf %97, %99 : vector<4x8x1xf32>
    %101 = vector.broadcast %93 : vector<4x8x1xf32> to vector<4x8x8xf32>
    %102 = arith.mulf %101, %75 : vector<4x8x8xf32>
    %103 = arith.truncf %96 : vector<4x8x8xf32> to vector<4x8x8xbf16>
    "tpu.trace_start"() <{level = 10 : i32, message = "bqk,bkd->bqd"}> : () -> ()
    %cst_24 = arith.constant dense<0.000000e+00> : vector<4x8x8xf32>
    %104 = tpu.matmul %103, %70, %cst_24 {dimension_numbers = #tpu.dot_dimension_numbers<[2], [1], [1], [2], [0, 0, 0, 1, 1, 2], [0], [0]>} : vector<4x8x8xbf16>, vector<4x8x8xbf16>, vector<4x8x8xf32> -> vector<4x8x8xf32>
    "tpu.trace_stop"() : () -> ()
    %105 = arith.addf %102, %104 : vector<4x8x8xf32>
    %106 = tpu.reciprocal %100 {approx = true} : vector<4x8x1xf32> -> vector<4x8x1xf32>
    %107 = vector.broadcast %106 : vector<4x8x1xf32> to vector<4x8x8xf32>
    %108 = arith.mulf %105, %107 : vector<4x8x8xf32>
    %109 = vector.extract_strided_slice %108 {offsets = [0, 0, 0], sizes = [1, 8, 8], strides = [1, 1, 1]} : vector<4x8x8xf32> to vector<1x8x8xf32>
    %110 = vector.extract_strided_slice %108 {offsets = [1, 0, 0], sizes = [1, 8, 8], strides = [1, 1, 1]} : vector<4x8x8xf32> to vector<1x8x8xf32>
    %111 = vector.extract_strided_slice %108 {offsets = [2, 0, 0], sizes = [1, 8, 8], strides = [1, 1, 1]} : vector<4x8x8xf32> to vector<1x8x8xf32>
    %112 = vector.extract_strided_slice %108 {offsets = [3, 0, 0], sizes = [1, 8, 8], strides = [1, 1, 1]} : vector<4x8x8xf32> to vector<1x8x8xf32>
    %113 = tpu.concatenate %109, %110, %111, %112 in 2 : vector<1x8x8xf32>, vector<1x8x8xf32>, vector<1x8x8xf32>, vector<1x8x8xf32> -> vector<1x8x32xf32>
    %114 = vector.shape_cast %113 : vector<1x8x32xf32> to vector<8x32xf32>
    %115 = arith.truncf %114 : vector<8x32xf32> to vector<8x32xbf16>
    %c0_25 = arith.constant 0 : index
    %c0_26 = arith.constant 0 : index
    %116 = vector.load %arg6[%c0_25, %c0_26] : memref<32x32xbf16, #tpu.memory_space<vmem>>, vector<32x32xbf16>
    %cst_27 = arith.constant dense<0.000000e+00> : vector<8x32xf32>
    %117 = tpu.matmul %115, %116, %cst_27 {dimension_numbers = #tpu.dot_dimension_numbers<[1], [0], [0], [1], [0, 0, 1, 1], [], []>} : vector<8x32xbf16>, vector<32x32xbf16>, vector<8x32xf32> -> vector<8x32xf32>
    %c0_28 = arith.constant 0 : index
    %c0_29 = arith.constant 0 : index
    %118 = vector.load %arg7[%c0_28, %c0_29] : memref<1x32xf32, #tpu.memory_space<vmem>>, vector<1x32xf32>
    %119 = vector.shape_cast %118 : vector<1x32xf32> to vector<32xf32>
    %120 = vector.shape_cast %119 : vector<32xf32> to vector<1x32xf32>
    %121 = vector.broadcast %120 : vector<1x32xf32> to vector<8x32xf32>
    %122 = arith.addf %117, %121 : vector<8x32xf32>
    %123 = arith.addf %1, %122 : vector<8x32xf32>
    %c0_30 = arith.constant 0 : index
    %c0_31 = arith.constant 0 : index
    %124 = vector.load %arg8[%c0_30, %c0_31] : memref<1x32xf32, #tpu.memory_space<vmem>>, vector<1x32xf32>
    %125 = vector.shape_cast %124 : vector<1x32xf32> to vector<32xf32>
    %c0_32 = arith.constant 0 : index
    %c0_33 = arith.constant 0 : index
    %126 = vector.load %arg9[%c0_32, %c0_33] : memref<1x32xf32, #tpu.memory_space<vmem>>, vector<1x32xf32>
    %127 = vector.shape_cast %126 : vector<1x32xf32> to vector<32xf32>
    %cst_34 = arith.constant dense<0.000000e+00> : vector<8xf32>
    %128 = vector.multi_reduction <add>, %123, %cst_34 [1] : vector<8x32xf32> to vector<8xf32>
    %129 = vector.shape_cast %128 : vector<8xf32> to vector<8x1xf32>
    %cst_35 = arith.constant 3.200000e+01 : f32
    %130 = vector.broadcast %cst_35 : f32 to vector<8x1xf32>
    %131 = arith.divf %129, %130 : vector<8x1xf32>
    %132 = vector.broadcast %131 : vector<8x1xf32> to vector<8x32xf32>
    %133 = arith.subf %123, %132 : vector<8x32xf32>
    %134 = arith.mulf %133, %133 : vector<8x32xf32>
    %cst_36 = arith.constant dense<0.000000e+00> : vector<8xf32>
    %135 = vector.multi_reduction <add>, %134, %cst_36 [1] : vector<8x32xf32> to vector<8xf32>
    %136 = vector.shape_cast %135 : vector<8xf32> to vector<8x1xf32>
    %cst_37 = arith.constant 3.200000e+01 : f32
    %137 = vector.broadcast %cst_37 : f32 to vector<8x1xf32>
    %138 = arith.divf %136, %137 : vector<8x1xf32>
    %139 = vector.broadcast %131 : vector<8x1xf32> to vector<8x32xf32>
    %140 = arith.subf %123, %139 : vector<8x32xf32>
    %cst_38 = arith.constant 9.99999974E-6 : f32
    %141 = vector.broadcast %cst_38 : f32 to vector<8x1xf32>
    %142 = arith.addf %138, %141 : vector<8x1xf32>
    %143 = math.rsqrt %142 : vector<8x1xf32>
    %144 = vector.broadcast %143 : vector<8x1xf32> to vector<8x32xf32>
    %145 = arith.mulf %140, %144 : vector<8x32xf32>
    %146 = vector.shape_cast %125 : vector<32xf32> to vector<1x32xf32>
    %147 = vector.broadcast %146 : vector<1x32xf32> to vector<8x32xf32>
    %148 = arith.mulf %145, %147 : vector<8x32xf32>
    %149 = vector.shape_cast %127 : vector<32xf32> to vector<1x32xf32>
    %150 = vector.broadcast %149 : vector<1x32xf32> to vector<8x32xf32>
    %151 = arith.addf %148, %150 : vector<8x32xf32>
    %152 = arith.truncf %151 : vector<8x32xf32> to vector<8x32xbf16>
    %c0_39 = arith.constant 0 : index
    %c0_40 = arith.constant 0 : index
    %153 = vector.load %arg10[%c0_39, %c0_40] : memref<32x128xbf16, #tpu.memory_space<vmem>>, vector<32x128xbf16>
    %cst_41 = arith.constant dense<0.000000e+00> : vector<8x128xf32>
    %154 = tpu.matmul %152, %153, %cst_41 {dimension_numbers = #tpu.dot_dimension_numbers<[1], [0], [0], [1], [0, 0, 1, 1], [], []>} : vector<8x32xbf16>, vector<32x128xbf16>, vector<8x128xf32> -> vector<8x128xf32>
    %c0_42 = arith.constant 0 : index
    %c0_43 = arith.constant 0 : index
    %155 = vector.load %arg11[%c0_42, %c0_43] : memref<1x128xf32, #tpu.memory_space<vmem>>, vector<1x128xf32>
    %156 = vector.shape_cast %155 : vector<1x128xf32> to vector<128xf32>
    %157 = vector.shape_cast %156 : vector<128xf32> to vector<1x128xf32>
    %158 = vector.broadcast %157 : vector<1x128xf32> to vector<8x128xf32>
    %159 = arith.addf %154, %158 : vector<8x128xf32>
    %cst_44 = arith.constant 5.000000e-01 : f32
    %160 = vector.broadcast %cst_44 : f32 to vector<8x128xf32>
    %161 = arith.mulf %160, %159 : vector<8x128xf32>
    %cst_45 = arith.constant 0.707106769 : f32
    %162 = vector.broadcast %cst_45 : f32 to vector<8x128xf32>
    %163 = arith.mulf %159, %162 : vector<8x128xf32>
    %164 = math.erf %163 : vector<8x128xf32>
    %cst_46 = arith.constant 1.000000e+00 : f32
    %165 = vector.broadcast %cst_46 : f32 to vector<8x128xf32>
    %166 = arith.addf %165, %164 : vector<8x128xf32>
    %167 = arith.mulf %161, %166 : vector<8x128xf32>
    %168 = arith.truncf %167 : vector<8x128xf32> to vector<8x128xbf16>
    %c0_47 = arith.constant 0 : index
    %c0_48 = arith.constant 0 : index
    %169 = vector.load %arg12[%c0_47, %c0_48] : memref<128x32xbf16, #tpu.memory_space<vmem>>, vector<128x32xbf16>
    %cst_49 = arith.constant dense<0.000000e+00> : vector<8x32xf32>
    %170 = tpu.matmul %168, %169, %cst_49 {dimension_numbers = #tpu.dot_dimension_numbers<[1], [0], [0], [1], [0, 0, 1, 1], [], []>} : vector<8x128xbf16>, vector<128x32xbf16>, vector<8x32xf32> -> vector<8x32xf32>
    %c0_50 = arith.constant 0 : index
    %c0_51 = arith.constant 0 : index
    %171 = vector.load %arg13[%c0_50, %c0_51] : memref<1x32xf32, #tpu.memory_space<vmem>>, vector<1x32xf32>
    %172 = vector.shape_cast %171 : vector<1x32xf32> to vector<32xf32>
    %173 = vector.shape_cast %172 : vector<32xf32> to vector<1x32xf32>
    %174 = vector.broadcast %173 : vector<1x32xf32> to vector<8x32xf32>
    %175 = arith.addf %170, %174 : vector<8x32xf32>
    %176 = arith.addf %123, %175 : vector<8x32xf32>
    %177 = vector.shape_cast %176 : vector<8x32xf32> to vector<1x8x32xf32>
    %c0_52 = arith.constant 0 : index
    %c0_53 = arith.constant 0 : index
    %c0_54 = arith.constant 0 : index
    %178 = vector.load %arg14[%c0_52, %c0_53, %c0_54] : memref<1x8x32xf32, #tpu.memory_space<vmem>>, vector<1x8x32xf32>
    tpu.vector_store %arg14[%c0_52, %c0_53, %c0_54], %177 {strides = array<i32>} : memref<1x8x32xf32, #tpu.memory_space<vmem>>, vector<1x8x32xf32>,
    return
  }
  func.func @transform_0(%arg0: i32) -> (i32, i32, i32) {
    %c0_i32 = arith.constant 0 : i32
    %c0_i32_0 = arith.constant 0 : i32
    %c0_i32_1 = arith.constant 0 : i32
    return %arg0, %c0_i32, %c0_i32_0 : i32, i32, i32
  }
  func.func @transform_1(%arg0: i32) -> (i32, i32) {
    %c0_i32 = arith.constant 0 : i32
    %c0_i32_0 = arith.constant 0 : i32
    %c0_i32_1 = arith.constant 0 : i32
    return %c0_i32, %c0_i32_0 : i32, i32
  }
  func.func @transform_2(%arg0: i32) -> (i32, i32) {
    %c0_i32 = arith.constant 0 : i32
    %c0_i32_0 = arith.constant 0 : i32
    %c0_i32_1 = arith.constant 0 : i32
    return %c0_i32, %c0_i32_0 : i32, i32
  }
  func.func @transform_3(%arg0: i32) -> (i32, i32) {
    %c0_i32 = arith.constant 0 : i32
    %c0_i32_0 = arith.constant 0 : i32
    %c0_i32_1 = arith.constant 0 : i32
    return %c0_i32, %c0_i32_0 : i32, i32
  }
  func.func @transform_4(%arg0: i32) -> (i32, i32) {
    %c0_i32 = arith.constant 0 : i32
    %c0_i32_0 = arith.constant 0 : i32
    %c0_i32_1 = arith.constant 0 : i32
    return %c0_i32, %c0_i32_0 : i32, i32
  }
  func.func @transform_5(%arg0: i32) -> (i32, i32) {
    %c0_i32 = arith.constant 0 : i32
    %c0_i32_0 = arith.constant 0 : i32
    %c0_i32_1 = arith.constant 0 : i32
    return %c0_i32, %c0_i32_0 : i32, i32
  }
  func.func @transform_6(%arg0: i32) -> (i32, i32) {
    %c0_i32 = arith.constant 0 : i32
    %c0_i32_0 = arith.constant 0 : i32
    %c0_i32_1 = arith.constant 0 : i32
    return %c0_i32, %c0_i32_0 : i32, i32
  }
  func.func @transform_7(%arg0: i32) -> (i32, i32) {
    %c0_i32 = arith.constant 0 : i32
    %c0_i32_0 = arith.constant 0 : i32
    %c0_i32_1 = arith.constant 0 : i32
    return %c0_i32, %c0_i32_0 : i32, i32
  }
  func.func @transform_8(%arg0: i32) -> (i32, i32) {
    %c0_i32 = arith.constant 0 : i32
    %c0_i32_0 = arith.constant 0 : i32
    %c0_i32_1 = arith.constant 0 : i32
    return %c0_i32, %c0_i32_0 : i32, i32
  }
  func.func @transform_9(%arg0: i32) -> (i32, i32) {
    %c0_i32 = arith.constant 0 : i32
    %c0_i32_0 = arith.constant 0 : i32
    %c0_i32_1 = arith.constant 0 : i32
    return %c0_i32, %c0_i32_0 : i32, i32
  }
  func.func @transform_10(%arg0: i32) -> (i32, i32) {
    %c0_i32 = arith.constant 0 : i32
    %c0_i32_0 = arith.constant 0 : i32
    %c0_i32_1 = arith.constant 0 : i32
    return %c0_i32, %c0_i32_0 : i32, i32
  }
  func.func @transform_11(%arg0: i32) -> (i32, i32) {
    %c0_i32 = arith.constant 0 : i32
    %c0_i32_0 = arith.constant 0 : i32
    %c0_i32_1 = arith.constant 0 : i32
    return %c0_i32, %c0_i32_0 : i32, i32
  }
  func.func @transform_12(%arg0: i32) -> (i32, i32) {
    %c0_i32 = arith.constant 0 : i32
    %c0_i32_0 = arith.constant 0 : i32
    %c0_i32_1 = arith.constant 0 : i32
    return %c0_i32, %c0_i32_0 : i32, i32
  }
  func.func @transform_13(%arg0: i32) -> (i32, i32, i32) {
    %c0_i32 = arith.constant 0 : i32
    %c0_i32_0 = arith.constant 0 : i32
    %c0_i32_1 = arith.constant 0 : i32
    return %arg0, %c0_i32, %c0_i32_0 : i32, i32, i32
  }
}

</mosaic_0001>

<llo_original>
// kernel: tpu_custom_call.1
$region0: #{tpu_custom_call.1}
  #allocation0 [shape = 'u32[]', space=smem, size = 0x4, offset = 0x4, fixed_abs, tag = 'smem constant byte address 0x4 - core index']
  #allocation1 [shape = 'u32[72,128]{1,0:T(1,128)}', space=vmem, size = 0x9000, scoped, tag = 'internal scratch']
  %s0 = inlined_call_operand.vmem [shape: f32[2,8,32], index: 0, kind: input, shape index: {}]
  %s1 = inlined_call_operand.vmem [shape: f32[1,32], index: 1, kind: input, shape index: {}]
  %s2 = inlined_call_operand.vmem [shape: f32[1,32], index: 2, kind: input, shape index: {}]
  %s3 = inlined_call_operand.vmem [shape: bf16[32,96], index: 3, kind: input, shape index: {}]
  %s4 = inlined_call_operand.vmem [shape: f32[1,96], index: 4, kind: input, shape index: {}]
  %s5 = inlined_call_operand.vmem [shape: bf16[32,32], index: 5, kind: input, shape index: {}]
  %s6 = inlined_call_operand.vmem [shape: f32[1,32], index: 6, kind: input, shape index: {}]
  %s7 = inlined_call_operand.vmem [shape: f32[1,32], index: 7, kind: input, shape index: {}]
  %s8 = inlined_call_operand.vmem [shape: f32[1,32], index: 8, kind: input, shape index: {}]
  %s9 = inlined_call_operand.vmem [shape: bf16[32,128], index: 9, kind: input, shape index: {}]
  %s10 = inlined_call_operand.vmem [shape: f32[1,128], index: 10, kind: input, shape index: {}]
  %s11 = inlined_call_operand.vmem [shape: bf16[128,32], index: 11, kind: input, shape index: {}]
  %s12 = inlined_call_operand.vmem [shape: f32[1,32], index: 12, kind: input, shape index: {}]
  %s13 = inlined_call_operand.hbm [shape: f32[2,8,32], index: 13, kind: output, shape index: {}]
  %s14 = sld [smem:[#allocation0]]
  $region85: #{tpu_custom_call.1} parent=0
    _
  %s16 = ssub.s32 1, %s14
  %s17 = scalar_select 0, %s16, %s14
  $region1: #{tpu_custom_call.1} parent=0
    #allocation2 [shape = 'u8[8192]{0}', space=vmem, size = 0x2000, scoped, tag = 'output window, operand 0']
    #allocation3 [shape = 's32[2]{0}', space=sflag, size = 0x8, scoped, tag = 'scoped memory for tpu_custom_call.1']
    %18 = vsyncpa [#allocation3], 0
    %s19 = scalar_lea.sflag [#allocation3], 1
    %20 = vsyncpa %s19, 0
    loop: start=0, step=1, limit=4
    $region2: #{tpu_custom_call.1} parent=1 // loop_pre_header
      _
    $region3: #{tpu_custom_call.1} parent=1 // loop_header
      %s22 = sphi 0, %s26
      %p23 = scmp.ge.s32.totalorder %s22, 4
      %s32 = sphi 0, %s34
      %s35 = sphi 0, %s32
      %s36 = sphi 0, %s35
      %s52 = sphi 0, %s36
      %s56 = sphi 0, %s56
      %s58 = sphi 0, %s56
      %s59 = sphi 0, %s58
      %s73 = sphi 0, %s59
      %s77 = sphi 0, %s77
      %s79 = sphi 0, %s77
      %s80 = sphi 0, %s79
      %s94 = sphi 0, %s80
      %s98 = sphi 0, %s98
      %s100 = sphi 0, %s98
      %s101 = sphi 0, %s100
      %s115 = sphi 0, %s101
      %s119 = sphi 0, %s119
      %s121 = sphi 0, %s119
      %s122 = sphi 0, %s121
      %s136 = sphi 0, %s122
      %s140 = sphi 0, %s140
      %s142 = sphi 0, %s140
      %s143 = sphi 0, %s142
      %s157 = sphi 0, %s143
      %s161 = sphi 0, %s161
      %s163 = sphi 0, %s161
      %s164 = sphi 0, %s163
      %s178 = sphi 0, %s164
      %s182 = sphi 0, %s182
      %s184 = sphi 0, %s182
      %s185 = sphi 0, %s184
      %s199 = sphi 0, %s185
      %s203 = sphi 0, %s203
      %s205 = sphi 0, %s203
      %s206 = sphi 0, %s205
      %s220 = sphi 0, %s206
      %s224 = sphi 0, %s224
      %s226 = sphi 0, %s224
      %s227 = sphi 0, %s226
      %s241 = sphi 0, %s227
      %s245 = sphi 0, %s245
      %s247 = sphi 0, %s245
      %s248 = sphi 0, %s247
      %s262 = sphi 0, %s248
      %s266 = sphi 0, %s266
      %s268 = sphi 0, %s266
      %s269 = sphi 0, %s268
      %s283 = sphi 0, %s269
      %s287 = sphi 0, %s287
      %s289 = sphi 0, %s287
      %s290 = sphi 0, %s289
      %s304 = sphi 0, %s290
      %s310 = sphi 0, %s312
      %s313 = sphi 0, %s310
      %s314 = sphi 0, %s313
      %s330 = sphi 0, %s314
    $region4: #{tpu_custom_call.1} parent=1 // loop_header_branch
      %25 = sbr.rel (%p23) target = $region8
    $region5: #{tpu_custom_call.1} parent=1 // loop_body
      %s27 = ssub.s32 %s22, 1
      %s28 = ssub.s32 %s22, 2
      %s29 = sadd.s32 %s22, 1
      %s30 = ssub.s32 %s22, %s29
      %p31 = scmp.eq.s32.totalorder %s30, 0
      %s33 = sadd.s32 %s32, 1
      %s34 = scalar_select %p31, %s32, %s33
      %p37 = pneg %p31
      %p38 = scmp.eq.s32.totalorder %s22, 1
      %p39 = por %p37, %p38
      %p40 = scmp.ne.s32.totalorder %s32, %s35
      %p41 = scmp.eq.s32.totalorder %s22, 0
      %p42 = por %p40, %p41
      %p43 = scmp.ne.s32.totalorder %s32, %s35
      %p44 = scmp.eq.s32.totalorder %s27, 1
      %p45 = por %p43, %p44
      %p46 = scmp.ne.s32.totalorder %s35, %s36
      %p47 = scmp.eq.s32.totalorder %s27, 0
      %p48 = por %p46, %p47
      %p49 = scmp.ne.s32.totalorder %s35, %s36
      %p50 = scmp.eq.s32.totalorder %s28, 1
      %p51 = por %p49, %p50
      %p53 = scmp.ne.s32.totalorder %s36, %s52
      %p54 = scmp.eq.s32.totalorder %s28, 0
      %p55 = por %p53, %p54
      %s57 = sadd.s32 %s56, 1
      %p60 = scmp.eq.s32.totalorder %s22, 1
      %p61 = scmp.ne.s32.totalorder %s56, %s58
      %p62 = scmp.eq.s32.totalorder %s22, 0
      %p63 = por %p61, %p62
      %p64 = scmp.ne.s32.totalorder %s56, %s58
      %p65 = scmp.eq.s32.totalorder %s27, 1
      %p66 = por %p64, %p65
      %p67 = scmp.ne.s32.totalorder %s58, %s59
      %p68 = scmp.eq.s32.totalorder %s27, 0
      %p69 = por %p67, %p68
      %p70 = scmp.ne.s32.totalorder %s58, %s59
      %p71 = scmp.eq.s32.totalorder %s28, 1
      %p72 = por %p70, %p71
      %p74 = scmp.ne.s32.totalorder %s59, %s73
      %p75 = scmp.eq.s32.totalorder %s28, 0
      %p76 = por %p74, %p75
      %s78 = sadd.s32 %s77, 1
      %p81 = scmp.eq.s32.totalorder %s22, 1
      %p82 = scmp.ne.s32.totalorder %s77, %s79
      %p83 = scmp.eq.s32.totalorder %s22, 0
      %p84 = por %p82, %p83
      %p85 = scmp.ne.s32.totalorder %s77, %s79
      %p86 = scmp.eq.s32.totalorder %s27, 1
      %p87 = por %p85, %p86
      %p88 = scmp.ne.s32.totalorder %s79, %s80
      %p89 = scmp.eq.s32.totalorder %s27, 0
      %p90 = por %p88, %p89
      %p91 = scmp.ne.s32.totalorder %s79, %s80
      %p92 = scmp.eq.s32.totalorder %s28, 1
      %p93 = por %p91, %p92
      %p95 = scmp.ne.s32.totalorder %s80, %s94
      %p96 = scmp.eq.s32.totalorder %s28, 0
      %p97 = por %p95, %p96
      %s99 = sadd.s32 %s98, 1
      %p102 = scmp.eq.s32.totalorder %s22, 1
      %p103 = scmp.ne.s32.totalorder %s98, %s100
      %p104 = scmp.eq.s32.totalorder %s22, 0
      %p105 = por %p103, %p104
      %p106 = scmp.ne.s32.totalorder %s98, %s100
      %p107 = scmp.eq.s32.totalorder %s27, 1
      %p108 = por %p106, %p107
      %p109 = scmp.ne.s32.totalorder %s100, %s101
      %p110 = scmp.eq.s32.totalorder %s27, 0
      %p111 = por %p109, %p110
      %p112 = scmp.ne.s32.totalorder %s100, %s101
      %p113 = scmp.eq.s32.totalorder %s28, 1
      %p114 = por %p112, %p113
      %p116 = scmp.ne.s32.totalorder %s101, %s115
      %p117 = scmp.eq.s32.totalorder %s28, 0
      %p118 = por %p116, %p117
      %s120 = sadd.s32 %s119, 1
      %p123 = scmp.eq.s32.totalorder %s22, 1
      %p124 = scmp.ne.s32.totalorder %s119, %s121
      %p125 = scmp.eq.s32.totalorder %s22, 0
      %p126 = por %p124, %p125
      %p127 = scmp.ne.s32.totalorder %s119, %s121
      %p128 = scmp.eq.s32.totalorder %s27, 1
      %p129 = por %p127, %p128
      %p130 = scmp.ne.s32.totalorder %s121, %s122
      %p131 = scmp.eq.s32.totalorder %s27, 0
      %p132 = por %p130, %p131
      %p133 = scmp.ne.s32.totalorder %s121, %s122
      %p134 = scmp.eq.s32.totalorder %s28, 1
      %p135 = por %p133, %p134
      %p137 = scmp.ne.s32.totalorder %s122, %s136
      %p138 = scmp.eq.s32.totalorder %s28, 0
      %p139 = por %p137, %p138
      %s141 = sadd.s32 %s140, 1
      %p144 = scmp.eq.s32.totalorder %s22, 1
      %p145 = scmp.ne.s32.totalorder %s140, %s142
      %p146 = scmp.eq.s32.totalorder %s22, 0
      %p147 = por %p145, %p146
      %p148 = scmp.ne.s32.totalorder %s140, %s142
      %p149 = scmp.eq.s32.totalorder %s27, 1
      %p150 = por %p148, %p149
      %p151 = scmp.ne.s32.totalorder %s142, %s143
      %p152 = scmp.eq.s32.totalorder %s27, 0
      %p153 = por %p151, %p152
      %p154 = scmp.ne.s32.totalorder %s142, %s143
      %p155 = scmp.eq.s32.totalorder %s28, 1
      %p156 = por %p154, %p155
      %p158 = scmp.ne.s32.totalorder %s143, %s157
      %p159 = scmp.eq.s32.totalorder %s28, 0
      %p160 = por %p158, %p159
      %s162 = sadd.s32 %s161, 1
      %p165 = scmp.eq.s32.totalorder %s22, 1
      %p166 = scmp.ne.s32.totalorder %s161, %s163
      %p167 = scmp.eq.s32.totalorder %s22, 0
      %p168 = por %p166, %p167
      %p169 = scmp.ne.s32.totalorder %s161, %s163
      %p170 = scmp.eq.s32.totalorder %s27, 1
      %p171 = por %p169, %p170
      %p172 = scmp.ne.s32.totalorder %s163, %s164
      %p173 = scmp.eq.s32.totalorder %s27, 0
      %p174 = por %p172, %p173
      %p175 = scmp.ne.s32.totalorder %s163, %s164
      %p176 = scmp.eq.s32.totalorder %s28, 1
      %p177 = por %p175, %p176
      %p179 = scmp.ne.s32.totalorder %s164, %s178
      %p180 = scmp.eq.s32.totalorder %s28, 0
      %p181 = por %p179, %p180
      %s183 = sadd.s32 %s182, 1
      %p186 = scmp.eq.s32.totalorder %s22, 1
      %p187 = scmp.ne.s32.totalorder %s182, %s184
      %p188 = scmp.eq.s32.totalorder %s22, 0
      %p189 = por %p187, %p188
      %p190 = scmp.ne.s32.totalorder %s182, %s184
      %p191 = scmp.eq.s32.totalorder %s27, 1
      %p192 = por %p190, %p191
      %p193 = scmp.ne.s32.totalorder %s184, %s185
      %p194 = scmp.eq.s32.totalorder %s27, 0
      %p195 = por %p193, %p194
      %p196 = scmp.ne.s32.totalorder %s184, %s185
      %p197 = scmp.eq.s32.totalorder %s28, 1
      %p198 = por %p196, %p197
      %p200 = scmp.ne.s32.totalorder %s185, %s199
      %p201 = scmp.eq.s32.totalorder %s28, 0
      %p202 = por %p200, %p201
      %s204 = sadd.s32 %s203, 1
      %p207 = scmp.eq.s32.totalorder %s22, 1
      %p208 = scmp.ne.s32.totalorder %s203, %s205
      %p209 = scmp.eq.s32.totalorder %s22, 0
      %p210 = por %p208, %p209
      %p211 = scmp.ne.s32.totalorder %s203, %s205
      %p212 = scmp.eq.s32.totalorder %s27, 1
      %p213 = por %p211, %p212
      %p214 = scmp.ne.s32.totalorder %s205, %s206
      %p215 = scmp.eq.s32.totalorder %s27, 0
      %p216 = por %p214, %p215
      %p217 = scmp.ne.s32.totalorder %s205, %s206
      %p218 = scmp.eq.s32.totalorder %s28, 1
      %p219 = por %p217, %p218
      %p221 = scmp.ne.s32.totalorder %s206, %s220
      %p222 = scmp.eq.s32.totalorder %s28, 0
      %p223 = por %p221, %p222
      %s225 = sadd.s32 %s224, 1
      %p228 = scmp.eq.s32.totalorder %s22, 1
      %p229 = scmp.ne.s32.totalorder %s224, %s226
      %p230 = scmp.eq.s32.totalorder %s22, 0
      %p231 = por %p229, %p230
      %p232 = scmp.ne.s32.totalorder %s224, %s226
      %p233 = scmp.eq.s32.totalorder %s27, 1
      %p234 = por %p232, %p233
      %p235 = scmp.ne.s32.totalorder %s226, %s227
      %p236 = scmp.eq.s32.totalorder %s27, 0
      %p237 = por %p235, %p236
      %p238 = scmp.ne.s32.totalorder %s226, %s227
      %p239 = scmp.eq.s32.totalorder %s28, 1
      %p240 = por %p238, %p239
      %p242 = scmp.ne.s32.totalorder %s227, %s241
      %p243 = scmp.eq.s32.totalorder %s28, 0
      %p244 = por %p242, %p243
      %s246 = sadd.s32 %s245, 1
      %p249 = scmp.eq.s32.totalorder %s22, 1
      %p250 = scmp.ne.s32.totalorder %s245, %s247
      %p251 = scmp.eq.s32.totalorder %s22, 0
      %p252 = por %p250, %p251
      %p253 = scmp.ne.s32.totalorder %s245, %s247
      %p254 = scmp.eq.s32.totalorder %s27, 1
      %p255 = por %p253, %p254
      %p256 = scmp.ne.s32.totalorder %s247, %s248
      %p257 = scmp.eq.s32.totalorder %s27, 0
      %p258 = por %p256, %p257
      %p259 = scmp.ne.s32.totalorder %s247, %s248
      %p260 = scmp.eq.s32.totalorder %s28, 1
      %p261 = por %p259, %p260
      %p263 = scmp.ne.s32.totalorder %s248, %s262
      %p264 = scmp.eq.s32.totalorder %s28, 0
      %p265 = por %p263, %p264
      %s267 = sadd.s32 %s266, 1
      %p270 = scmp.eq.s32.totalorder %s22, 1
      %p271 = scmp.ne.s32.totalorder %s266, %s268
      %p272 = scmp.eq.s32.totalorder %s22, 0
      %p273 = por %p271, %p272
      %p274 = scmp.ne.s32.totalorder %s266, %s268
      %p275 = scmp.eq.s32.totalorder %s27, 1
      %p276 = por %p274, %p275
      %p277 = scmp.ne.s32.totalorder %s268, %s269
      %p278 = scmp.eq.s32.totalorder %s27, 0
      %p279 = por %p277, %p278
      %p280 = scmp.ne.s32.totalorder %s268, %s269
      %p281 = scmp.eq.s32.totalorder %s28, 1
      %p282 = por %p280, %p281
      %p284 = scmp.ne.s32.totalorder %s269, %s283
      %p285 = scmp.eq.s32.totalorder %s28, 0
      %p286 = por %p284, %p285
      %s288 = sadd.s32 %s287, 1
      %p291 = scmp.eq.s32.totalorder %s22, 1
      %p292 = scmp.ne.s32.totalorder %s287, %s289
      %p293 = scmp.eq.s32.totalorder %s22, 0
      %p294 = por %p292, %p293
      %p295 = scmp.ne.s32.totalorder %s287, %s289
      %p296 = scmp.eq.s32.totalorder %s27, 1
      %p297 = por %p295, %p296
      %p298 = scmp.ne.s32.totalorder %s289, %s290
      %p299 = scmp.eq.s32.totalorder %s27, 0
      %p300 = por %p298, %p299
      %p301 = scmp.ne.s32.totalorder %s289, %s290
      %p302 = scmp.eq.s32.totalorder %s28, 1
      %p303 = por %p301, %p302
      %p305 = scmp.ne.s32.totalorder %s290, %s304
      %p306 = scmp.eq.s32.totalorder %s28, 0
      %p307 = por %p305, %p306
      %s308 = ssub.s32 %s22, %s29
      %p309 = scmp.eq.s32.totalorder %s308, 0
      %s311 = sadd.s32 %s310, 1
      %s312 = scalar_select %p309, %s310, %s311
      %p315 = pneg %p309
      %p316 = scmp.eq.s32.totalorder %s22, 1
      %p317 = por %p315, %p316
      %p318 = scmp.ne.s32.totalorder %s310, %s313
      %p319 = scmp.eq.s32.totalorder %s22, 0
      %p320 = por %p318, %p319
      %p321 = scmp.ne.s32.totalorder %s310, %s313
      %p322 = scmp.eq.s32.totalorder %s27, 1
      %p323 = por %p321, %p322
      %p324 = scmp.ne.s32.totalorder %s313, %s314
      %p325 = scmp.eq.s32.totalorder %s27, 0
      %p326 = por %p324, %p325
      %p327 = scmp.ne.s32.totalorder %s313, %s314
      %p328 = scmp.eq.s32.totalorder %s28, 1
      %p329 = por %p327, %p328
      %p331 = scmp.ne.s32.totalorder %s314, %s330
      %p332 = scmp.eq.s32.totalorder %s28, 0
      %p333 = por %p331, %p332
      %p334 = scmp.le.s32.totalorder 1, %s22
      %p335 = scmp.lt.s32.totalorder %s22, 3
      %p336 = pnand %p334, %p335
      %p337 = pneg %p336
      // Predicated region
      $region9: #{tpu_custom_call.1} parent=5 // pred_check
        _
      $region10: #{tpu_custom_call.1} parent=5 // pred_check_branch
        %339 = sbr.rel (%p336) target = $region12
      $region11: #{tpu_custom_call.1} parent=5 // pred_region
        %s340 = ssub.s32 %s22, 1
        // Predicated region
        $region13: #{tpu_custom_call.1} parent=11 // pred_check
          %p341 = pneg %p69
        $region14: #{tpu_custom_call.1} parent=11 // pred_check_branch
          %343 = sbr.rel (%p341) target = $region16
        $region15: #{tpu_custom_call.1} parent=11 // pred_region
          _
        $region16: #{tpu_custom_call.1} parent=11 // pred_fallthru
          _
        // Predicated region
        $region17: #{tpu_custom_call.1} parent=11 // pred_check
          %p344 = pneg %p90
        $region18: #{tpu_custom_call.1} parent=11 // pred_check_branch
          %346 = sbr.rel (%p344) target = $region20
        $region19: #{tpu_custom_call.1} parent=11 // pred_region
          _
        $region20: #{tpu_custom_call.1} parent=11 // pred_fallthru
          _
        // Predicated region
        $region21: #{tpu_custom_call.1} parent=11 // pred_check
          %p347 = pneg %p111
        $region22: #{tpu_custom_call.1} parent=11 // pred_check_branch
          %349 = sbr.rel (%p347) target = $region24
        $region23: #{tpu_custom_call.1} parent=11 // pred_region
          _
        $region24: #{tpu_custom_call.1} parent=11 // pred_fallthru
          _
        // Predicated region
        $region25: #{tpu_custom_call.1} parent=11 // pred_check
          %p350 = pneg %p132
        $region26: #{tpu_custom_call.1} parent=11 // pred_check_branch
          %352 = sbr.rel (%p350) target = $region28
        $region27: #{tpu_custom_call.1} parent=11 // pred_region
          _
        $region28: #{tpu_custom_call.1} parent=11 // pred_fallthru
          _
        // Predicated region
        $region29: #{tpu_custom_call.1} parent=11 // pred_check
          %p353 = pneg %p153
        $region30: #{tpu_custom_call.1} parent=11 // pred_check_branch
          %355 = sbr.rel (%p353) target = $region32
        $region31: #{tpu_custom_call.1} parent=11 // pred_region
          _
        $region32: #{tpu_custom_call.1} parent=11 // pred_fallthru
          _
        // Predicated region
        $region33: #{tpu_custom_call.1} parent=11 // pred_check
          %p356 = pneg %p174
        $region34: #{tpu_custom_call.1} parent=11 // pred_check_branch
          %358 = sbr.rel (%p356) target = $region36
        $region35: #{tpu_custom_call.1} parent=11 // pred_region
          _
        $region36: #{tpu_custom_call.1} parent=11 // pred_fallthru
          _
        // Predicated region
        $region37: #{tpu_custom_call.1} parent=11 // pred_check
          %p359 = pneg %p195
        $region38: #{tpu_custom_call.1} parent=11 // pred_check_branch
          %361 = sbr.rel (%p359) target = $region40
        $region39: #{tpu_custom_call.1} parent=11 // pred_region
          _
        $region40: #{tpu_custom_call.1} parent=11 // pred_fallthru
          _
        // Predicated region
        $region41: #{tpu_custom_call.1} parent=11 // pred_check
          %p362 = pneg %p216
        $region42: #{tpu_custom_call.1} parent=11 // pred_check_branch
          %364 = sbr.rel (%p362) target = $region44
        $region43: #{tpu_custom_call.1} parent=11 // pred_region
          _
        $region44: #{tpu_custom_call.1} parent=11 // pred_fallthru
          _
        // Predicated region
        $region45: #{tpu_custom_call.1} parent=11 // pred_check
          %p365 = pneg %p237
        $region46: #{tpu_custom_call.1} parent=11 // pred_check_branch
          %367 = sbr.rel (%p365) target = $region48
        $region47: #{tpu_custom_call.1} parent=11 // pred_region
          _
        $region48: #{tpu_custom_call.1} parent=11 // pred_fallthru
          _
        // Predicated region
        $region49: #{tpu_custom_call.1} parent=11 // pred_check
          %p368 = pneg %p258
        $region50: #{tpu_custom_call.1} parent=11 // pred_check_branch
          %370 = sbr.rel (%p368) target = $region52
        $region51: #{tpu_custom_call.1} parent=11 // pred_region
          _
        $region52: #{tpu_custom_call.1} parent=11 // pred_fallthru
          _
        // Predicated region
        $region53: #{tpu_custom_call.1} parent=11 // pred_check
          %p371 = pneg %p279
        $region54: #{tpu_custom_call.1} parent=11 // pred_check_branch
          %373 = sbr.rel (%p371) target = $region56
        $region55: #{tpu_custom_call.1} parent=11 // pred_region
          _
        $region56: #{tpu_custom_call.1} parent=11 // pred_fallthru
          _
        // Predicated region
        $region57: #{tpu_custom_call.1} parent=11 // pred_check
          %p374 = pneg %p300
        $region58: #{tpu_custom_call.1} parent=11 // pred_check_branch
          %376 = sbr.rel (%p374) target = $region60
        $region59: #{tpu_custom_call.1} parent=11 // pred_region
          _
        $region60: #{tpu_custom_call.1} parent=11 // pred_fallthru
          _
      $region12: #{tpu_custom_call.1} parent=5 // pred_fallthru
        _
      %p377 = scmp.lt.s32.totalorder %s22, 2
      // Predicated region
      $region61: #{tpu_custom_call.1} parent=5 // pred_check
        %p378 = pneg %p377
      $region62: #{tpu_custom_call.1} parent=5 // pred_check_branch
        %380 = sbr.rel (%p378) target = $region64
      $region63: #{tpu_custom_call.1} parent=5 // pred_region
        // Predicated region
        $region65: #{tpu_custom_call.1} parent=63 // pred_check
          %p381 = pneg %p42
        $region66: #{tpu_custom_call.1} parent=63 // pred_check_branch
          %383 = sbr.rel (%p381) target = $region68
        $region67: #{tpu_custom_call.1} parent=63 // pred_region
          %p384 = scmp.lt.s32.totalorder %s22, 1
          %s385 = scalar_select %p384, %s22, 1
          %s386 = smul.addr %s385, 8
          %s387 = scalar_lea.vmem %s0, %s386
        $region68: #{tpu_custom_call.1} parent=63 // pred_fallthru
          _
      $region64: #{tpu_custom_call.1} parent=5 // pred_fallthru
        _
      %p388 = scmp.le.s32.totalorder 1, %s22
      %p389 = scmp.lt.s32.totalorder %s22, 3
      %p390 = pnand %p388, %p389
      %p391 = pneg %p390
      // Predicated region
      $region69: #{tpu_custom_call.1} parent=5 // pred_check
        _
      $region70: #{tpu_custom_call.1} parent=5 // pred_check_branch
        %393 = sbr.rel (%p390) target = $region72
      $region71: #{tpu_custom_call.1} parent=5 // pred_region
        %s394 = ssub.s32 %s22, 1
        %p395 = scmp.lt.s32.totalorder %s27, 1
        %s396 = scalar_select %p395, %s27, 1
        %s397 = smul.addr %s396, 8
        %s398 = scalar_lea.vmem %s0, %s397
        %p399 = pneg %p48
        %p400 = pneg %p45
        %p401 = pneg %p69
        %p402 = pneg %p66
        %p403 = pneg %p90
        %p404 = pneg %p87
        %p405 = pneg %p111
        %p406 = pneg %p108
        %p407 = pneg %p132
        %p408 = pneg %p129
        %p409 = pneg %p153
        %p410 = pneg %p150
        %p411 = pneg %p174
        %p412 = pneg %p171
        %p413 = pneg %p195
        %p414 = pneg %p192
        %p415 = pneg %p216
        %p416 = pneg %p213
        %p417 = pneg %p237
        %p418 = pneg %p234
        %p419 = pneg %p258
        %p420 = pneg %p255
        %p421 = pneg %p279
        %p422 = pneg %p276
        %p423 = pneg %p300
        %p424 = pneg %p297
        %p425 = pneg %p326
        %p426 = pneg %p323
        %s427 = sand.u32 %s313, 1
        %s428 = scalar_lea.sflag [#allocation3], %s427
        %s429 = sand.u32 %s313, 1
        %s430 = smul.addr %s429, 8
        %s431 = scalar_lea.vmem [#allocation2], %s430
        %p432 = scmp.lt.s32.totalorder %s27, 1
        %s433 = scalar_select %p432, %s27, 1
        %s434 = smul.addr %s433, 8
        %s435 = scalar_lea.vmem %s0, %s434
        %v437 = vld [vmem:[%s435] sm:$0xff]
        %v438 = vld [vmem:[%s1] sm:$0x1]
        %v439 = vld [vmem:[%s2] sm:$0x1]
        %vm440 = vcmask 261120
        %v441 = vsel %vm440, %v437, 0.0
        %442 = vadd.xlane.f32.xlu0 %v441
        %v443 = vpop.xlane.xlu0 %442
        %v444 = vrcp.pop 32.0
        %v445 = vmul.f32 32.0, %v444
        %v446 = vsub.f32 1.0, %v445
        %v447 = vmul.f32 %v444, %v446
        %v448 = vadd.f32 %v444, %v447
        %vm449 = vweird.f32 %v444
        %v450 = vsel %vm449, %v444, %v448
        %v451 = vmul.f32 %v443, %v450
        %v452 = vsub.f32 %v437, %v451
        %v453 = vmul.f32 %v452, %v452
        %v454 = vsel %vm440, %v453, 0.0
        %455 = vadd.xlane.f32.xlu0 %v454
        %v456 = vpop.xlane.xlu0 %455
        %v457 = vmul.f32 %v456, %v450
        %v458 = vadd.f32 %v457, 1e-05
        %v459 = vrsqrt.pop %v458
        %v460 = vmul.f32 %v459, %v458
        %v461 = vmul.f32 %v460, %v459
        %v462 = vmul.f32 0.5, %v461
        %v463 = vsub.f32 1.5, %v462
        %v464 = vmul.f32 %v459, %v463
        %vm465 = vweird.f32 %v458
        %vm466 = vweird.f32 %v459
        %vm467 = vmor %vm465, %vm466
        %v468 = vsel %vm467, %v459, %v464
        %v469 = vmul.f32 %v452, %v468
        %v471 = vperm.slane %v438, 0
        %v473 = vmul.f32 %v469, %v471
        %v475 = vperm.slane %v439, 0
        %v477 = vadd.f32 %v473, %v475
        %v478 = vpack.c.bf16 %v477, %v477
        %v479 = vld [vmem:[%s3] sm:$0xf]
        %v480 = vld [vmem:[%s3 + $0x4] sm:$0xf]
        %v481 = vld [vmem:[%s3 + $0x8] sm:$0xf]
        %v482 = vld [vmem:[%s3 + $0xc] sm:$0xf]
        %v483 = vld [vmem:[%s4] sm:$0x1]
        %v485 = vperm.slane %v483, 0
        %v491 = vunpack.c.l.b16 %v479
        %v492 = vunpack.c.l.b16 %v480
        %v493 = vunpack.c.l.b16 %v481
        %v494 = vunpack.c.l.b16 %v482
        %v495 = vpack.c.b16 %v492, %v491
        %v496 = vpack.c.b16 %v494, %v493
        %v500 = vsel %vm440, %v478, 0
        %502 = vmatpush.bf16.msra.mxu0 0
        %503 = vmatpush.bf16.msra.mxu0 0
        %504 = vmatpush.bf16.msra.mxu0 0
        %505 = vmatpush.bf16.msra.mxu0 0
        %506 = vmatpush.bf16.msra.mxu0 0
        %507 = vmatpush.bf16.msra.mxu0 0
        %508 = vmatpush.bf16.msra.mxu0 %v496
        %509 = vmatpush.bf16.msra.mxu0 %v495
        %510 = vmatmul.bf16.gmra.mxu0 %v500
        %v511 = vpop.f32.mrf.mxu0
        %v512 = vadd.f32 %v485, %v511
        %v513 = vpop.f32.mrf.mxu0
        %514 = vdwg.mxu0
        %516 = vrot.lane.b32.xlu0 %v512, 120
        %v517 = vpop.permute.xlu0 %516
        %519 = vrot.lane.b32.xlu0 %v512, 112
        %v520 = vpop.permute.xlu0 %519
        %522 = vrot.lane.b32.xlu0 %v512, 104
        %v523 = vpop.permute.xlu0 %522
        %525 = vrot.lane.b32.xlu0 %v512, 96
        %v526 = vpop.permute.xlu0 %525
        %528 = vrot.lane.b32.xlu0 %v512, 88
        %v529 = vpop.permute.xlu0 %528
        %531 = vrot.lane.b32.xlu0 %v512, 80
        %v532 = vpop.permute.xlu0 %531
        %534 = vrot.lane.b32.xlu0 %v512, 72
        %v535 = vpop.permute.xlu0 %534
        %537 = vrot.lane.b32.xlu0 %v512, 64
        %v538 = vpop.permute.xlu0 %537
        %540 = vrot.lane.b32.xlu0 %v512, 56
        %v541 = vpop.permute.xlu0 %540
        %543 = vrot.lane.b32.xlu0 %v512, 48
        %v544 = vpop.permute.xlu0 %543
        %546 = vrot.lane.b32.xlu0 %v512, 40
        %v547 = vpop.permute.xlu0 %546
        %v549 = vrot.slane %v520, 4
        %vm550 = vcmask 1047556
        %v551 = vsel %vm550, %v549, %v512
        %v552 = vrot.slane %v512, 4
        %v553 = vsel %vm550, %v520, %v552
        %v555 = vunpack.c.l.s4 1983009808
        %v556 = vunpack.c.0.s8 %v555
        %v557 = vperm.slane %v551, %v556
        %v559 = vunpack.c.l.s4 1983009808
        %v560 = vunpack.c.0.s8 %v559
        %v561 = vperm.slane %v553, %v560
        %v562 = vrot.slane %v523, 4
        %v563 = vsel %vm550, %v562, %v517
        %v564 = vrot.slane %v517, 4
        %v565 = vsel %vm550, %v523, %v564
        %v567 = vunpack.c.l.s4 1983009808
        %v568 = vunpack.c.0.s8 %v567
        %v569 = vperm.slane %v563, %v568
        %v571 = vunpack.c.l.s4 1983009808
        %v572 = vunpack.c.0.s8 %v571
        %v573 = vperm.slane %v565, %v572
        %v574 = vrot.slane %v532, 4
        %v575 = vsel %vm550, %v574, %v526
        %v576 = vrot.slane %v526, 4
        %v577 = vsel %vm550, %v532, %v576
        %v579 = vunpack.c.l.s4 1983009808
        %v580 = vunpack.c.0.s8 %v579
        %v581 = vperm.slane %v575, %v580
        %v583 = vunpack.c.l.s4 1983009808
        %v584 = vunpack.c.0.s8 %v583
        %v585 = vperm.slane %v577, %v584
        %v586 = vrot.slane %v535, 4
        %v587 = vsel %vm550, %v586, %v529
        %v588 = vrot.slane %v529, 4
        %v589 = vsel %vm550, %v535, %v588
        %v591 = vunpack.c.l.s4 1983009808
        %v592 = vunpack.c.0.s8 %v591
        %v593 = vperm.slane %v587, %v592
        %v595 = vunpack.c.l.s4 1983009808
        %v596 = vunpack.c.0.s8 %v595
        %v597 = vperm.slane %v589, %v596
        %v598 = vrot.slane %v569, 4
        %v599 = vsel %vm550, %v598, %v557
        %v600 = vrot.slane %v557, 4
        %v601 = vsel %vm550, %v569, %v600
        %v603 = vunpack.c.l.s4 1934713408
        %v604 = vunpack.c.0.s8 %v603
        %v605 = vperm.slane %v599, %v604
        %v607 = vunpack.c.l.s4 1934713408
        %v608 = vunpack.c.0.s8 %v607
        %v609 = vperm.slane %v601, %v608
        %v610 = vrot.slane %v573, 4
        %v611 = vsel %vm550, %v610, %v561
        %v612 = vrot.slane %v561, 4
        %v613 = vsel %vm550, %v573, %v612
        %v615 = vunpack.c.l.s4 1934713408
        %v616 = vunpack.c.0.s8 %v615
        %v617 = vperm.slane %v611, %v616
        %v619 = vunpack.c.l.s4 1934713408
        %v620 = vunpack.c.0.s8 %v619
        %v621 = vperm.slane %v613, %v620
        %v622 = vrot.slane %v593, 4
        %v623 = vsel %vm550, %v622, %v581
        %v624 = vrot.slane %v581, 4
        %v625 = vsel %vm550, %v593, %v624
        %v627 = vunpack.c.l.s4 1934713408
        %v628 = vunpack.c.0.s8 %v627
        %v629 = vperm.slane %v623, %v628
        %v631 = vunpack.c.l.s4 1934713408
        %v632 = vunpack.c.0.s8 %v631
        %v633 = vperm.slane %v625, %v632
        %v634 = vrot.slane %v597, 4
        %v635 = vsel %vm550, %v634, %v585
        %v636 = vrot.slane %v585, 4
        %v637 = vsel %vm550, %v597, %v636
        %v639 = vunpack.c.l.s4 1934713408
        %v640 = vunpack.c.0.s8 %v639
        %v641 = vperm.slane %v635, %v640
        %v643 = vunpack.c.l.s4 1934713408
        %v644 = vunpack.c.0.s8 %v643
        %v645 = vperm.slane %v637, %v644
        %v646 = vrot.slane %v629, 4
        %v647 = vsel %vm550, %v646, %v605
        %v648 = vrot.slane %v605, 4
        %v649 = vsel %vm550, %v629, %v648
        %v650 = vrot.slane %v633, 4
        %v651 = vsel %vm550, %v650, %v609
        %v652 = vrot.slane %v609, 4
        %v653 = vsel %vm550, %v633, %v652
        %v654 = vrot.slane %v641, 4
        %v655 = vsel %vm550, %v654, %v617
        %v656 = vrot.slane %v617, 4
        %v657 = vsel %vm550, %v641, %v656
        %v658 = vrot.slane %v645, 4
        %v659 = vsel %vm550, %v658, %v621
        %v660 = vrot.slane %v621, 4
        %v661 = vsel %vm550, %v645, %v660
        %v662 = vrot.slane %v544, 4
        %v663 = vsel %vm550, %v662, %v538
        %v664 = vrot.slane %v538, 4
        %v665 = vsel %vm550, %v544, %v664
        %v667 = vunpack.c.l.s4 1983009808
        %v668 = vunpack.c.0.s8 %v667
        %v669 = vperm.slane %v663, %v668
        %v671 = vunpack.c.l.s4 1983009808
        %v672 = vunpack.c.0.s8 %v671
        %v673 = vperm.slane %v665, %v672
        %v674 = vrot.slane %v547, 4
        %v675 = vsel %vm550, %v674, %v541
        %v676 = vrot.slane %v541, 4
        %v677 = vsel %vm550, %v547, %v676
        %v679 = vunpack.c.l.s4 1983009808
        %v680 = vunpack.c.0.s8 %v679
        %v681 = vperm.slane %v675, %v680
        %v683 = vunpack.c.l.s4 1983009808
        %v684 = vunpack.c.0.s8 %v683
        %v685 = vperm.slane %v677, %v684
        %v686 = vrot.slane %v681, 4
        %v687 = vsel %vm550, %v686, %v669
        %v688 = vrot.slane %v669, 4
        %v689 = vsel %vm550, %v681, %v688
        %v691 = vunpack.c.l.s4 1934713408
        %v692 = vunpack.c.0.s8 %v691
        %v693 = vperm.slane %v687, %v692
        %v695 = vunpack.c.l.s4 1934713408
        %v696 = vunpack.c.0.s8 %v695
        %v697 = vperm.slane %v689, %v696
        %v698 = vrot.slane %v685, 4
        %v699 = vsel %vm550, %v698, %v673
        %v700 = vrot.slane %v673, 4
        %v701 = vsel %vm550, %v685, %v700
        %v703 = vunpack.c.l.s4 1934713408
        %v704 = vunpack.c.0.s8 %v703
        %v705 = vperm.slane %v699, %v704
        %v707 = vunpack.c.l.s4 1934713408
        %v708 = vunpack.c.0.s8 %v707
        %v709 = vperm.slane %v701, %v708
        %v710 = vrot.slane %v693, 4
        %v711 = vsel %vm550, 0.0, %v710
        %v712 = vrot.slane %v697, 4
        %v713 = vsel %vm550, 0.0, %v712
        %v714 = vrot.slane %v705, 4
        %v715 = vsel %vm550, 0.0, %v714
        %v716 = vrot.slane %v709, 4
        %v717 = vsel %vm550, 0.0, %v716
        %v718 = vrot.slane %v651, 4
        %v719 = vsel %vm550, %v718, %v647
        %v720 = vrot.slane %v647, 4
        %v721 = vsel %vm550, %v651, %v720
        %v723 = vunpack.c.l.s4 1983009808
        %v724 = vunpack.c.0.s8 %v723
        %v725 = vperm.slane %v719, %v724
        %v727 = vunpack.c.l.s4 1983009808
        %v728 = vunpack.c.0.s8 %v727
        %v729 = vperm.slane %v721, %v728
        %v730 = vrot.slane %v653, 4
        %v731 = vsel %vm550, %v730, %v649
        %v732 = vrot.slane %v649, 4
        %v733 = vsel %vm550, %v653, %v732
        %v735 = vunpack.c.l.s4 1983009808
        %v736 = vunpack.c.0.s8 %v735
        %v737 = vperm.slane %v731, %v736
        %v739 = vunpack.c.l.s4 1983009808
        %v740 = vunpack.c.0.s8 %v739
        %v741 = vperm.slane %v733, %v740
        %v742 = vrot.slane %v659, 4
        %v743 = vsel %vm550, %v742, %v655
        %v744 = vrot.slane %v655, 4
        %v745 = vsel %vm550, %v659, %v744
        %v747 = vunpack.c.l.s4 1983009808
        %v748 = vunpack.c.0.s8 %v747
        %v749 = vperm.slane %v743, %v748
        %v751 = vunpack.c.l.s4 1983009808
        %v752 = vunpack.c.0.s8 %v751
        %v753 = vperm.slane %v745, %v752
        %v754 = vrot.slane %v661, 4
        %v755 = vsel %vm550, %v754, %v657
        %v756 = vrot.slane %v657, 4
        %v757 = vsel %vm550, %v661, %v756
        %v759 = vunpack.c.l.s4 1983009808
        %v760 = vunpack.c.0.s8 %v759
        %v761 = vperm.slane %v755, %v760
        %v763 = vunpack.c.l.s4 1983009808
        %v764 = vunpack.c.0.s8 %v763
        %v765 = vperm.slane %v757, %v764
        %v766 = vrot.slane %v737, 4
        %v767 = vsel %vm550, %v766, %v725
        %v768 = vrot.slane %v725, 4
        %v769 = vsel %vm550, %v737, %v768
        %v771 = vunpack.c.l.s4 1934713408
        %v772 = vunpack.c.0.s8 %v771
        %v773 = vperm.slane %v767, %v772
        %v775 = vunpack.c.l.s4 1934713408
        %v776 = vunpack.c.0.s8 %v775
        %v777 = vperm.slane %v769, %v776
        %v778 = vrot.slane %v741, 4
        %v779 = vsel %vm550, %v778, %v729
        %v780 = vrot.slane %v729, 4
        %v781 = vsel %vm550, %v741, %v780
        %v783 = vunpack.c.l.s4 1934713408
        %v784 = vunpack.c.0.s8 %v783
        %v785 = vperm.slane %v779, %v784
        %v787 = vunpack.c.l.s4 1934713408
        %v788 = vunpack.c.0.s8 %v787
        %v789 = vperm.slane %v781, %v788
        %v790 = vrot.slane %v761, 4
        %v791 = vsel %vm550, %v790, %v749
        %v792 = vrot.slane %v749, 4
        %v793 = vsel %vm550, %v761, %v792
        %v795 = vunpack.c.l.s4 1934713408
        %v796 = vunpack.c.0.s8 %v795
        %v797 = vperm.slane %v791, %v796
        %v799 = vunpack.c.l.s4 1934713408
        %v800 = vunpack.c.0.s8 %v799
        %v801 = vperm.slane %v793, %v800
        %v802 = vrot.slane %v765, 4
        %v803 = vsel %vm550, %v802, %v753
        %v804 = vrot.slane %v753, 4
        %v805 = vsel %vm550, %v765, %v804
        %v807 = vunpack.c.l.s4 1934713408
        %v808 = vunpack.c.0.s8 %v807
        %v809 = vperm.slane %v803, %v808
        %v811 = vunpack.c.l.s4 1934713408
        %v812 = vunpack.c.0.s8 %v811
        %v813 = vperm.slane %v805, %v812
        %v814 = vrot.slane %v797, 4
        %v815 = vsel %vm550, %v814, %v773
        %v816 = vrot.slane %v773, 4
        %v817 = vsel %vm550, %v797, %v816
        %v818 = vrot.slane %v801, 4
        %v819 = vsel %vm550, %v818, %v777
        %v820 = vrot.slane %v777, 4
        %v821 = vsel %vm550, %v801, %v820
        %v822 = vrot.slane %v809, 4
        %v823 = vsel %vm550, %v822, %v785
        %v824 = vrot.slane %v785, 4
        %v825 = vsel %vm550, %v809, %v824
        %v826 = vrot.slane %v813, 4
        %v827 = vsel %vm550, %v826, %v789
        %v828 = vrot.slane %v789, 4
        %v829 = vsel %vm550, %v813, %v828
        %v830 = vsel %vm550, %v712, %v693
        %v832 = vunpack.c.l.s4 1983009808
        %v833 = vunpack.c.0.s8 %v832
        %v834 = vperm.slane %v830, %v833
        %v835 = vrot.slane %v713, 4
        %v836 = vsel %vm550, %v835, %v711
        %v838 = vunpack.c.l.s4 1983009808
        %v839 = vunpack.c.0.s8 %v838
        %v840 = vperm.slane %v836, %v839
        %v841 = vsel %vm550, %v716, %v705
        %v843 = vunpack.c.l.s4 1983009808
        %v844 = vunpack.c.0.s8 %v843
        %v845 = vperm.slane %v841, %v844
        %v846 = vrot.slane %v717, 4
        %v847 = vsel %vm550, %v846, %v715
        %v849 = vunpack.c.l.s4 1983009808
        %v850 = vunpack.c.0.s8 %v849
        %v851 = vperm.slane %v847, %v850
        %v852 = vrot.slane %v840, 4
        %v853 = vsel %vm550, %v852, %v834
        %v854 = vrot.slane %v834, 4
        %v855 = vsel %vm550, %v840, %v854
        %v857 = vunpack.c.l.s4 1934713408
        %v858 = vunpack.c.0.s8 %v857
        %v859 = vperm.slane %v853, %v858
        %v861 = vunpack.c.l.s4 1934713408
        %v862 = vunpack.c.0.s8 %v861
        %v863 = vperm.slane %v855, %v862
        %v864 = vrot.slane %v851, 4
        %v865 = vsel %vm550, %v864, %v845
        %v866 = vrot.slane %v845, 4
        %v867 = vsel %vm550, %v851, %v866
        %v869 = vunpack.c.l.s4 1934713408
        %v870 = vunpack.c.0.s8 %v869
        %v871 = vperm.slane %v865, %v870
        %v873 = vunpack.c.l.s4 1934713408
        %v874 = vunpack.c.0.s8 %v873
        %v875 = vperm.slane %v867, %v874
        %v876 = vrot.slane %v871, 4
        %v877 = vsel %vm550, %v876, %v859
        %v878 = vrot.slane %v859, 4
        %v879 = vsel %vm550, %v871, %v878
        %v880 = vrot.slane %v875, 4
        %v881 = vsel %vm550, %v880, %v863
        %v882 = vrot.slane %v863, 4
        %v883 = vsel %vm550, %v875, %v882
        %v884 = vpack.c.bf16 %v815, %v815
        %v885 = vpack.c.bf16 %v817, %v817
        %v886 = vpack.c.bf16 %v819, %v819
        %v887 = vpack.c.bf16 %v821, %v821
        %v888 = vpack.c.bf16 %v823, %v823
        %v889 = vpack.c.bf16 %v825, %v825
        %v890 = vpack.c.bf16 %v827, %v827
        %v891 = vpack.c.bf16 %v829, %v829
        %v892 = vpack.c.bf16 %v877, %v877
        %v893 = vpack.c.bf16 %v879, %v879
        %v894 = vpack.c.bf16 %v881, %v881
        %v895 = vpack.c.bf16 %v883, %v883
        %v896 = vlaneseq
        %v897 = vshrl.u32 %v896, 7
        %v898 = vlaneseq
        %v899 = vand.u32 %v898, 127
        %vm900 = vcmask 64512
        %v902 = vsel %vm900, %v884, 0
        %v905 = vsel %vm900, %v888, 0
        %907 = vmatpush.bf16.xpose.msra.mxu0 0
        %908 = vmatpush.bf16.xpose.msra.mxu0 0
        %909 = vmatpush.bf16.xpose.msra.mxu0 0
        %910 = vmatpush.bf16.xpose.msra.mxu0 0
        %911 = vmatpush.bf16.xpose.msra.mxu0 0
        %912 = vmatpush.bf16.xpose.msra.mxu0 0
        %913 = vmatpush.bf16.xpose.msra.mxu0 0
        %914 = vmatpush.bf16.xpose.msra.mxu0 %v905
        %915 = vmatmul.bf16.gmra.mxu0 %v902
        %v916 = vpop.f32.mrf.mxu0
        %v917 = vadd.f32 0.0, %v916
        %v918 = vpop.f32.mrf.mxu0
        %919 = vdwg.mxu0
        %v921 = vsel %vm900, %v885, 0
        %v924 = vsel %vm900, %v889, 0
        %926 = vmatpush.bf16.xpose.msra.mxu0 0
        %927 = vmatpush.bf16.xpose.msra.mxu0 0
        %928 = vmatpush.bf16.xpose.msra.mxu0 0
        %929 = vmatpush.bf16.xpose.msra.mxu0 0
        %930 = vmatpush.bf16.xpose.msra.mxu0 0
        %931 = vmatpush.bf16.xpose.msra.mxu0 0
        %932 = vmatpush.bf16.xpose.msra.mxu0 0
        %933 = vmatpush.bf16.xpose.msra.mxu0 %v924
        %934 = vmatmul.bf16.gmra.mxu0 %v921
        %v935 = vpop.f32.mrf.mxu0
        %v936 = vadd.f32 0.0, %v935
        %v937 = vpop.f32.mrf.mxu0
        %938 = vdwg.mxu0
        %v940 = vsel %vm900, %v886, 0
        %v943 = vsel %vm900, %v890, 0
        %945 = vmatpush.bf16.xpose.msra.mxu0 0
        %946 = vmatpush.bf16.xpose.msra.mxu0 0
        %947 = vmatpush.bf16.xpose.msra.mxu0 0
        %948 = vmatpush.bf16.xpose.msra.mxu0 0
        %949 = vmatpush.bf16.xpose.msra.mxu0 0
        %950 = vmatpush.bf16.xpose.msra.mxu0 0
        %951 = vmatpush.bf16.xpose.msra.mxu0 0
        %952 = vmatpush.bf16.xpose.msra.mxu0 %v943
        %953 = vmatmul.bf16.gmra.mxu0 %v940
        %v954 = vpop.f32.mrf.mxu0
        %v955 = vadd.f32 0.0, %v954
        %v956 = vpop.f32.mrf.mxu0
        %957 = vdwg.mxu0
        %v959 = vsel %vm900, %v887, 0
        %v962 = vsel %vm900, %v891, 0
        %964 = vmatpush.bf16.xpose.msra.mxu0 0
        %965 = vmatpush.bf16.xpose.msra.mxu0 0
        %966 = vmatpush.bf16.xpose.msra.mxu0 0
        %967 = vmatpush.bf16.xpose.msra.mxu0 0
        %968 = vmatpush.bf16.xpose.msra.mxu0 0
        %969 = vmatpush.bf16.xpose.msra.mxu0 0
        %970 = vmatpush.bf16.xpose.msra.mxu0 0
        %971 = vmatpush.bf16.xpose.msra.mxu0 %v962
        %972 = vmatmul.bf16.gmra.mxu0 %v959
        %v973 = vpop.f32.mrf.mxu0
        %v974 = vadd.f32 0.0, %v973
        %v975 = vpop.f32.mrf.mxu0
        %976 = vdwg.mxu0
        %v977 = vmul.f32 %v917, 0.35355338
        %v978 = vmul.f32 %v936, 0.35355338
        %v979 = vmul.f32 %v955, 0.35355338
        %v980 = vmul.f32 %v974, 0.35355338
        %vm981 = vcmp.le.s32.totalorder %v899, %v897
        %v982 = vsel %vm981, 1, 0
        %vm983 = vcmp.eq.s32.totalorder %v982, 1
        %v984 = vsel %vm983, %v977, -1e+30
        %v985 = vsel %vm983, %v978, -1e+30
        %v986 = vsel %vm983, %v979, -1e+30
        %v987 = vsel %vm983, %v980, -1e+30
        %v988 = vsel %vm900, %v984, -inf
        %989 = vmax.xlane.f32.xlu0 %v988
        %v990 = vpop.xlane.xlu0 %989
        %v991 = vsel %vm900, %v985, -inf
        %992 = vmax.xlane.f32.xlu0 %v991
        %v993 = vpop.xlane.xlu0 %992
        %v994 = vsel %vm900, %v986, -inf
        %995 = vmax.xlane.f32.xlu0 %v994
        %v996 = vpop.xlane.xlu0 %995
        %v997 = vsel %vm900, %v987, -inf
        %998 = vmax.xlane.f32.xlu0 %v997
        %v999 = vpop.xlane.xlu0 %998
        %v1000 = vmax.f32 %v990, -1e+30
        %v1001 = vmax.f32 %v993, -1e+30
        %v1002 = vmax.f32 %v996, -1e+30
        %v1003 = vmax.f32 %v999, -1e+30
        %v1004 = vsub.f32 -1e+30, %v1000
        %v1005 = vsub.f32 -1e+30, %v1001
        %v1006 = vsub.f32 -1e+30, %v1002
        %v1007 = vsub.f32 -1e+30, %v1003
        %v1008 = vmul.f32 %v1004, 1.442695
        %v1009 = vpow.pop %v1008
        %v1010 = vmul.f32 %v1005, 1.442695
        %v1011 = vpow.pop %v1010
        %v1012 = vmul.f32 %v1006, 1.442695
        %v1013 = vpow.pop %v1012
        %v1014 = vmul.f32 %v1007, 1.442695
        %v1015 = vpow.pop %v1014
        %v1016 = vsub.f32 %v984, %v1000
        %v1017 = vsub.f32 %v985, %v1001
        %v1018 = vsub.f32 %v986, %v1002
        %v1019 = vsub.f32 %v987, %v1003
        %v1020 = vmul.f32 %v1016, 1.442695
        %v1021 = vpow.pop %v1020
        %v1022 = vmul.f32 %v1017, 1.442695
        %v1023 = vpow.pop %v1022
        %v1024 = vmul.f32 %v1018, 1.442695
        %v1025 = vpow.pop %v1024
        %v1026 = vmul.f32 %v1019, 1.442695
        %v1027 = vpow.pop %v1026
        %v1028 = vmul.f32 %v1009, 0.0
        %v1029 = vmul.f32 %v1011, 0.0
        %v1030 = vmul.f32 %v1013, 0.0
        %v1031 = vmul.f32 %v1015, 0.0
        %v1032 = vsel %vm900, %v1021, 0.0
        %1033 = vadd.xlane.f32.xlu0 %v1032
        %v1034 = vpop.xlane.xlu0 %1033
        %v1035 = vsel %vm900, %v1023, 0.0
        %1036 = vadd.xlane.f32.xlu0 %v1035
        %v1037 = vpop.xlane.xlu0 %1036
        %v1038 = vsel %vm900, %v1025, 0.0
        %1039 = vadd.xlane.f32.xlu0 %v1038
        %v1040 = vpop.xlane.xlu0 %1039
        %v1041 = vsel %vm900, %v1027, 0.0
        %1042 = vadd.xlane.f32.xlu0 %v1041
        %v1043 = vpop.xlane.xlu0 %1042
        %v1044 = vadd.f32 %v1028, %v1034
        %v1045 = vadd.f32 %v1029, %v1037
        %v1046 = vadd.f32 %v1030, %v1040
        %v1047 = vadd.f32 %v1031, %v1043
        %v1048 = vpack.c.bf16 %v1021, %v1021
        %v1049 = vpack.c.bf16 %v1023, %v1023
        %v1050 = vpack.c.bf16 %v1025, %v1025
        %v1051 = vpack.c.bf16 %v1027, %v1027
        %v1053 = vsel %vm900, %v1048, 0
        %vm1055 = vcmask 1043456
        %v1057 = vsel %vm1055, %v892, 0
        %1059 = vmatpush.bf16.msra.mxu0 0
        %1060 = vmatpush.bf16.msra.mxu0 0
        %1061 = vmatpush.bf16.msra.mxu0 0
        %1062 = vmatpush.bf16.msra.mxu0 0
        %1063 = vmatpush.bf16.msra.mxu0 0
        %1064 = vmatpush.bf16.msra.mxu0 0
        %1065 = vmatpush.bf16.msra.mxu0 0
        %1066 = vmatpush.bf16.msra.mxu0 %v1057
        %1067 = vmatmul.bf16.gmra.mxu0 %v1053
        %v1068 = vpop.f32.mrf.mxu0
        %v1069 = vadd.f32 0.0, %v1068
        %v1070 = vpop.f32.mrf.mxu0
        %1071 = vdwg.mxu0
        %v1073 = vsel %vm900, %v1049, 0
        %v1076 = vsel %vm1055, %v893, 0
        %1078 = vmatpush.bf16.msra.mxu0 0
        %1079 = vmatpush.bf16.msra.mxu0 0
        %1080 = vmatpush.bf16.msra.mxu0 0
        %1081 = vmatpush.bf16.msra.mxu0 0
        %1082 = vmatpush.bf16.msra.mxu0 0
        %1083 = vmatpush.bf16.msra.mxu0 0
        %1084 = vmatpush.bf16.msra.mxu0 0
        %1085 = vmatpush.bf16.msra.mxu0 %v1076
        %1086 = vmatmul.bf16.gmra.mxu0 %v1073
        %v1087 = vpop.f32.mrf.mxu0
        %v1088 = vadd.f32 0.0, %v1087
        %v1089 = vpop.f32.mrf.mxu0
        %1090 = vdwg.mxu0
        %v1092 = vsel %vm900, %v1050, 0
        %v1095 = vsel %vm1055, %v894, 0
        %1097 = vmatpush.bf16.msra.mxu0 0
        %1098 = vmatpush.bf16.msra.mxu0 0
        %1099 = vmatpush.bf16.msra.mxu0 0
        %1100 = vmatpush.bf16.msra.mxu0 0
        %1101 = vmatpush.bf16.msra.mxu0 0
        %1102 = vmatpush.bf16.msra.mxu0 0
        %1103 = vmatpush.bf16.msra.mxu0 0
        %1104 = vmatpush.bf16.msra.mxu0 %v1095
        %1105 = vmatmul.bf16.gmra.mxu0 %v1092
        %v1106 = vpop.f32.mrf.mxu0
        %v1107 = vadd.f32 0.0, %v1106
        %v1108 = vpop.f32.mrf.mxu0
        %1109 = vdwg.mxu0
        %v1111 = vsel %vm900, %v1051, 0
        %v1114 = vsel %vm1055, %v895, 0
        %1116 = vmatpush.bf16.msra.mxu0 0
        %1117 = vmatpush.bf16.msra.mxu0 0
        %1118 = vmatpush.bf16.msra.mxu0 0
        %1119 = vmatpush.bf16.msra.mxu0 0
        %1120 = vmatpush.bf16.msra.mxu0 0
        %1121 = vmatpush.bf16.msra.mxu0 0
        %1122 = vmatpush.bf16.msra.mxu0 0
        %1123 = vmatpush.bf16.msra.mxu0 %v1114
        %1124 = vmatmul.bf16.gmra.mxu0 %v1111
        %v1125 = vpop.f32.mrf.mxu0
        %v1126 = vadd.f32 0.0, %v1125
        %v1127 = vpop.f32.mrf.mxu0
        %1128 = vdwg.mxu0
        %v1129 = vadd.f32 %v1028, %v1069
        %v1130 = vadd.f32 %v1029, %v1088
        %v1131 = vadd.f32 %v1030, %v1107
        %v1132 = vadd.f32 %v1031, %v1126
        %v1133 = vrcp.pop %v1044
        %v1134 = vrcp.pop %v1045
        %v1135 = vrcp.pop %v1046
        %v1136 = vrcp.pop %v1047
        %v1137 = vmul.f32 %v1129, %v1133
        %v1138 = vmul.f32 %v1130, %v1134
        %v1139 = vmul.f32 %v1131, %v1135
        %v1140 = vmul.f32 %v1132, %v1136
        %v1141 = vrot.slane %v1139, 4
        %v1142 = vsel %vm550, %v1141, %v1137
        %v1143 = vrot.slane %v1137, 4
        %v1144 = vsel %vm550, %v1139, %v1143
        %v1146 = vunpack.c.l.s4 1983009808
        %v1147 = vunpack.c.0.s8 %v1146
        %v1148 = vperm.slane %v1142, %v1147
        %v1150 = vunpack.c.l.s4 1983009808
        %v1151 = vunpack.c.0.s8 %v1150
        %v1152 = vperm.slane %v1144, %v1151
        %v1153 = vrot.slane %v1140, 4
        %v1154 = vsel %vm550, %v1153, %v1138
        %v1155 = vrot.slane %v1138, 4
        %v1156 = vsel %vm550, %v1140, %v1155
        %v1158 = vunpack.c.l.s4 1983009808
        %v1159 = vunpack.c.0.s8 %v1158
        %v1160 = vperm.slane %v1154, %v1159
        %v1162 = vunpack.c.l.s4 1983009808
        %v1163 = vunpack.c.0.s8 %v1162
        %v1164 = vperm.slane %v1156, %v1163
        %v1165 = vrot.slane %v1160, 4
        %v1166 = vsel %vm550, %v1165, %v1148
        %v1167 = vrot.slane %v1148, 4
        %v1168 = vsel %vm550, %v1160, %v1167
        %v1170 = vunpack.c.l.s4 1934713408
        %v1171 = vunpack.c.0.s8 %v1170
        %v1172 = vperm.slane %v1166, %v1171
        %v1174 = vunpack.c.l.s4 1934713408
        %v1175 = vunpack.c.0.s8 %v1174
        %v1176 = vperm.slane %v1168, %v1175
        %v1177 = vrot.slane %v1164, 4
        %v1178 = vsel %vm550, %v1177, %v1152
        %v1179 = vrot.slane %v1152, 4
        %v1180 = vsel %vm550, %v1164, %v1179
        %v1182 = vunpack.c.l.s4 1934713408
        %v1183 = vunpack.c.0.s8 %v1182
        %v1184 = vperm.slane %v1178, %v1183
        %v1186 = vunpack.c.l.s4 1934713408
        %v1187 = vunpack.c.0.s8 %v1186
        %v1188 = vperm.slane %v1180, %v1187
        %v1189 = vrot.slane %v1172, 4
        %v1190 = vsel %vm550, 0.0, %v1189
        %v1191 = vrot.slane %v1176, 4
        %v1192 = vsel %vm550, 0.0, %v1191
        %v1193 = vrot.slane %v1184, 4
        %v1194 = vsel %vm550, 0.0, %v1193
        %v1195 = vrot.slane %v1188, 4
        %v1196 = vsel %vm550, 0.0, %v1195
        %v1197 = vsel %vm550, %v1191, %v1172
        %v1199 = vunpack.c.l.s4 1983009808
        %v1200 = vunpack.c.0.s8 %v1199
        %v1201 = vperm.slane %v1197, %v1200
        %v1202 = vrot.slane %v1192, 4
        %v1203 = vsel %vm550, %v1202, %v1190
        %v1205 = vunpack.c.l.s4 1983009808
        %v1206 = vunpack.c.0.s8 %v1205
        %v1207 = vperm.slane %v1203, %v1206
        %v1208 = vsel %vm550, %v1195, %v1184
        %v1210 = vunpack.c.l.s4 1983009808
        %v1211 = vunpack.c.0.s8 %v1210
        %v1212 = vperm.slane %v1208, %v1211
        %v1213 = vrot.slane %v1196, 4
        %v1214 = vsel %vm550, %v1213, %v1194
        %v1216 = vunpack.c.l.s4 1983009808
        %v1217 = vunpack.c.0.s8 %v1216
        %v1218 = vperm.slane %v1214, %v1217
        %v1219 = vrot.slane %v1207, 4
        %v1220 = vsel %vm550, %v1219, %v1201
        %v1221 = vrot.slane %v1201, 4
        %v1222 = vsel %vm550, %v1207, %v1221
        %v1224 = vunpack.c.l.s4 1934713408
        %v1225 = vunpack.c.0.s8 %v1224
        %v1226 = vperm.slane %v1220, %v1225
        %v1228 = vunpack.c.l.s4 1934713408
        %v1229 = vunpack.c.0.s8 %v1228
        %v1230 = vperm.slane %v1222, %v1229
        %v1231 = vrot.slane %v1218, 4
        %v1232 = vsel %vm550, %v1231, %v1212
        %v1233 = vrot.slane %v1212, 4
        %v1234 = vsel %vm550, %v1218, %v1233
        %v1236 = vunpack.c.l.s4 1934713408
        %v1237 = vunpack.c.0.s8 %v1236
        %v1238 = vperm.slane %v1232, %v1237
        %v1240 = vunpack.c.l.s4 1934713408
        %v1241 = vunpack.c.0.s8 %v1240
        %v1242 = vperm.slane %v1234, %v1241
        %v1243 = vrot.slane %v1238, 4
        %v1244 = vsel %vm550, %v1243, %v1226
        %v1245 = vrot.slane %v1226, 4
        %v1246 = vsel %vm550, %v1238, %v1245
        %v1247 = vrot.slane %v1242, 4
        %v1248 = vsel %vm550, %v1247, %v1230
        %v1249 = vrot.slane %v1230, 4
        %v1250 = vsel %vm550, %v1242, %v1249
        %1252 = vrot.lane.b32.xlu0 %v1246, 8
        %v1253 = vpop.permute.xlu0 %1252
        %1256 = vrot.lane.b32.xlu0 %v1248, 16
        %v1257 = vpop.permute.xlu0 %1256
        %1260 = vrot.lane.b32.xlu0 %v1250, 24
        %v1261 = vpop.permute.xlu0 %1260
        %v1263 = vsel %vm900, %v1244, %v1253
        %vm1264 = vcmask 130048
        %v1265 = vsel %vm1264, %v1263, %v1257
        %vm1266 = vcmask 195584
        %v1267 = vsel %vm1266, %v1265, %v1261
        %v1268 = vpack.c.bf16 %v1267, %v1267
        %v1269 = vld [vmem:[%s5] sm:$0xf]
        %v1270 = vld [vmem:[%s5 + $0x4] sm:$0xf]
        %v1271 = vld [vmem:[%s5 + $0x8] sm:$0xf]
        %v1272 = vld [vmem:[%s5 + $0xc] sm:$0xf]
        %v1273 = vld [vmem:[%s6] sm:$0x1]
        %v1275 = vperm.slane %v1273, 0
        %v1281 = vunpack.c.l.b16 %v1269
        %v1282 = vunpack.c.l.b16 %v1270
        %v1283 = vunpack.c.l.b16 %v1271
        %v1284 = vunpack.c.l.b16 %v1272
        %v1285 = vpack.c.b16 %v1282, %v1281
        %v1286 = vpack.c.b16 %v1284, %v1283
        %v1290 = vsel %vm440, %v1268, 0
        %1292 = vmatpush.bf16.msra.mxu0 0
        %1293 = vmatpush.bf16.msra.mxu0 0
        %1294 = vmatpush.bf16.msra.mxu0 0
        %1295 = vmatpush.bf16.msra.mxu0 0
        %1296 = vmatpush.bf16.msra.mxu0 0
        %1297 = vmatpush.bf16.msra.mxu0 0
        %1298 = vmatpush.bf16.msra.mxu0 %v1286
        %1299 = vmatpush.bf16.msra.mxu0 %v1285
        %1300 = vmatmul.bf16.gmra.mxu0 %v1290
        %v1301 = vpop.f32.mrf.mxu0
        %v1302 = vadd.f32 %v1275, %v1301
        %v1303 = vpop.f32.mrf.mxu0
        %1304 = vdwg.mxu0
        %v1305 = vadd.f32 %v437, %v1302
        %v1306 = vld [vmem:[%s7] sm:$0x1]
        %v1307 = vld [vmem:[%s8] sm:$0x1]
        %v1308 = vsel %vm440, %v1305, 0.0
        %1309 = vadd.xlane.f32.xlu0 %v1308
        %v1310 = vpop.xlane.xlu0 %1309
        %v1311 = vmul.f32 %v1310, %v450
        %v1312 = vsub.f32 %v1305, %v1311
        %v1313 = vmul.f32 %v1312, %v1312
        %v1314 = vsel %vm440, %v1313, 0.0
        %1315 = vadd.xlane.f32.xlu0 %v1314
        %v1316 = vpop.xlane.xlu0 %1315
        %v1317 = vmul.f32 %v1316, %v450
        %v1318 = vadd.f32 %v1317, 1e-05
        %v1319 = vrsqrt.pop %v1318
        %v1320 = vmul.f32 %v1319, %v1318
        %v1321 = vmul.f32 %v1320, %v1319
        %v1322 = vmul.f32 0.5, %v1321
        %v1323 = vsub.f32 1.5, %v1322
        %v1324 = vmul.f32 %v1319, %v1323
        %vm1325 = vweird.f32 %v1318
        %vm1326 = vweird.f32 %v1319
        %vm1327 = vmor %vm1325, %vm1326
        %v1328 = vsel %vm1327, %v1319, %v1324
        %v1329 = vmul.f32 %v1312, %v1328
        %v1331 = vperm.slane %v1306, 0
        %v1333 = vmul.f32 %v1329, %v1331
        %v1335 = vperm.slane %v1307, 0
        %v1337 = vadd.f32 %v1333, %v1335
        %v1338 = vpack.c.bf16 %v1337, %v1337
        %v1339 = vld [vmem:[%s9] sm:$0xf]
        %v1340 = vld [vmem:[%s9 + $0x4] sm:$0xf]
        %v1341 = vld [vmem:[%s9 + $0x8] sm:$0xf]
        %v1342 = vld [vmem:[%s9 + $0xc] sm:$0xf]
        %v1343 = vld [vmem:[%s10] sm:$0x1]
        %v1345 = vperm.slane %v1343, 0
        %v1351 = vunpack.c.l.b16 %v1339
        %v1352 = vunpack.c.l.b16 %v1340
        %v1353 = vunpack.c.l.b16 %v1341
        %v1354 = vunpack.c.l.b16 %v1342
        %v1355 = vpack.c.b16 %v1352, %v1351
        %v1356 = vpack.c.b16 %v1354, %v1353
        %v1360 = vsel %vm440, %v1338, 0
        %1362 = vmatpush.bf16.msra.mxu0 0
        %1363 = vmatpush.bf16.msra.mxu0 0
        %1364 = vmatpush.bf16.msra.mxu0 0
        %1365 = vmatpush.bf16.msra.mxu0 0
        %1366 = vmatpush.bf16.msra.mxu0 0
        %1367 = vmatpush.bf16.msra.mxu0 0
        %1368 = vmatpush.bf16.msra.mxu0 %v1356
        %1369 = vmatpush.bf16.msra.mxu0 %v1355
        %1370 = vmatmul.bf16.gmra.mxu0 %v1360
        %v1371 = vpop.f32.mrf.mxu0
        %v1372 = vadd.f32 %v1345, %v1371
        %v1373 = vpop.f32.mrf.mxu0
        %1374 = vdwg.mxu0
        %v1375 = vmul.f32 %v1372, 0.5
        %v1376 = vmul.f32 %v1372, 0.70710677
        %v1377 = vmul.f32 %v1376, %v1376
        %v1378 = vmin.f32 16.0, %v1377
        %v1379 = vmul.f32 %v1378, 2.1237322e-06
        %v1380 = vadd.f32 %v1379, 0.00028619796
        %v1381 = vmul.f32 %v1378, %v1380
        %v1382 = vadd.f32 %v1381, 0.0036580483
        %v1383 = vmul.f32 %v1378, %v1382
        %v1384 = vadd.f32 %v1383, 0.05243302
        %v1385 = vmul.f32 %v1378, %v1384
        %v1386 = vadd.f32 %v1385, 0.18741608
        %v1387 = vmul.f32 %v1378, %v1386
        %v1388 = vadd.f32 %v1387, 1.1283791
        %v1389 = vmul.f32 %v1376, %v1388
        %v1390 = vmul.f32 %v1378, 3.8918573e-05
        %v1391 = vadd.f32 %v1390, 0.001143296
        %v1392 = vmul.f32 %v1378, %v1391
        %v1393 = vadd.f32 %v1392, 0.014752088
        %v1394 = vmul.f32 %v1378, %v1393
        %v1395 = vadd.f32 %v1394, 0.112945676
        %v1396 = vmul.f32 %v1378, %v1395
        %v1397 = vadd.f32 %v1396, 0.4994258
        %v1398 = vmul.f32 %v1378, %v1397
        %v1399 = vadd.f32 %v1398, 1.0
        %v1400 = vrcp.pop %v1399
        %v1401 = vmul.f32 %v1399, %v1400
        %v1402 = vsub.f32 1.0, %v1401
        %v1403 = vmul.f32 %v1400, %v1402
        %v1404 = vadd.f32 %v1400, %v1403
        %vm1405 = vweird.f32 %v1399
        %vm1406 = vweird.f32 %v1400
        %vm1407 = vmor %vm1405, %vm1406
        %v1408 = vsel %vm1407, %v1400, %v1404
        %v1409 = vand.u32 2147483647, %v1399
        %vm1410 = vcmp.eq.f32.partialorder %v1409, 8.507059e+37
        %v1411 = vand.u32 %v1399, 2147483648
        %v1412 = vor.u32 1.1754944e-38, %v1411
        %v1413 = vsel %vm1410, %v1412, %v1408
        %v1414 = vmul.f32 %v1389, %v1413
        %v1415 = vmin.f32 %v1414, 1.0
        %v1416 = vmax.f32 %v1415, -1.0
        %v1417 = vadd.f32 %v1416, 1.0
        %v1418 = vmul.f32 %v1375, %v1417
        %v1419 = vpack.c.bf16 %v1418, %v1418
        %v1420 = vld [vmem:[%s11] sm:$0xf]
        %v1421 = vld [vmem:[%s11 + $0x4] sm:$0xf]
        %v1422 = vld [vmem:[%s11 + $0x8] sm:$0xf]
        %v1423 = vld [vmem:[%s11 + $0xc] sm:$0xf]
        %v1424 = vld [vmem:[%s11 + $0x10] sm:$0xf]
        %v1425 = vld [vmem:[%s11 + $0x14] sm:$0xf]
        %v1426 = vld [vmem:[%s11 + $0x18] sm:$0xf]
        %v1427 = vld [vmem:[%s11 + $0x1c] sm:$0xf]
        %v1428 = vld [vmem:[%s11 + $0x20] sm:$0xf]
        %v1429 = vld [vmem:[%s11 + $0x24] sm:$0xf]
        %v1430 = vld [vmem:[%s11 + $0x28] sm:$0xf]
        %v1431 = vld [vmem:[%s11 + $0x2c] sm:$0xf]
        %v1432 = vld [vmem:[%s11 + $0x30] sm:$0xf]
        %v1433 = vld [vmem:[%s11 + $0x34] sm:$0xf]
        %v1434 = vld [vmem:[%s11 + $0x38] sm:$0xf]
        %v1435 = vld [vmem:[%s11 + $0x3c] sm:$0xf]
        %v1436 = vld [vmem:[%s12] sm:$0x1]
        %v1438 = vperm.slane %v1436, 0
        %v1456 = vunpack.c.l.b16 %v1420
        %v1457 = vunpack.c.l.b16 %v1421
        %v1458 = vunpack.c.l.b16 %v1422
        %v1459 = vunpack.c.l.b16 %v1423
        %v1460 = vunpack.c.l.b16 %v1424
        %v1461 = vunpack.c.l.b16 %v1425
        %v1462 = vunpack.c.l.b16 %v1426
        %v1463 = vunpack.c.l.b16 %v1427
        %v1464 = vunpack.c.l.b16 %v1428
        %v1465 = vunpack.c.l.b16 %v1429
        %v1466 = vunpack.c.l.b16 %v1430
        %v1467 = vunpack.c.l.b16 %v1431
        %v1468 = vunpack.c.l.b16 %v1432
        %v1469 = vunpack.c.l.b16 %v1433
        %v1470 = vunpack.c.l.b16 %v1434
        %v1471 = vunpack.c.l.b16 %v1435
        %v1472 = vpack.c.b16 %v1457, %v1456
        %v1473 = vpack.c.b16 %v1459, %v1458
        %v1474 = vpack.c.b16 %v1461, %v1460
        %v1475 = vpack.c.b16 %v1463, %v1462
        %v1476 = vpack.c.b16 %v1465, %v1464
        %v1477 = vpack.c.b16 %v1467, %v1466
        %v1478 = vpack.c.b16 %v1469, %v1468
        %v1479 = vpack.c.b16 %v1471, %v1470
        %1488 = vmatpush.bf16.msra.mxu0 %v1479
        %1489 = vmatpush.bf16.msra.mxu0 %v1478
        %1490 = vmatpush.bf16.msra.mxu0 %v1477
        %1491 = vmatpush.bf16.msra.mxu0 %v1476
        %1492 = vmatpush.bf16.msra.mxu0 %v1475
        %1493 = vmatpush.bf16.msra.mxu0 %v1474
        %1494 = vmatpush.bf16.msra.mxu0 %v1473
        %1495 = vmatpush.bf16.msra.mxu0 %v1472
        %1496 = vmatmul.bf16.gmra.mxu0 %v1419
        %v1497 = vpop.f32.mrf.mxu0
        %v1498 = vadd.f32 %v1438, %v1497
        %v1499 = vpop.f32.mrf.mxu0
        %1500 = vdwg.mxu0
        %v1501 = vadd.f32 %v1305, %v1498
        %1502 = vst.msk [vmem:[%s431] sm:$0xff] %vm440, %v1501
        %s1503 = sand.u32 %s313, 1
        %s1504 = scalar_lea.sflag [#allocation3], %s1503
        %s1505 = sand.u32 %s313, 1
        %s1506 = smul.addr %s1505, 8
        %s1507 = scalar_lea.vmem [#allocation2], %s1506
        // Predicated region
        $region73: #{tpu_custom_call.1} parent=71 // pred_check
          %p1508 = pneg %p323
        $region74: #{tpu_custom_call.1} parent=71 // pred_check_branch
          %1510 = sbr.rel (%p1508) target = $region76
        $region75: #{tpu_custom_call.1} parent=71 // pred_region
          %1512 = vsyncadd %s1504, 0
          %s1513 = smul.addr %s27, 8
          %s1514 = scalar_lea.hbm %s13, %s1513
          %s1516 = sshll.u32 %s1507, 4
          %s1517 = int_to_ptr.vmem [resolvable:$true] %s1516
          %s1518 = sshll.u32 %s1514, 4
          %s1519 = int_to_ptr.hbm [resolvable:$true] %s1518
          %1521 = dma.vmem_to_hbm [thread:$0]  %s1517, 128, %s1519, %s1504
        $region76: #{tpu_custom_call.1} parent=71 // pred_fallthru
          _
      $region72: #{tpu_custom_call.1} parent=5 // pred_fallthru
        _
      %p1522 = scmp.le.s32.totalorder 2, %s22
      // Predicated region
      $region77: #{tpu_custom_call.1} parent=5 // pred_check
        %p1523 = pneg %p1522
      $region78: #{tpu_custom_call.1} parent=5 // pred_check_branch
        %1525 = sbr.rel (%p1523) target = $region80
      $region79: #{tpu_custom_call.1} parent=5 // pred_region
        %s1526 = ssub.s32 %s22, 2
        // Predicated region
        $region81: #{tpu_custom_call.1} parent=79 // pred_check
          %p1527 = pneg %p329
        $region82: #{tpu_custom_call.1} parent=79 // pred_check_branch
          %1529 = sbr.rel (%p1527) target = $region84
        $region83: #{tpu_custom_call.1} parent=79 // pred_region
          %s1530 = sand.u32 %s314, 1
          %s1531 = scalar_lea.sflag [#allocation3], %s1530
          %s1532 = sand.u32 %s314, 1
          %s1533 = smul.addr %s1532, 8
          %s1534 = scalar_lea.vmem [#allocation2], %s1533
          %1536 = dma.done %s1531, 128
        $region84: #{tpu_custom_call.1} parent=79 // pred_fallthru
          _
      $region80: #{tpu_custom_call.1} parent=5 // pred_fallthru
        _
    $region6: #{tpu_custom_call.1} parent=1 // loop_footer
      %s26 = sadd.s32 1, %s22
    $region7: #{tpu_custom_call.1} parent=1 // loop_footer_branch
      %21 = sbr.rel target = $region3
    $region8: #{tpu_custom_call.1} parent=1 // loop_exit
      _
    %1537 = vsyncpa [#allocation3], 1
    %s1538 = scalar_lea.sflag [#allocation3], 1
    %1539 = vsyncpa %s1538, 1

// kernel: tpu_custom_call.1
$region0: #{tpu_custom_call.1}
  #allocation0 [shape = 'u32[]', space=smem, size = 0x4, offset = 0x4, fixed_abs, tag = 'smem constant byte address 0x4 - core index']
  #allocation1 [shape = 'u32[72,128]{1,0:T(1,128)}', space=vmem, size = 0x9000, scoped, tag = 'internal scratch']
  %s0 = inlined_call_operand.vmem [shape: f32[2,8,32], index: 0, kind: input, shape index: {}]
  %s1 = inlined_call_operand.vmem [shape: f32[1,32], index: 1, kind: input, shape index: {}]
  %s2 = inlined_call_operand.vmem [shape: f32[1,32], index: 2, kind: input, shape index: {}]
  %s3 = inlined_call_operand.vmem [shape: bf16[32,96], index: 3, kind: input, shape index: {}]
  %s4 = inlined_call_operand.vmem [shape: f32[1,96], index: 4, kind: input, shape index: {}]
  %s5 = inlined_call_operand.vmem [shape: bf16[32,32], index: 5, kind: input, shape index: {}]
  %s6 = inlined_call_operand.vmem [shape: f32[1,32], index: 6, kind: input, shape index: {}]
  %s7 = inlined_call_operand.vmem [shape: f32[1,32], index: 7, kind: input, shape index: {}]
  %s8 = inlined_call_operand.vmem [shape: f32[1,32], index: 8, kind: input, shape index: {}]
  %s9 = inlined_call_operand.vmem [shape: bf16[32,128], index: 9, kind: input, shape index: {}]
  %s10 = inlined_call_operand.vmem [shape: f32[1,128], index: 10, kind: input, shape index: {}]
  %s11 = inlined_call_operand.vmem [shape: bf16[128,32], index: 11, kind: input, shape index: {}]
  %s12 = inlined_call_operand.vmem [shape: f32[1,32], index: 12, kind: input, shape index: {}]
  %s13 = inlined_call_operand.hbm [shape: f32[2,8,32], index: 13, kind: output, shape index: {}]
  %s14 = sld [smem:[#allocation0]]
  $region85: #{tpu_custom_call.1} parent=0
    _
  %s16 = ssub.s32 1, %s14
  %s17 = scalar_select 0, %s16, %s14
  $region1: #{tpu_custom_call.1} parent=0
    #allocation2 [shape = 'u8[8192]{0}', space=vmem, size = 0x2000, scoped, tag = 'output window, operand 0']
    #allocation3 [shape = 's32[2]{0}', space=sflag, size = 0x8, scoped, tag = 'scoped memory for tpu_custom_call.1']
    %18 = vsyncpa [#allocation3], 0
    %s19 = scalar_lea.sflag [#allocation3], 1
    %20 = vsyncpa %s19, 0
    loop: start=0, step=1, limit=4
    $region2: #{tpu_custom_call.1} parent=1 // loop_pre_header
      _
    $region3: #{tpu_custom_call.1} parent=1 // loop_header
      %s22 = sphi 0, %s26
      %p23 = scmp.ge.s32.totalorder %s22, 4
      %s32 = sphi 0, %s34
      %s35 = sphi 0, %s32
      %s36 = sphi 0, %s35
      %s52 = sphi 0, %s36
      %s56 = sphi 0, %s56
      %s58 = sphi 0, %s56
      %s59 = sphi 0, %s58
      %s73 = sphi 0, %s59
      %s77 = sphi 0, %s77
      %s79 = sphi 0, %s77
      %s80 = sphi 0, %s79
      %s94 = sphi 0, %s80
      %s98 = sphi 0, %s98
      %s100 = sphi 0, %s98
      %s101 = sphi 0, %s100
      %s115 = sphi 0, %s101
      %s119 = sphi 0, %s119
      %s121 = sphi 0, %s119
      %s122 = sphi 0, %s121
      %s136 = sphi 0, %s122
      %s140 = sphi 0, %s140
      %s142 = sphi 0, %s140
      %s143 = sphi 0, %s142
      %s157 = sphi 0, %s143
      %s161 = sphi 0, %s161
      %s163 = sphi 0, %s161
      %s164 = sphi 0, %s163
      %s178 = sphi 0, %s164
      %s182 = sphi 0, %s182
      %s184 = sphi 0, %s182
      %s185 = sphi 0, %s184
      %s199 = sphi 0, %s185
      %s203 = sphi 0, %s203
      %s205 = sphi 0, %s203
      %s206 = sphi 0, %s205
      %s220 = sphi 0, %s206
      %s224 = sphi 0, %s224
      %s226 = sphi 0, %s224
      %s227 = sphi 0, %s226
      %s241 = sphi 0, %s227
      %s245 = sphi 0, %s245
      %s247 = sphi 0, %s245
      %s248 = sphi 0, %s247
      %s262 = sphi 0, %s248
      %s266 = sphi 0, %s266
      %s268 = sphi 0, %s266
      %s269 = sphi 0, %s268
      %s283 = sphi 0, %s269
      %s287 = sphi 0, %s287
      %s289 = sphi 0, %s287
      %s290 = sphi 0, %s289
      %s304 = sphi 0, %s290
      %s310 = sphi 0, %s312
      %s313 = sphi 0, %s310
      %s314 = sphi 0, %s313
      %s330 = sphi 0, %s314
    $region4: #{tpu_custom_call.1} parent=1 // loop_header_branch
      %25 = sbr.rel (%p23) target = $region8
    $region5: #{tpu_custom_call.1} parent=1 // loop_body
      %s27 = ssub.s32 %s22, 1
      %s28 = ssub.s32 %s22, 2
      %s29 = sadd.s32 %s22, 1
      %s30 = ssub.s32 %s22, %s29
      %p31 = scmp.eq.s32.totalorder %s30, 0
      %s33 = sadd.s32 %s32, 1
      %s34 = scalar_select %p31, %s32, %s33
      %p37 = pneg %p31
      %p38 = scmp.eq.s32.totalorder %s22, 1
      %p39 = por %p37, %p38
      %p40 = scmp.ne.s32.totalorder %s32, %s35
      %p41 = scmp.eq.s32.totalorder %s22, 0
      %p42 = por %p40, %p41
      %p43 = scmp.ne.s32.totalorder %s32, %s35
      %p44 = scmp.eq.s32.totalorder %s27, 1
      %p45 = por %p43, %p44
      %p46 = scmp.ne.s32.totalorder %s35, %s36
      %p47 = scmp.eq.s32.totalorder %s27, 0
      %p48 = por %p46, %p47
      %p49 = scmp.ne.s32.totalorder %s35, %s36
      %p50 = scmp.eq.s32.totalorder %s28, 1
      %p51 = por %p49, %p50
      %p53 = scmp.ne.s32.totalorder %s36, %s52
      %p54 = scmp.eq.s32.totalorder %s28, 0
      %p55 = por %p53, %p54
      %s57 = sadd.s32 %s56, 1
      %p60 = scmp.eq.s32.totalorder %s22, 1
      %p61 = scmp.ne.s32.totalorder %s56, %s58
      %p62 = scmp.eq.s32.totalorder %s22, 0
      %p63 = por %p61, %p62
      %p64 = scmp.ne.s32.totalorder %s56, %s58
      %p65 = scmp.eq.s32.totalorder %s27, 1
      %p66 = por %p64, %p65
      %p67 = scmp.ne.s32.totalorder %s58, %s59
      %p68 = scmp.eq.s32.totalorder %s27, 0
      %p69 = por %p67, %p68
      %p70 = scmp.ne.s32.totalorder %s58, %s59
      %p71 = scmp.eq.s32.totalorder %s28, 1
      %p72 = por %p70, %p71
      %p74 = scmp.ne.s32.totalorder %s59, %s73
      %p75 = scmp.eq.s32.totalorder %s28, 0
      %p76 = por %p74, %p75
      %s78 = sadd.s32 %s77, 1
      %p81 = scmp.eq.s32.totalorder %s22, 1
      %p82 = scmp.ne.s32.totalorder %s77, %s79
      %p83 = scmp.eq.s32.totalorder %s22, 0
      %p84 = por %p82, %p83
      %p85 = scmp.ne.s32.totalorder %s77, %s79
      %p86 = scmp.eq.s32.totalorder %s27, 1
      %p87 = por %p85, %p86
      %p88 = scmp.ne.s32.totalorder %s79, %s80
      %p89 = scmp.eq.s32.totalorder %s27, 0
      %p90 = por %p88, %p89
      %p91 = scmp.ne.s32.totalorder %s79, %s80
      %p92 = scmp.eq.s32.totalorder %s28, 1
      %p93 = por %p91, %p92
      %p95 = scmp.ne.s32.totalorder %s80, %s94
      %p96 = scmp.eq.s32.totalorder %s28, 0
      %p97 = por %p95, %p96
      %s99 = sadd.s32 %s98, 1
      %p102 = scmp.eq.s32.totalorder %s22, 1
      %p103 = scmp.ne.s32.totalorder %s98, %s100
      %p104 = scmp.eq.s32.totalorder %s22, 0
      %p105 = por %p103, %p104
      %p106 = scmp.ne.s32.totalorder %s98, %s100
      %p107 = scmp.eq.s32.totalorder %s27, 1
      %p108 = por %p106, %p107
      %p109 = scmp.ne.s32.totalorder %s100, %s101
      %p110 = scmp.eq.s32.totalorder %s27, 0
      %p111 = por %p109, %p110
      %p112 = scmp.ne.s32.totalorder %s100, %s101
      %p113 = scmp.eq.s32.totalorder %s28, 1
      %p114 = por %p112, %p113
      %p116 = scmp.ne.s32.totalorder %s101, %s115
      %p117 = scmp.eq.s32.totalorder %s28, 0
      %p118 = por %p116, %p117
      %s120 = sadd.s32 %s119, 1
      %p123 = scmp.eq.s32.totalorder %s22, 1
      %p124 = scmp.ne.s32.totalorder %s119, %s121
      %p125 = scmp.eq.s32.totalorder %s22, 0
      %p126 = por %p124, %p125
      %p127 = scmp.ne.s32.totalorder %s119, %s121
      %p128 = scmp.eq.s32.totalorder %s27, 1
      %p129 = por %p127, %p128
      %p130 = scmp.ne.s32.totalorder %s121, %s122
      %p131 = scmp.eq.s32.totalorder %s27, 0
      %p132 = por %p130, %p131
      %p133 = scmp.ne.s32.totalorder %s121, %s122
      %p134 = scmp.eq.s32.totalorder %s28, 1
      %p135 = por %p133, %p134
      %p137 = scmp.ne.s32.totalorder %s122, %s136
      %p138 = scmp.eq.s32.totalorder %s28, 0
      %p139 = por %p137, %p138
      %s141 = sadd.s32 %s140, 1
      %p144 = scmp.eq.s32.totalorder %s22, 1
      %p145 = scmp.ne.s32.totalorder %s140, %s142
      %p146 = scmp.eq.s32.totalorder %s22, 0
      %p147 = por %p145, %p146
      %p148 = scmp.ne.s32.totalorder %s140, %s142
      %p149 = scmp.eq.s32.totalorder %s27, 1
      %p150 = por %p148, %p149
      %p151 = scmp.ne.s32.totalorder %s142, %s143
      %p152 = scmp.eq.s32.totalorder %s27, 0
      %p153 = por %p151, %p152
      %p154 = scmp.ne.s32.totalorder %s142, %s143
      %p155 = scmp.eq.s32.totalorder %s28, 1
      %p156 = por %p154, %p155
      %p158 = scmp.ne.s32.totalorder %s143, %s157
      %p159 = scmp.eq.s32.totalorder %s28, 0
      %p160 = por %p158, %p159
      %s162 = sadd.s32 %s161, 1
      %p165 = scmp.eq.s32.totalorder %s22, 1
      %p166 = scmp.ne.s32.totalorder %s161, %s163
      %p167 = scmp.eq.s32.totalorder %s22, 0
      %p168 = por %p166, %p167
      %p169 = scmp.ne.s32.totalorder %s161, %s163
      %p170 = scmp.eq.s32.totalorder %s27, 1
      %p171 = por %p169, %p170
      %p172 = scmp.ne.s32.totalorder %s163, %s164
      %p173 = scmp.eq.s32.totalorder %s27, 0
      %p174 = por %p172, %p173
      %p175 = scmp.ne.s32.totalorder %s163, %s164
      %p176 = scmp.eq.s32.totalorder %s28, 1
      %p177 = por %p175, %p176
      %p179 = scmp.ne.s32.totalorder %s164, %s178
      %p180 = scmp.eq.s32.totalorder %s28, 0
      %p181 = por %p179, %p180
      %s183 = sadd.s32 %s182, 1
      %p186 = scmp.eq.s32.totalorder %s22, 1
      %p187 = scmp.ne.s32.totalorder %s182, %s184
      %p188 = scmp.eq.s32.totalorder %s22, 0
      %p189 = por %p187, %p188
      %p190 = scmp.ne.s32.totalorder %s182, %s184
      %p191 = scmp.eq.s32.totalorder %s27, 1
      %p192 = por %p190, %p191
      %p193 = scmp.ne.s32.totalorder %s184, %s185
      %p194 = scmp.eq.s32.totalorder %s27, 0
      %p195 = por %p193, %p194
      %p196 = scmp.ne.s32.totalorder %s184, %s185
      %p197 = scmp.eq.s32.totalorder %s28, 1
      %p198 = por %p196, %p197
      %p200 = scmp.ne.s32.totalorder %s185, %s199
      %p201 = scmp.eq.s32.totalorder %s28, 0
      %p202 = por %p200, %p201
      %s204 = sadd.s32 %s203, 1
      %p207 = scmp.eq.s32.totalorder %s22, 1
      %p208 = scmp.ne.s32.totalorder %s203, %s205
      %p209 = scmp.eq.s32.totalorder %s22, 0
      %p210 = por %p208, %p209
      %p211 = scmp.ne.s32.totalorder %s203, %s205
      %p212 = scmp.eq.s32.totalorder %s27, 1
      %p213 = por %p211, %p212
      %p214 = scmp.ne.s32.totalorder %s205, %s206
      %p215 = scmp.eq.s32.totalorder %s27, 0
      %p216 = por %p214, %p215
      %p217 = scmp.ne.s32.totalorder %s205, %s206
      %p218 = scmp.eq.s32.totalorder %s28, 1
      %p219 = por %p217, %p218
      %p221 = scmp.ne.s32.totalorder %s206, %s220
      %p222 = scmp.eq.s32.totalorder %s28, 0
      %p223 = por %p221, %p222
      %s225 = sadd.s32 %s224, 1
      %p228 = scmp.eq.s32.totalorder %s22, 1
      %p229 = scmp.ne.s32.totalorder %s224, %s226
      %p230 = scmp.eq.s32.totalorder %s22, 0
      %p231 = por %p229, %p230
      %p232 = scmp.ne.s32.totalorder %s224, %s226
      %p233 = scmp.eq.s32.totalorder %s27, 1
      %p234 = por %p232, %p233
      %p235 = scmp.ne.s32.totalorder %s226, %s227
      %p236 = scmp.eq.s32.totalorder %s27, 0
      %p237 = por %p235, %p236
      %p238 = scmp.ne.s32.totalorder %s226, %s227
      %p239 = scmp.eq.s32.totalorder %s28, 1
      %p240 = por %p238, %p239
      %p242 = scmp.ne.s32.totalorder %s227, %s241
      %p243 = scmp.eq.s32.totalorder %s28, 0
      %p244 = por %p242, %p243
      %s246 = sadd.s32 %s245, 1
      %p249 = scmp.eq.s32.totalorder %s22, 1
      %p250 = scmp.ne.s32.totalorder %s245, %s247
      %p251 = scmp.eq.s32.totalorder %s22, 0
      %p252 = por %p250, %p251
      %p253 = scmp.ne.s32.totalorder %s245, %s247
      %p254 = scmp.eq.s32.totalorder %s27, 1
      %p255 = por %p253, %p254
      %p256 = scmp.ne.s32.totalorder %s247, %s248
      %p257 = scmp.eq.s32.totalorder %s27, 0
      %p258 = por %p256, %p257
      %p259 = scmp.ne.s32.totalorder %s247, %s248
      %p260 = scmp.eq.s32.totalorder %s28, 1
      %p261 = por %p259, %p260
      %p263 = scmp.ne.s32.totalorder %s248, %s262
      %p264 = scmp.eq.s32.totalorder %s28, 0
      %p265 = por %p263, %p264
      %s267 = sadd.s32 %s266, 1
      %p270 = scmp.eq.s32.totalorder %s22, 1
      %p271 = scmp.ne.s32.totalorder %s266, %s268
      %p272 = scmp.eq.s32.totalorder %s22, 0
      %p273 = por %p271, %p272
      %p274 = scmp.ne.s32.totalorder %s266, %s268
      %p275 = scmp.eq.s32.totalorder %s27, 1
      %p276 = por %p274, %p275
      %p277 = scmp.ne.s32.totalorder %s268, %s269
      %p278 = scmp.eq.s32.totalorder %s27, 0
      %p279 = por %p277, %p278
      %p280 = scmp.ne.s32.totalorder %s268, %s269
      %p281 = scmp.eq.s32.totalorder %s28, 1
      %p282 = por %p280, %p281
      %p284 = scmp.ne.s32.totalorder %s269, %s283
      %p285 = scmp.eq.s32.totalorder %s28, 0
      %p286 = por %p284, %p285
      %s288 = sadd.s32 %s287, 1
      %p291 = scmp.eq.s32.totalorder %s22, 1
      %p292 = scmp.ne.s32.totalorder %s287, %s289
      %p293 = scmp.eq.s32.totalorder %s22, 0
      %p294 = por %p292, %p293
      %p295 = scmp.ne.s32.totalorder %s287, %s289
      %p296 = scmp.eq.s32.totalorder %s27, 1
      %p297 = por %p295, %p296
      %p298 = scmp.ne.s32.totalorder %s289, %s290
      %p299 = scmp.eq.s32.totalorder %s27, 0
      %p300 = por %p298, %p299
      %p301 = scmp.ne.s32.totalorder %s289, %s290
      %p302 = scmp.eq.s32.totalorder %s28, 1
      %p303 = por %p301, %p302
      %p305 = scmp.ne.s32.totalorder %s290, %s304
      %p306 = scmp.eq.s32.totalorder %s28, 0
      %p307 = por %p305, %p306
      %s308 = ssub.s32 %s22, %s29
      %p309 = scmp.eq.s32.totalorder %s308, 0
      %s311 = sadd.s32 %s310, 1
      %s312 = scalar_select %p309, %s310, %s311
      %p315 = pneg %p309
      %p316 = scmp.eq.s32.totalorder %s22, 1
      %p317 = por %p315, %p316
      %p318 = scmp.ne.s32.totalorder %s310, %s313
      %p319 = scmp.eq.s32.totalorder %s22, 0
      %p320 = por %p318, %p319
      %p321 = scmp.ne.s32.totalorder %s310, %s313
      %p322 = scmp.eq.s32.totalorder %s27, 1
      %p323 = por %p321, %p322
      %p324 = scmp.ne.s32.totalorder %s313, %s314
      %p325 = scmp.eq.s32.totalorder %s27, 0
      %p326 = por %p324, %p325
      %p327 = scmp.ne.s32.totalorder %s313, %s314
      %p328 = scmp.eq.s32.totalorder %s28, 1
      %p329 = por %p327, %p328
      %p331 = scmp.ne.s32.totalorder %s314, %s330
      %p332 = scmp.eq.s32.totalorder %s28, 0
      %p333 = por %p331, %p332
      %p334 = scmp.le.s32.totalorder 1, %s22
      %p335 = scmp.lt.s32.totalorder %s22, 3
      %p336 = pnand %p334, %p335
      %p337 = pneg %p336
      // Predicated region
      $region9: #{tpu_custom_call.1} parent=5 // pred_check
        _
      $region10: #{tpu_custom_call.1} parent=5 // pred_check_branch
        %339 = sbr.rel (%p336) target = $region12
      $region11: #{tpu_custom_call.1} parent=5 // pred_region
        %s340 = ssub.s32 %s22, 1
        // Predicated region
        $region13: #{tpu_custom_call.1} parent=11 // pred_check
          %p341 = pneg %p69
        $region14: #{tpu_custom_call.1} parent=11 // pred_check_branch
          %343 = sbr.rel (%p341) target = $region16
        $region15: #{tpu_custom_call.1} parent=11 // pred_region
          _
        $region16: #{tpu_custom_call.1} parent=11 // pred_fallthru
          _
        // Predicated region
        $region17: #{tpu_custom_call.1} parent=11 // pred_check
          %p344 = pneg %p90
        $region18: #{tpu_custom_call.1} parent=11 // pred_check_branch
          %346 = sbr.rel (%p344) target = $region20
        $region19: #{tpu_custom_call.1} parent=11 // pred_region
          _
        $region20: #{tpu_custom_call.1} parent=11 // pred_fallthru
          _
        // Predicated region
        $region21: #{tpu_custom_call.1} parent=11 // pred_check
          %p347 = pneg %p111
        $region22: #{tpu_custom_call.1} parent=11 // pred_check_branch
          %349 = sbr.rel (%p347) target = $region24
        $region23: #{tpu_custom_call.1} parent=11 // pred_region
          _
        $region24: #{tpu_custom_call.1} parent=11 // pred_fallthru
          _
        // Predicated region
        $region25: #{tpu_custom_call.1} parent=11 // pred_check
          %p350 = pneg %p132
        $region26: #{tpu_custom_call.1} parent=11 // pred_check_branch
          %352 = sbr.rel (%p350) target = $region28
        $region27: #{tpu_custom_call.1} parent=11 // pred_region
          _
        $region28: #{tpu_custom_call.1} parent=11 // pred_fallthru
          _
        // Predicated region
        $region29: #{tpu_custom_call.1} parent=11 // pred_check
          %p353 = pneg %p153
        $region30: #{tpu_custom_call.1} parent=11 // pred_check_branch
          %355 = sbr.rel (%p353) target = $region32
        $region31: #{tpu_custom_call.1} parent=11 // pred_region
          _
        $region32: #{tpu_custom_call.1} parent=11 // pred_fallthru
          _
        // Predicated region
        $region33: #{tpu_custom_call.1} parent=11 // pred_check
          %p356 = pneg %p174
        $region34: #{tpu_custom_call.1} parent=11 // pred_check_branch
          %358 = sbr.rel (%p356) target = $region36
        $region35: #{tpu_custom_call.1} parent=11 // pred_region
          _
        $region36: #{tpu_custom_call.1} parent=11 // pred_fallthru
          _
        // Predicated region
        $region37: #{tpu_custom_call.1} parent=11 // pred_check
          %p359 = pneg %p195
        $region38: #{tpu_custom_call.1} parent=11 // pred_check_branch
          %361 = sbr.rel (%p359) target = $region40
        $region39: #{tpu_custom_call.1} parent=11 // pred_region
          _
        $region40: #{tpu_custom_call.1} parent=11 // pred_fallthru
          _
        // Predicated region
        $region41: #{tpu_custom_call.1} parent=11 // pred_check
          %p362 = pneg %p216
        $region42: #{tpu_custom_call.1} parent=11 // pred_check_branch
          %364 = sbr.rel (%p362) target = $region44
        $region43: #{tpu_custom_call.1} parent=11 // pred_region
          _
        $region44: #{tpu_custom_call.1} parent=11 // pred_fallthru
          _
        // Predicated region
        $region45: #{tpu_custom_call.1} parent=11 // pred_check
          %p365 = pneg %p237
        $region46: #{tpu_custom_call.1} parent=11 // pred_check_branch
          %367 = sbr.rel (%p365) target = $region48
        $region47: #{tpu_custom_call.1} parent=11 // pred_region
          _
        $region48: #{tpu_custom_call.1} parent=11 // pred_fallthru
          _
        // Predicated region
        $region49: #{tpu_custom_call.1} parent=11 // pred_check
          %p368 = pneg %p258
        $region50: #{tpu_custom_call.1} parent=11 // pred_check_branch
          %370 = sbr.rel (%p368) target = $region52
        $region51: #{tpu_custom_call.1} parent=11 // pred_region
          _
        $region52: #{tpu_custom_call.1} parent=11 // pred_fallthru
          _
        // Predicated region
        $region53: #{tpu_custom_call.1} parent=11 // pred_check
          %p371 = pneg %p279
        $region54: #{tpu_custom_call.1} parent=11 // pred_check_branch
          %373 = sbr.rel (%p371) target = $region56
        $region55: #{tpu_custom_call.1} parent=11 // pred_region
          _
        $region56: #{tpu_custom_call.1} parent=11 // pred_fallthru
          _
        // Predicated region
        $region57: #{tpu_custom_call.1} parent=11 // pred_check
          %p374 = pneg %p300
        $region58: #{tpu_custom_call.1} parent=11 // pred_check_branch
          %376 = sbr.rel (%p374) target = $region60
        $region59: #{tpu_custom_call.1} parent=11 // pred_region
          _
        $region60: #{tpu_custom_call.1} parent=11 // pred_fallthru
          _
      $region12: #{tpu_custom_call.1} parent=5 // pred_fallthru
        _
      %p377 = scmp.lt.s32.totalorder %s22, 2
      // Predicated region
      $region61: #{tpu_custom_call.1} parent=5 // pred_check
        %p378 = pneg %p377
      $region62: #{tpu_custom_call.1} parent=5 // pred_check_branch
        %380 = sbr.rel (%p378) target = $region64
      $region63: #{tpu_custom_call.1} parent=5 // pred_region
        // Predicated region
        $region65: #{tpu_custom_call.1} parent=63 // pred_check
          %p381 = pneg %p42
        $region66: #{tpu_custom_call.1} parent=63 // pred_check_branch
          %383 = sbr.rel (%p381) target = $region68
        $region67: #{tpu_custom_call.1} parent=63 // pred_region
          %p384 = scmp.lt.s32.totalorder %s22, 1
          %s385 = scalar_select %p384, %s22, 1
          %s386 = smul.addr %s385, 8
          %s387 = scalar_lea.vmem %s0, %s386
        $region68: #{tpu_custom_call.1} parent=63 // pred_fallthru
          _
      $region64: #{tpu_custom_call.1} parent=5 // pred_fallthru
        _
      %p388 = scmp.le.s32.totalorder 1, %s22
      %p389 = scmp.lt.s32.totalorder %s22, 3
      %p390 = pnand %p388, %p389
      %p391 = pneg %p390
      // Predicated region
      $region69: #{tpu_custom_call.1} parent=5 // pred_check
        _
      $region70: #{tpu_custom_call.1} parent=5 // pred_check_branch
        %393 = sbr.rel (%p390) target = $region72
      $region71: #{tpu_custom_call.1} parent=5 // pred_region
        %s394 = ssub.s32 %s22, 1
        %p395 = scmp.lt.s32.totalorder %s27, 1
        %s396 = scalar_select %p395, %s27, 1
        %s397 = smul.addr %s396, 8
        %s398 = scalar_lea.vmem %s0, %s397
        %p399 = pneg %p48
        %p400 = pneg %p45
        %p401 = pneg %p69
        %p402 = pneg %p66
        %p403 = pneg %p90
        %p404 = pneg %p87
        %p405 = pneg %p111
        %p406 = pneg %p108
        %p407 = pneg %p132
        %p408 = pneg %p129
        %p409 = pneg %p153
        %p410 = pneg %p150
        %p411 = pneg %p174
        %p412 = pneg %p171
        %p413 = pneg %p195
        %p414 = pneg %p192
        %p415 = pneg %p216
        %p416 = pneg %p213
        %p417 = pneg %p237
        %p418 = pneg %p234
        %p419 = pneg %p258
        %p420 = pneg %p255
        %p421 = pneg %p279
        %p422 = pneg %p276
        %p423 = pneg %p300
        %p424 = pneg %p297
        %p425 = pneg %p326
        %p426 = pneg %p323
        %s427 = sand.u32 %s313, 1
        %s428 = scalar_lea.sflag [#allocation3], %s427
        %s429 = sand.u32 %s313, 1
        %s430 = smul.addr %s429, 8
        %s431 = scalar_lea.vmem [#allocation2], %s430
        %p432 = scmp.lt.s32.totalorder %s27, 1
        %s433 = scalar_select %p432, %s27, 1
        %s434 = smul.addr %s433, 8
        %s435 = scalar_lea.vmem %s0, %s434
        %v437 = vld [vmem:[%s435] sm:$0xff]
        %v438 = vld [vmem:[%s1] sm:$0x1]
        %v439 = vld [vmem:[%s2] sm:$0x1]
        %vm440 = vcmask 261120
        %v441 = vsel %vm440, %v437, 0.0
        %442 = vadd.xlane.f32.xlu0 %v441
        %v443 = vpop.xlane.xlu0 %442
        %v444 = vrcp.pop 32.0
        %v445 = vmul.f32 32.0, %v444
        %v446 = vsub.f32 1.0, %v445
        %v447 = vmul.f32 %v444, %v446
        %v448 = vadd.f32 %v444, %v447
        %vm449 = vweird.f32 %v444
        %v450 = vsel %vm449, %v444, %v448
        %v451 = vmul.f32 %v443, %v450
        %v452 = vsub.f32 %v437, %v451
        %v453 = vmul.f32 %v452, %v452
        %v454 = vsel %vm440, %v453, 0.0
        %455 = vadd.xlane.f32.xlu0 %v454
        %v456 = vpop.xlane.xlu0 %455
        %v457 = vmul.f32 %v456, %v450
        %v458 = vadd.f32 %v457, 1e-05
        %v459 = vrsqrt.pop %v458
        %v460 = vmul.f32 %v459, %v458
        %v461 = vmul.f32 %v460, %v459
        %v462 = vmul.f32 0.5, %v461
        %v463 = vsub.f32 1.5, %v462
        %v464 = vmul.f32 %v459, %v463
        %vm465 = vweird.f32 %v458
        %vm466 = vweird.f32 %v459
        %vm467 = vmor %vm465, %vm466
        %v468 = vsel %vm467, %v459, %v464
        %v469 = vmul.f32 %v452, %v468
        %v471 = vperm.slane %v438, 0
        %v473 = vmul.f32 %v469, %v471
        %v475 = vperm.slane %v439, 0
        %v477 = vadd.f32 %v473, %v475
        %v478 = vpack.c.bf16 %v477, %v477
        %v479 = vld [vmem:[%s3] sm:$0xf]
        %v480 = vld [vmem:[%s3 + $0x4] sm:$0xf]
        %v481 = vld [vmem:[%s3 + $0x8] sm:$0xf]
        %v482 = vld [vmem:[%s3 + $0xc] sm:$0xf]
        %v483 = vld [vmem:[%s4] sm:$0x1]
        %v485 = vperm.slane %v483, 0
        %v491 = vunpack.c.l.b16 %v479
        %v492 = vunpack.c.l.b16 %v480
        %v493 = vunpack.c.l.b16 %v481
        %v494 = vunpack.c.l.b16 %v482
        %v495 = vpack.c.b16 %v492, %v491
        %v496 = vpack.c.b16 %v494, %v493
        %v500 = vsel %vm440, %v478, 0
        %502 = vmatpush.bf16.msra.mxu0 0
        %503 = vmatpush.bf16.msra.mxu0 0
        %504 = vmatpush.bf16.msra.mxu0 0
        %505 = vmatpush.bf16.msra.mxu0 0
        %506 = vmatpush.bf16.msra.mxu0 0
        %507 = vmatpush.bf16.msra.mxu0 0
        %508 = vmatpush.bf16.msra.mxu0 %v496
        %509 = vmatpush.bf16.msra.mxu0 %v495
        %510 = vmatmul.bf16.gmra.mxu0 %v500
        %v511 = vpop.f32.mrf.mxu0
        %v512 = vadd.f32 %v485, %v511
        %v513 = vpop.f32.mrf.mxu0
        %514 = vdwg.mxu0
        %v515 = vpack.c.bf16 %v512, %v512
        %517 = vrot.lane.b32.xlu0 %v515, 120
        %v518 = vpop.permute.xlu0 %517
        %519 = vrot.lane.b32.xlu0 %v515, 112
        %v520 = vpop.permute.xlu0 %519
        %521 = vrot.lane.b32.xlu0 %v515, 104
        %v522 = vpop.permute.xlu0 %521
        %v523 = vlaneseq
        %v524 = vshrl.u32 %v523, 7
        %v525 = vlaneseq
        %v526 = vand.u32 %v525, 127
        %v527 = vunpack.c.l.b16 %v515
        %v528 = vpack.c.b16 %v527, %v527
        %529 = vrot.lane.b32.xlu0 %v528, 96
        %v530 = vpop.permute.xlu0 %529
        %vm531 = vcmask 64512
        %v533 = vsel %vm531, %v515, 0
        %v536 = vsel %vm531, %v530, 0
        %538 = vmatpush.bf16.xpose.msra.mxu0 0
        %539 = vmatpush.bf16.xpose.msra.mxu0 0
        %540 = vmatpush.bf16.xpose.msra.mxu0 0
        %541 = vmatpush.bf16.xpose.msra.mxu0 0
        %542 = vmatpush.bf16.xpose.msra.mxu0 0
        %543 = vmatpush.bf16.xpose.msra.mxu0 0
        %544 = vmatpush.bf16.xpose.msra.mxu0 0
        %545 = vmatpush.bf16.xpose.msra.mxu0 %v536
        %546 = vmatmul.bf16.gmra.mxu0 %v533
        %v547 = vpop.f32.mrf.mxu0
        %v548 = vadd.f32 0.0, %v547
        %v549 = vpop.f32.mrf.mxu0
        %550 = vdwg.mxu0
        %v551 = vunpack.c.l.b16 %v518
        %v552 = vpack.c.b16 %v551, %v551
        %553 = vrot.lane.b32.xlu0 %v552, 96
        %v554 = vpop.permute.xlu0 %553
        %v556 = vsel %vm531, %v518, 0
        %v559 = vsel %vm531, %v554, 0
        %561 = vmatpush.bf16.xpose.msra.mxu0 0
        %562 = vmatpush.bf16.xpose.msra.mxu0 0
        %563 = vmatpush.bf16.xpose.msra.mxu0 0
        %564 = vmatpush.bf16.xpose.msra.mxu0 0
        %565 = vmatpush.bf16.xpose.msra.mxu0 0
        %566 = vmatpush.bf16.xpose.msra.mxu0 0
        %567 = vmatpush.bf16.xpose.msra.mxu0 0
        %568 = vmatpush.bf16.xpose.msra.mxu0 %v559
        %569 = vmatmul.bf16.gmra.mxu0 %v556
        %v570 = vpop.f32.mrf.mxu0
        %v571 = vadd.f32 0.0, %v570
        %v572 = vpop.f32.mrf.mxu0
        %573 = vdwg.mxu0
        %v574 = vunpack.c.l.b16 %v520
        %v575 = vpack.c.b16 %v574, %v574
        %576 = vrot.lane.b32.xlu0 %v575, 96
        %v577 = vpop.permute.xlu0 %576
        %v579 = vsel %vm531, %v520, 0
        %v582 = vsel %vm531, %v577, 0
        %584 = vmatpush.bf16.xpose.msra.mxu0 0
        %585 = vmatpush.bf16.xpose.msra.mxu0 0
        %586 = vmatpush.bf16.xpose.msra.mxu0 0
        %587 = vmatpush.bf16.xpose.msra.mxu0 0
        %588 = vmatpush.bf16.xpose.msra.mxu0 0
        %589 = vmatpush.bf16.xpose.msra.mxu0 0
        %590 = vmatpush.bf16.xpose.msra.mxu0 0
        %591 = vmatpush.bf16.xpose.msra.mxu0 %v582
        %592 = vmatmul.bf16.gmra.mxu0 %v579
        %v593 = vpop.f32.mrf.mxu0
        %v594 = vadd.f32 0.0, %v593
        %v595 = vpop.f32.mrf.mxu0
        %596 = vdwg.mxu0
        %v597 = vunpack.c.l.b16 %v522
        %v598 = vpack.c.b16 %v597, %v597
        %599 = vrot.lane.b32.xlu0 %v598, 96
        %v600 = vpop.permute.xlu0 %599
        %v602 = vsel %vm531, %v522, 0
        %v605 = vsel %vm531, %v600, 0
        %607 = vmatpush.bf16.xpose.msra.mxu0 0
        %608 = vmatpush.bf16.xpose.msra.mxu0 0
        %609 = vmatpush.bf16.xpose.msra.mxu0 0
        %610 = vmatpush.bf16.xpose.msra.mxu0 0
        %611 = vmatpush.bf16.xpose.msra.mxu0 0
        %612 = vmatpush.bf16.xpose.msra.mxu0 0
        %613 = vmatpush.bf16.xpose.msra.mxu0 0
        %614 = vmatpush.bf16.xpose.msra.mxu0 %v605
        %615 = vmatmul.bf16.gmra.mxu0 %v602
        %v616 = vpop.f32.mrf.mxu0
        %v617 = vadd.f32 0.0, %v616
        %v618 = vpop.f32.mrf.mxu0
        %619 = vdwg.mxu0
        %v620 = vmul.f32 %v548, 0.35355338
        %v621 = vmul.f32 %v571, 0.35355338
        %v622 = vmul.f32 %v594, 0.35355338
        %v623 = vmul.f32 %v617, 0.35355338
        %vm624 = vcmp.le.s32.totalorder %v526, %v524
        %v625 = vsel %vm624, 1, 0
        %vm626 = vcmp.eq.s32.totalorder %v625, 1
        %v627 = vsel %vm626, %v620, -1e+30
        %v628 = vsel %vm626, %v621, -1e+30
        %v629 = vsel %vm626, %v622, -1e+30
        %v630 = vsel %vm626, %v623, -1e+30
        %v631 = vsel %vm531, %v627, -inf
        %632 = vmax.xlane.f32.xlu0 %v631
        %v633 = vpop.xlane.xlu0 %632
        %v634 = vsel %vm531, %v628, -inf
        %635 = vmax.xlane.f32.xlu0 %v634
        %v636 = vpop.xlane.xlu0 %635
        %v637 = vsel %vm531, %v629, -inf
        %638 = vmax.xlane.f32.xlu0 %v637
        %v639 = vpop.xlane.xlu0 %638
        %v640 = vsel %vm531, %v630, -inf
        %641 = vmax.xlane.f32.xlu0 %v640
        %v642 = vpop.xlane.xlu0 %641
        %v643 = vmax.f32 %v633, -1e+30
        %v644 = vmax.f32 %v636, -1e+30
        %v645 = vmax.f32 %v639, -1e+30
        %v646 = vmax.f32 %v642, -1e+30
        %v647 = vsub.f32 -1e+30, %v643
        %v648 = vsub.f32 -1e+30, %v644
        %v649 = vsub.f32 -1e+30, %v645
        %v650 = vsub.f32 -1e+30, %v646
        %v651 = vmul.f32 %v647, 1.442695
        %v652 = vpow.pop %v651
        %v653 = vmul.f32 %v648, 1.442695
        %v654 = vpow.pop %v653
        %v655 = vmul.f32 %v649, 1.442695
        %v656 = vpow.pop %v655
        %v657 = vmul.f32 %v650, 1.442695
        %v658 = vpow.pop %v657
        %v659 = vsub.f32 %v627, %v643
        %v660 = vsub.f32 %v628, %v644
        %v661 = vsub.f32 %v629, %v645
        %v662 = vsub.f32 %v630, %v646
        %v663 = vmul.f32 %v659, 1.442695
        %v664 = vpow.pop %v663
        %v665 = vmul.f32 %v660, 1.442695
        %v666 = vpow.pop %v665
        %v667 = vmul.f32 %v661, 1.442695
        %v668 = vpow.pop %v667
        %v669 = vmul.f32 %v662, 1.442695
        %v670 = vpow.pop %v669
        %v671 = vmul.f32 %v652, 0.0
        %v672 = vmul.f32 %v654, 0.0
        %v673 = vmul.f32 %v656, 0.0
        %v674 = vmul.f32 %v658, 0.0
        %v675 = vsel %vm531, %v664, 0.0
        %676 = vadd.xlane.f32.xlu0 %v675
        %v677 = vpop.xlane.xlu0 %676
        %v678 = vsel %vm531, %v666, 0.0
        %679 = vadd.xlane.f32.xlu0 %v678
        %v680 = vpop.xlane.xlu0 %679
        %v681 = vsel %vm531, %v668, 0.0
        %682 = vadd.xlane.f32.xlu0 %v681
        %v683 = vpop.xlane.xlu0 %682
        %v684 = vsel %vm531, %v670, 0.0
        %685 = vadd.xlane.f32.xlu0 %v684
        %v686 = vpop.xlane.xlu0 %685
        %v687 = vadd.f32 %v671, %v677
        %v688 = vadd.f32 %v672, %v680
        %v689 = vadd.f32 %v673, %v683
        %v690 = vadd.f32 %v674, %v686
        %v691 = vpack.c.bf16 %v664, %v664
        %v692 = vpack.c.bf16 %v666, %v666
        %v693 = vpack.c.bf16 %v668, %v668
        %v694 = vpack.c.bf16 %v670, %v670
        %695 = vrot.lane.b32.xlu0 %v528, 64
        %v696 = vpop.permute.xlu0 %695
        %v698 = vsel %vm531, %v691, 0
        %vm700 = vcmask 1043456
        %v702 = vsel %vm700, %v696, 0
        %704 = vmatpush.bf16.msra.mxu0 0
        %705 = vmatpush.bf16.msra.mxu0 0
        %706 = vmatpush.bf16.msra.mxu0 0
        %707 = vmatpush.bf16.msra.mxu0 0
        %708 = vmatpush.bf16.msra.mxu0 0
        %709 = vmatpush.bf16.msra.mxu0 0
        %710 = vmatpush.bf16.msra.mxu0 0
        %711 = vmatpush.bf16.msra.mxu0 %v702
        %712 = vmatmul.bf16.gmra.mxu0 %v698
        %v713 = vpop.f32.mrf.mxu0
        %v714 = vadd.f32 0.0, %v713
        %v715 = vpop.f32.mrf.mxu0
        %716 = vdwg.mxu0
        %717 = vrot.lane.b32.xlu0 %v552, 64
        %v718 = vpop.permute.xlu0 %717
        %v720 = vsel %vm531, %v692, 0
        %v723 = vsel %vm700, %v718, 0
        %725 = vmatpush.bf16.msra.mxu0 0
        %726 = vmatpush.bf16.msra.mxu0 0
        %727 = vmatpush.bf16.msra.mxu0 0
        %728 = vmatpush.bf16.msra.mxu0 0
        %729 = vmatpush.bf16.msra.mxu0 0
        %730 = vmatpush.bf16.msra.mxu0 0
        %731 = vmatpush.bf16.msra.mxu0 0
        %732 = vmatpush.bf16.msra.mxu0 %v723
        %733 = vmatmul.bf16.gmra.mxu0 %v720
        %v734 = vpop.f32.mrf.mxu0
        %v735 = vadd.f32 0.0, %v734
        %v736 = vpop.f32.mrf.mxu0
        %737 = vdwg.mxu0
        %738 = vrot.lane.b32.xlu0 %v575, 64
        %v739 = vpop.permute.xlu0 %738
        %v741 = vsel %vm531, %v693, 0
        %v744 = vsel %vm700, %v739, 0
        %746 = vmatpush.bf16.msra.mxu0 0
        %747 = vmatpush.bf16.msra.mxu0 0
        %748 = vmatpush.bf16.msra.mxu0 0
        %749 = vmatpush.bf16.msra.mxu0 0
        %750 = vmatpush.bf16.msra.mxu0 0
        %751 = vmatpush.bf16.msra.mxu0 0
        %752 = vmatpush.bf16.msra.mxu0 0
        %753 = vmatpush.bf16.msra.mxu0 %v744
        %754 = vmatmul.bf16.gmra.mxu0 %v741
        %v755 = vpop.f32.mrf.mxu0
        %v756 = vadd.f32 0.0, %v755
        %v757 = vpop.f32.mrf.mxu0
        %758 = vdwg.mxu0
        %759 = vrot.lane.b32.xlu0 %v598, 64
        %v760 = vpop.permute.xlu0 %759
        %v762 = vsel %vm531, %v694, 0
        %v765 = vsel %vm700, %v760, 0
        %767 = vmatpush.bf16.msra.mxu0 0
        %768 = vmatpush.bf16.msra.mxu0 0
        %769 = vmatpush.bf16.msra.mxu0 0
        %770 = vmatpush.bf16.msra.mxu0 0
        %771 = vmatpush.bf16.msra.mxu0 0
        %772 = vmatpush.bf16.msra.mxu0 0
        %773 = vmatpush.bf16.msra.mxu0 0
        %774 = vmatpush.bf16.msra.mxu0 %v765
        %775 = vmatmul.bf16.gmra.mxu0 %v762
        %v776 = vpop.f32.mrf.mxu0
        %v777 = vadd.f32 0.0, %v776
        %v778 = vpop.f32.mrf.mxu0
        %779 = vdwg.mxu0
        %v780 = vadd.f32 %v671, %v714
        %v781 = vadd.f32 %v672, %v735
        %v782 = vadd.f32 %v673, %v756
        %v783 = vadd.f32 %v674, %v777
        %v784 = vrcp.pop %v687
        %v785 = vrcp.pop %v688
        %v786 = vrcp.pop %v689
        %v787 = vrcp.pop %v690
        %v788 = vmul.f32 %v780, %v784
        %v789 = vmul.f32 %v781, %v785
        %v790 = vmul.f32 %v782, %v786
        %v791 = vmul.f32 %v783, %v787
        %793 = vrot.lane.b32.xlu0 %v789, 8
        %v794 = vpop.permute.xlu0 %793
        %797 = vrot.lane.b32.xlu0 %v790, 16
        %v798 = vpop.permute.xlu0 %797
        %801 = vrot.lane.b32.xlu0 %v791, 24
        %v802 = vpop.permute.xlu0 %801
        %v804 = vsel %vm531, %v788, %v794
        %vm805 = vcmask 130048
        %v806 = vsel %vm805, %v804, %v798
        %vm807 = vcmask 195584
        %v808 = vsel %vm807, %v806, %v802
        %v809 = vpack.c.bf16 %v808, %v808
        %v810 = vld [vmem:[%s5] sm:$0xf]
        %v811 = vld [vmem:[%s5 + $0x4] sm:$0xf]
        %v812 = vld [vmem:[%s5 + $0x8] sm:$0xf]
        %v813 = vld [vmem:[%s5 + $0xc] sm:$0xf]
        %v814 = vld [vmem:[%s6] sm:$0x1]
        %v816 = vperm.slane %v814, 0
        %v822 = vunpack.c.l.b16 %v810
        %v823 = vunpack.c.l.b16 %v811
        %v824 = vunpack.c.l.b16 %v812
        %v825 = vunpack.c.l.b16 %v813
        %v826 = vpack.c.b16 %v823, %v822
        %v827 = vpack.c.b16 %v825, %v824
        %v831 = vsel %vm440, %v809, 0
        %833 = vmatpush.bf16.msra.mxu0 0
        %834 = vmatpush.bf16.msra.mxu0 0
        %835 = vmatpush.bf16.msra.mxu0 0
        %836 = vmatpush.bf16.msra.mxu0 0
        %837 = vmatpush.bf16.msra.mxu0 0
        %838 = vmatpush.bf16.msra.mxu0 0
        %839 = vmatpush.bf16.msra.mxu0 %v827
        %840 = vmatpush.bf16.msra.mxu0 %v826
        %841 = vmatmul.bf16.gmra.mxu0 %v831
        %v842 = vpop.f32.mrf.mxu0
        %v843 = vadd.f32 %v816, %v842
        %v844 = vpop.f32.mrf.mxu0
        %845 = vdwg.mxu0
        %v846 = vadd.f32 %v437, %v843
        %v847 = vld [vmem:[%s7] sm:$0x1]
        %v848 = vld [vmem:[%s8] sm:$0x1]
        %v849 = vsel %vm440, %v846, 0.0
        %850 = vadd.xlane.f32.xlu0 %v849
        %v851 = vpop.xlane.xlu0 %850
        %v852 = vmul.f32 %v851, %v450
        %v853 = vsub.f32 %v846, %v852
        %v854 = vmul.f32 %v853, %v853
        %v855 = vsel %vm440, %v854, 0.0
        %856 = vadd.xlane.f32.xlu0 %v855
        %v857 = vpop.xlane.xlu0 %856
        %v858 = vmul.f32 %v857, %v450
        %v859 = vadd.f32 %v858, 1e-05
        %v860 = vrsqrt.pop %v859
        %v861 = vmul.f32 %v860, %v859
        %v862 = vmul.f32 %v861, %v860
        %v863 = vmul.f32 0.5, %v862
        %v864 = vsub.f32 1.5, %v863
        %v865 = vmul.f32 %v860, %v864
        %vm866 = vweird.f32 %v859
        %vm867 = vweird.f32 %v860
        %vm868 = vmor %vm866, %vm867
        %v869 = vsel %vm868, %v860, %v865
        %v870 = vmul.f32 %v853, %v869
        %v872 = vperm.slane %v847, 0
        %v874 = vmul.f32 %v870, %v872
        %v876 = vperm.slane %v848, 0
        %v878 = vadd.f32 %v874, %v876
        %v879 = vpack.c.bf16 %v878, %v878
        %v880 = vld [vmem:[%s9] sm:$0xf]
        %v881 = vld [vmem:[%s9 + $0x4] sm:$0xf]
        %v882 = vld [vmem:[%s9 + $0x8] sm:$0xf]
        %v883 = vld [vmem:[%s9 + $0xc] sm:$0xf]
        %v884 = vld [vmem:[%s10] sm:$0x1]
        %v886 = vperm.slane %v884, 0
        %v892 = vunpack.c.l.b16 %v880
        %v893 = vunpack.c.l.b16 %v881
        %v894 = vunpack.c.l.b16 %v882
        %v895 = vunpack.c.l.b16 %v883
        %v896 = vpack.c.b16 %v893, %v892
        %v897 = vpack.c.b16 %v895, %v894
        %v901 = vsel %vm440, %v879, 0
        %903 = vmatpush.bf16.msra.mxu0 0
        %904 = vmatpush.bf16.msra.mxu0 0
        %905 = vmatpush.bf16.msra.mxu0 0
        %906 = vmatpush.bf16.msra.mxu0 0
        %907 = vmatpush.bf16.msra.mxu0 0
        %908 = vmatpush.bf16.msra.mxu0 0
        %909 = vmatpush.bf16.msra.mxu0 %v897
        %910 = vmatpush.bf16.msra.mxu0 %v896
        %911 = vmatmul.bf16.gmra.mxu0 %v901
        %v912 = vpop.f32.mrf.mxu0
        %v913 = vadd.f32 %v886, %v912
        %v914 = vpop.f32.mrf.mxu0
        %915 = vdwg.mxu0
        %v916 = vmul.f32 %v913, 0.5
        %v917 = vmul.f32 %v913, 0.70710677
        %v918 = vmul.f32 %v917, %v917
        %v919 = vmin.f32 16.0, %v918
        %v920 = vmul.f32 %v919, 2.1237322e-06
        %v921 = vadd.f32 %v920, 0.00028619796
        %v922 = vmul.f32 %v919, %v921
        %v923 = vadd.f32 %v922, 0.0036580483
        %v924 = vmul.f32 %v919, %v923
        %v925 = vadd.f32 %v924, 0.05243302
        %v926 = vmul.f32 %v919, %v925
        %v927 = vadd.f32 %v926, 0.18741608
        %v928 = vmul.f32 %v919, %v927
        %v929 = vadd.f32 %v928, 1.1283791
        %v930 = vmul.f32 %v917, %v929
        %v931 = vmul.f32 %v919, 3.8918573e-05
        %v932 = vadd.f32 %v931, 0.001143296
        %v933 = vmul.f32 %v919, %v932
        %v934 = vadd.f32 %v933, 0.014752088
        %v935 = vmul.f32 %v919, %v934
        %v936 = vadd.f32 %v935, 0.112945676
        %v937 = vmul.f32 %v919, %v936
        %v938 = vadd.f32 %v937, 0.4994258
        %v939 = vmul.f32 %v919, %v938
        %v940 = vadd.f32 %v939, 1.0
        %v941 = vrcp.pop %v940
        %v942 = vmul.f32 %v940, %v941
        %v943 = vsub.f32 1.0, %v942
        %v944 = vmul.f32 %v941, %v943
        %v945 = vadd.f32 %v941, %v944
        %vm946 = vweird.f32 %v940
        %vm947 = vweird.f32 %v941
        %vm948 = vmor %vm946, %vm947
        %v949 = vsel %vm948, %v941, %v945
        %v950 = vand.u32 2147483647, %v940
        %vm951 = vcmp.eq.f32.partialorder %v950, 8.507059e+37
        %v952 = vand.u32 %v940, 2147483648
        %v953 = vor.u32 1.1754944e-38, %v952
        %v954 = vsel %vm951, %v953, %v949
        %v955 = vmul.f32 %v930, %v954
        %v956 = vmin.f32 %v955, 1.0
        %v957 = vmax.f32 %v956, -1.0
        %v958 = vadd.f32 %v957, 1.0
        %v959 = vmul.f32 %v916, %v958
        %v960 = vpack.c.bf16 %v959, %v959
        %v961 = vld [vmem:[%s11] sm:$0xf]
        %v962 = vld [vmem:[%s11 + $0x4] sm:$0xf]
        %v963 = vld [vmem:[%s11 + $0x8] sm:$0xf]
        %v964 = vld [vmem:[%s11 + $0xc] sm:$0xf]
        %v965 = vld [vmem:[%s11 + $0x10] sm:$0xf]
        %v966 = vld [vmem:[%s11 + $0x14] sm:$0xf]
        %v967 = vld [vmem:[%s11 + $0x18] sm:$0xf]
        %v968 = vld [vmem:[%s11 + $0x1c] sm:$0xf]
        %v969 = vld [vmem:[%s11 + $0x20] sm:$0xf]
        %v970 = vld [vmem:[%s11 + $0x24] sm:$0xf]
        %v971 = vld [vmem:[%s11 + $0x28] sm:$0xf]
        %v972 = vld [vmem:[%s11 + $0x2c] sm:$0xf]
        %v973 = vld [vmem:[%s11 + $0x30] sm:$0xf]
        %v974 = vld [vmem:[%s11 + $0x34] sm:$0xf]
        %v975 = vld [vmem:[%s11 + $0x38] sm:$0xf]
        %v976 = vld [vmem:[%s11 + $0x3c] sm:$0xf]
        %v977 = vld [vmem:[%s12] sm:$0x1]
        %v979 = vperm.slane %v977, 0
        %v997 = vunpack.c.l.b16 %v961
        %v998 = vunpack.c.l.b16 %v962
        %v999 = vunpack.c.l.b16 %v963
        %v1000 = vunpack.c.l.b16 %v964
        %v1001 = vunpack.c.l.b16 %v965
        %v1002 = vunpack.c.l.b16 %v966
        %v1003 = vunpack.c.l.b16 %v967
        %v1004 = vunpack.c.l.b16 %v968
        %v1005 = vunpack.c.l.b16 %v969
        %v1006 = vunpack.c.l.b16 %v970
        %v1007 = vunpack.c.l.b16 %v971
        %v1008 = vunpack.c.l.b16 %v972
        %v1009 = vunpack.c.l.b16 %v973
        %v1010 = vunpack.c.l.b16 %v974
        %v1011 = vunpack.c.l.b16 %v975
        %v1012 = vunpack.c.l.b16 %v976
        %v1013 = vpack.c.b16 %v998, %v997
        %v1014 = vpack.c.b16 %v1000, %v999
        %v1015 = vpack.c.b16 %v1002, %v1001
        %v1016 = vpack.c.b16 %v1004, %v1003
        %v1017 = vpack.c.b16 %v1006, %v1005
        %v1018 = vpack.c.b16 %v1008, %v1007
        %v1019 = vpack.c.b16 %v1010, %v1009
        %v1020 = vpack.c.b16 %v1012, %v1011
        %1029 = vmatpush.bf16.msra.mxu0 %v1020
        %1030 = vmatpush.bf16.msra.mxu0 %v1019
        %1031 = vmatpush.bf16.msra.mxu0 %v1018
        %1032 = vmatpush.bf16.msra.mxu0 %v1017
        %1033 = vmatpush.bf16.msra.mxu0 %v1016
        %1034 = vmatpush.bf16.msra.mxu0 %v1015
        %1035 = vmatpush.bf16.msra.mxu0 %v1014
        %1036 = vmatpush.bf16.msra.mxu0 %v1013
        %1037 = vmatmul.bf16.gmra.mxu0 %v960
        %v1038 = vpop.f32.mrf.mxu0
        %v1039 = vadd.f32 %v979, %v1038
        %v1040 = vpop.f32.mrf.mxu0
        %1041 = vdwg.mxu0
        %v1042 = vadd.f32 %v846, %v1039
        %1043 = vst.msk [vmem:[%s431] sm:$0xff] %vm440, %v1042
        %s1044 = sand.u32 %s313, 1
        %s1045 = scalar_lea.sflag [#allocation3], %s1044
        %s1046 = sand.u32 %s313, 1
        %s1047 = smul.addr %s1046, 8
        %s1048 = scalar_lea.vmem [#allocation2], %s1047
        // Predicated region
        $region73: #{tpu_custom_call.1} parent=71 // pred_check
          %p1049 = pneg %p323
        $region74: #{tpu_custom_call.1} parent=71 // pred_check_branch
          %1051 = sbr.rel (%p1049) target = $region76
        $region75: #{tpu_custom_call.1} parent=71 // pred_region
          %1053 = vsyncadd %s1045, 0
          %s1054 = smul.addr %s27, 8
          %s1055 = scalar_lea.hbm %s13, %s1054
          %s1057 = sshll.u32 %s1048, 4
          %s1058 = int_to_ptr.vmem [resolvable:$true] %s1057
          %s1059 = sshll.u32 %s1055, 4
          %s1060 = int_to_ptr.hbm [resolvable:$true] %s1059
          %1062 = dma.vmem_to_hbm [thread:$0]  %s1058, 128, %s1060, %s1045
        $region76: #{tpu_custom_call.1} parent=71 // pred_fallthru
          _
      $region72: #{tpu_custom_call.1} parent=5 // pred_fallthru
        _
      %p1063 = scmp.le.s32.totalorder 2, %s22
      // Predicated region
      $region77: #{tpu_custom_call.1} parent=5 // pred_check
        %p1064 = pneg %p1063
      $region78: #{tpu_custom_call.1} parent=5 // pred_check_branch
        %1066 = sbr.rel (%p1064) target = $region80
      $region79: #{tpu_custom_call.1} parent=5 // pred_region
        %s1067 = ssub.s32 %s22, 2
        // Predicated region
        $region81: #{tpu_custom_call.1} parent=79 // pred_check
          %p1068 = pneg %p329
        $region82: #{tpu_custom_call.1} parent=79 // pred_check_branch
          %1070 = sbr.rel (%p1068) target = $region84
        $region83: #{tpu_custom_call.1} parent=79 // pred_region
          %s1071 = sand.u32 %s314, 1
          %s1072 = scalar_lea.sflag [#allocation3], %s1071
          %s1073 = sand.u32 %s314, 1
          %s1074 = smul.addr %s1073, 8
          %s1075 = scalar_lea.vmem [#allocation2], %s1074
          %1077 = dma.done %s1072, 128
        $region84: #{tpu_custom_call.1} parent=79 // pred_fallthru
          _
      $region80: #{tpu_custom_call.1} parent=5 // pred_fallthru
        _
    $region6: #{tpu_custom_call.1} parent=1 // loop_footer
      %s26 = sadd.s32 1, %s22
    $region7: #{tpu_custom_call.1} parent=1 // loop_footer_branch
      %21 = sbr.rel target = $region3
    $region8: #{tpu_custom_call.1} parent=1 // loop_exit
      _
    %1078 = vsyncpa [#allocation3], 1
    %s1079 = scalar_lea.sflag [#allocation3], 1
    %1080 = vsyncpa %s1079, 1

</llo_original>
